<compile_context>
chip_gen: v7x
topology: tpu7x:2x2x1
jax: 0.10.0
libtpu: 0.0.40
codegen_flags: <defaults>
</compile_context>

<pallas_src>
import functools

import jax
import jax.numpy as jnp
from jax.experimental import pallas as pl
from jax.experimental.pallas import tpu as pltpu


# ----------------------------------------------------------------------------
# Fused SPPF kernel: cv1 -> 3x maxpool5 (in VMEM) -> cv2 (concat folded)
# ----------------------------------------------------------------------------
def _sppf_kernel(x_ref, w1_ref, b1_ref, w2a_ref, w2b_ref, w2c_ref, w2d_ref,
                 b2_ref, o_ref, fpad_ref, *, H, W, padh):
    # x_ref : (1, H*W, C1)      fpad_ref : (padh + H*W + 2*W, c_) VMEM scratch
    # w1    : (C1, c_)  b1 : (1, c_)
    # w2a..d: (c_, c2)  b2 : (1, c2)   o_ref : (1, H*W, c2)
    M = H * W
    c_ = w1_ref.shape[1]
    neg_inf = jnp.float32(-jnp.inf)

    # ---- cv1: 1x1 conv (+fused BN) + SiLU on the MXU -------------------------
    x = x_ref[0]                                                    # (M, C1)
    a = jnp.dot(x, w1_ref[...], preferred_element_type=jnp.float32) + b1_ref[...]
    x1 = a * jax.nn.sigmoid(a)                                      # (M, c_) f32

    # ---- -inf borders of the pooling scratch (interior rewritten per level) --
    fpad_ref[0:padh, :] = jnp.full((padh, c_), neg_inf, jnp.float32)
    fpad_ref[padh + M:padh + M + 2 * W, :] = jnp.full((2 * W, c_), neg_inf,
                                                      jnp.float32)

    # masks invalidating horizontal taps that would wrap across an image row
    col = jax.lax.broadcasted_iota(jnp.int32, (M, c_), 0) % W
    wmask = {d: jnp.logical_and(col + d >= 0, col + d < W)
             for d in (-2, -1, 1, 2)}

    def pool5(img):
        """5x5 max pool, stride 1, pad 2 (PyTorch -inf semantics), separable."""
        # vertical 5-tap max: whole-row (aligned) shifts against the -inf pad
        fpad_ref[padh:padh + M, :] = img
        r = jnp.maximum(fpad_ref[padh - 2 * W:padh - 2 * W + M, :],
                        fpad_ref[padh - W:padh - W + M, :])
        r = jnp.maximum(r, img)
        r = jnp.maximum(r, fpad_ref[padh + W:padh + W + M, :])
        r = jnp.maximum(r, fpad_ref[padh + 2 * W:padh + 2 * W + M, :])
        # horizontal 5-tap max: +-1/+-2 row shifts, masked at image-row edges
        fpad_ref[padh:padh + M, :] = r
        o = r
        for d in (-2, -1, 1, 2):
            shifted = fpad_ref[padh + d:padh + d + M, :]
            o = jnp.maximum(o, jnp.where(wmask[d], shifted, neg_inf))
        return o

    y1 = pool5(x1)
    y2 = pool5(y1)
    y3 = pool5(y2)

    # ---- cv2 on the virtual concat: 4 accumulated partial matmuls + SiLU -----
    acc = jnp.dot(x1, w2a_ref[...], preferred_element_type=jnp.float32)
    acc = acc + jnp.dot(y1, w2b_ref[...], preferred_element_type=jnp.float32)
    acc = acc + jnp.dot(y2, w2c_ref[...], preferred_element_type=jnp.float32)
    acc = acc + jnp.dot(y3, w2d_ref[...], preferred_element_type=jnp.float32)
    acc = acc + b2_ref[...]
    o_ref[0] = (acc * jax.nn.sigmoid(acc)).astype(o_ref.dtype)


def _round_up(v, m):
    return (v + m - 1) // m * m


@jax.jit
def sppf_forward(x_nchw, params):
    x = jnp.transpose(x_nchw, (0, 2, 3, 1))                 # NCHW -> NHWC (glue)
    N, H, W, C1 = x.shape
    c_ = params["cv1_w"].shape[1]
    c2 = params["cv2_w"].shape[1]
    M = H * W
    padh = _round_up(2 * W, 8)                              # aligned top pad

    # split cv2's weight so the channel concat never materialises
    w2 = params["cv2_w"]                                    # (4*c_, c2)
    w2a, w2b, w2c, w2d = (w2[i * c_:(i + 1) * c_, :] for i in range(4))

    kernel = functools.partial(_sppf_kernel, H=H, W=W, padh=padh)
    full = lambda n: (0, 0)

    out_flat = pl.pallas_call(
        kernel,
        out_shape=jax.ShapeDtypeStruct((N, M, c2), jnp.float32),
        grid_spec=pltpu.PrefetchScalarGridSpec(
            num_scalar_prefetch=0,
            grid=(N,),
            in_specs=[
                pl.BlockSpec((1, M, C1), lambda n: (n, 0, 0)),
                pl.BlockSpec((C1, c_), full),
                pl.BlockSpec((1, c_), full),
                pl.BlockSpec((c_, c2), full),
                pl.BlockSpec((c_, c2), full),
                pl.BlockSpec((c_, c2), full),
                pl.BlockSpec((c_, c2), full),
                pl.BlockSpec((1, c2), full),
            ],
            out_specs=pl.BlockSpec((1, M, c2), lambda n: (n, 0, 0)),
            scratch_shapes=[pltpu.VMEM((padh + M + 2 * W, c_), jnp.float32)],
        ),
        compiler_params=pltpu.CompilerParams(
            dimension_semantics=("parallel",)),
    )(x.reshape(N, M, C1), params["cv1_w"], params["cv1_b"],
      w2a, w2b, w2c, w2d, params["cv2_b"])

    out = out_flat.reshape(N, H, W, c2)
    return jnp.transpose(out, (0, 3, 1, 2))                 # back to NCHW


# ----------------------------------------------------------------------------
# Parameter construction (deterministic, BN fused into the 1x1 convs)
# ----------------------------------------------------------------------------
def fuse_conv_bn(w_oihw, gamma, beta, mean, var, eps=1e-3):
    """Fold eval-mode BatchNorm into a bias-free 1x1 conv.

    w_oihw: (Cout, Cin, 1, 1) PyTorch layout -> matmul weight (Cin, Cout) and
    bias (1, Cout).  eps=1e-3 matches nn.BatchNorm2d(eps=0.001) in the module.
    """
    scale = gamma / jnp.sqrt(var + eps)
    w = w_oihw[:, :, 0, 0]                     # (Cout, Cin)
    w_fused = (w * scale[:, None]).T           # (Cin, Cout)
    b_fused = beta - mean * scale
    return w_fused.astype(jnp.float32), b_fused.reshape(1, -1).astype(jnp.float32)


def make_sppf_params(key, c1, c2):
    c_ = c1 // 2
    ks = jax.random.split(key, 10)
    # cv1: Conv2d(c1, c_, 1) + BN(c_)
    w1 = jax.random.normal(ks[0], (c_, c1, 1, 1), jnp.float32) * 0.2
    g1 = 1.0 + 0.1 * jax.random.normal(ks[1], (c_,), jnp.float32)
    b1 = 0.1 * jax.random.normal(ks[2], (c_,), jnp.float32)
    m1 = 0.1 * jax.random.normal(ks[3], (c_,), jnp.float32)
    v1 = 1.0 + 0.1 * jax.random.uniform(ks[4], (c_,), jnp.float32)
    # cv2: Conv2d(4*c_, c2, 1) + BN(c2)
    w2 = jax.random.normal(ks[5], (c2, 4 * c_, 1, 1), jnp.float32) * 0.2
    g2 = 1.0 + 0.1 * jax.random.normal(ks[6], (c2,), jnp.float32)
    b2 = 0.1 * jax.random.normal(ks[7], (c2,), jnp.float32)
    m2 = 0.1 * jax.random.normal(ks[8], (c2,), jnp.float32)
    v2 = 1.0 + 0.1 * jax.random.uniform(ks[9], (c2,), jnp.float32)
    cv1_w, cv1_b = fuse_conv_bn(w1, g1, b1, m1, v1)
    cv2_w, cv2_b = fuse_conv_bn(w2, g2, b2, m2, v2)
    return {"cv1_w": cv1_w, "cv1_b": cv1_b, "cv2_w": cv2_w, "cv2_b": cv2_b}


# ----------------------------------------------------------------------------
# Pure-JAX reference for verification
# ----------------------------------------------------------------------------
def sppf_reference(x_nchw, params):
    x = jnp.transpose(x_nchw, (0, 2, 3, 1))

    def conv(x, w, b):
        y = jnp.einsum("nhwc,cd->nhwd", x, w) + b.reshape(1, 1, 1, -1)
        return y * jax.nn.sigmoid(y)

    def pool(x):
        return jax.lax.reduce_window(x, -jnp.inf, jax.lax.max,
                                     (1, 5, 5, 1), (1, 1, 1, 1),
                                     [(0, 0), (2, 2), (2, 2), (0, 0)])

    x1 = conv(x, params["cv1_w"], params["cv1_b"])
    y1 = pool(x1)
    y2 = pool(y1)
    y3 = pool(y2)
    out = conv(jnp.concatenate([x1, y1, y2, y3], axis=-1),
               params["cv2_w"], params["cv2_b"])
    return jnp.transpose(out, (0, 3, 1, 2))


if __name__ == "__main__":
    key = jax.random.PRNGKey(0)
    k_x, k_p = jax.random.split(key)

    N, C1, H, W = 2, 4, 16, 16          # SPPF(c1=4, c2=8, k=5)
    C2 = 8
    x = jax.random.normal(k_x, (N, C1, H, W), jnp.float32)
    params = make_sppf_params(k_p, C1, C2)

    out = jax.block_until_ready(sppf_forward(x, params))
    ref = sppf_reference(x, params)

    assert out.shape == (N, C2, H, W), out.shape
    max_err = float(jnp.max(jnp.abs(out - ref)))
    assert jnp.allclose(out, ref, atol=1e-4, rtol=1e-4), max_err

    print("KERNEL_OK")
</pallas_src>

<mosaic_0001>
module attributes {stable_mosaic.version = 11 : i64} {
  func.func @_sppf_kernel(%arg0: i32, %arg1: memref<1x256x4xf32, #tpu.memory_space<vmem>>, %arg2: memref<4x2xf32, #tpu.memory_space<vmem>>, %arg3: memref<1x2xf32, #tpu.memory_space<vmem>>, %arg4: memref<2x8xf32, #tpu.memory_space<vmem>>, %arg5: memref<2x8xf32, #tpu.memory_space<vmem>>, %arg6: memref<2x8xf32, #tpu.memory_space<vmem>>, %arg7: memref<2x8xf32, #tpu.memory_space<vmem>>, %arg8: memref<1x8xf32, #tpu.memory_space<vmem>>, %arg9: memref<1x256x8xf32, #tpu.memory_space<vmem>>, %arg10: memref<320x2xf32, #tpu.memory_space<vmem>>) attributes {dimension_semantics = [#tpu.dimension_semantics<parallel>], iteration_bounds = array<i64: 2>, scalar_prefetch = 0 : i64, scratch_operands = 1 : i64, tpu.core_type = #tpu.core_type<tc>, window_params = [{transform_indices = @transform_0, window_bounds = array<i64: 1, 256, 4>}, {pipeline_mode = #tpu.pipeline_mode<synchronous>, transform_indices = @transform_1, window_bounds = array<i64: 4, 2>}, {pipeline_mode = #tpu.pipeline_mode<synchronous>, transform_indices = @transform_2, window_bounds = array<i64: 1, 2>}, {pipeline_mode = #tpu.pipeline_mode<synchronous>, transform_indices = @transform_3, window_bounds = array<i64: 2, 8>}, {pipeline_mode = #tpu.pipeline_mode<synchronous>, transform_indices = @transform_4, window_bounds = array<i64: 2, 8>}, {pipeline_mode = #tpu.pipeline_mode<synchronous>, transform_indices = @transform_5, window_bounds = array<i64: 2, 8>}, {pipeline_mode = #tpu.pipeline_mode<synchronous>, transform_indices = @transform_6, window_bounds = array<i64: 2, 8>}, {pipeline_mode = #tpu.pipeline_mode<synchronous>, transform_indices = @transform_7, window_bounds = array<i64: 1, 8>}, {transform_indices = @transform_8, window_bounds = array<i64: 1, 256, 8>}]} {
    %c0 = arith.constant 0 : index
    %c0_0 = arith.constant 0 : index
    %c0_1 = arith.constant 0 : index
    %0 = vector.load %arg1[%c0, %c0_0, %c0_1] : memref<1x256x4xf32, #tpu.memory_space<vmem>>, vector<1x256x4xf32>
    %1 = vector.shape_cast %0 : vector<1x256x4xf32> to vector<256x4xf32>
    %c0_2 = arith.constant 0 : index
    %c0_3 = arith.constant 0 : index
    %2 = vector.load %arg2[%c0_2, %c0_3] : memref<4x2xf32, #tpu.memory_space<vmem>>, vector<4x2xf32>
    %cst = arith.constant dense<0.000000e+00> : vector<256x2xf32>
    %3 = tpu.matmul %1, %2, %cst {dimension_numbers = #tpu.dot_dimension_numbers<[1], [0], [0], [1], [0, 0, 1, 1], [], []>} : vector<256x4xf32>, vector<4x2xf32>, vector<256x2xf32> -> vector<256x2xf32>
    %c0_4 = arith.constant 0 : index
    %c0_5 = arith.constant 0 : index
    %4 = vector.load %arg3[%c0_4, %c0_5] : memref<1x2xf32, #tpu.memory_space<vmem>>, vector<1x2xf32>
    %5 = vector.broadcast %4 : vector<1x2xf32> to vector<256x2xf32>
    %6 = arith.addf %3, %5 : vector<256x2xf32>
    %7 = arith.negf %6 : vector<256x2xf32>
    %8 = math.exp %7 : vector<256x2xf32>
    %cst_6 = arith.constant 1.000000e+00 : f32
    %9 = vector.broadcast %cst_6 : f32 to vector<256x2xf32>
    %10 = arith.addf %9, %8 : vector<256x2xf32>
    %11 = arith.divf %9, %10 : vector<256x2xf32>
    %12 = arith.mulf %6, %11 : vector<256x2xf32>
    %cst_7 = arith.constant 0xFF800000 : f32
    %13 = vector.broadcast %cst_7 : f32 to vector<32x2xf32>
    %c0_8 = arith.constant 0 : index
    %c0_9 = arith.constant 0 : index
    %14 = vector.load %arg10[%c0_8, %c0_9] : memref<320x2xf32, #tpu.memory_space<vmem>>, vector<32x2xf32>
    tpu.vector_store %arg10[%c0_8, %c0_9], %13 {strides = array<i32>} : memref<320x2xf32, #tpu.memory_space<vmem>>, vector<32x2xf32>,
    %cst_10 = arith.constant 0xFF800000 : f32
    %15 = vector.broadcast %cst_10 : f32 to vector<32x2xf32>
    %c288 = arith.constant 288 : index
    %c0_11 = arith.constant 0 : index
    %16 = vector.load %arg10[%c288, %c0_11] : memref<320x2xf32, #tpu.memory_space<vmem>>, vector<32x2xf32>
    tpu.vector_store %arg10[%c288, %c0_11], %15 {strides = array<i32>} : memref<320x2xf32, #tpu.memory_space<vmem>>, vector<32x2xf32>,
    %17 = tpu.iota {dimensions = array<i32: 0>} : vector<256x2xi32>
    %c16_i32 = arith.constant 16 : i32
    %c0_i32 = arith.constant 0 : i32
    %18 = arith.cmpi eq, %c16_i32, %c0_i32 : i32
    %c1_i32 = arith.constant 1 : i32
    %19 = arith.select %18, %c1_i32, %c16_i32 : i32
    %20 = vector.broadcast %19 : i32 to vector<256x2xi32>
    %21 = arith.remsi %17, %20 : vector<256x2xi32>
    %c0_i32_12 = arith.constant 0 : i32
    %22 = vector.broadcast %c0_i32_12 : i32 to vector<256x2xi32>
    %23 = arith.cmpi ne, %21, %22 : vector<256x2xi32>
    %c0_i32_13 = arith.constant 0 : i32
    %24 = vector.broadcast %c0_i32_13 : i32 to vector<256x2xi32>
    %25 = arith.cmpi slt, %21, %24 : vector<256x2xi32>
    %c0_i32_14 = arith.constant 0 : i32
    %26 = arith.cmpi slt, %19, %c0_i32_14 : i32
    %27 = vector.broadcast %26 : i1 to vector<256x2xi1>
    %28 = vector.broadcast %27 : vector<256x2xi1> to vector<256x2xi1>
    %29 = arith.xori %25, %28 : vector<256x2xi1>
    %30 = arith.andi %29, %23 : vector<256x2xi1>
    %31 = vector.broadcast %19 : i32 to vector<256x2xi32>
    %32 = arith.addi %21, %31 : vector<256x2xi32>
    %33 = arith.select %30, %32, %21 : vector<256x2xi1>, vector<256x2xi32>
    %c-2_i32 = arith.constant -2 : i32
    %34 = vector.broadcast %c-2_i32 : i32 to vector<256x2xi32>
    %35 = arith.addi %33, %34 : vector<256x2xi32>
    %c0_i32_15 = arith.constant 0 : i32
    %36 = vector.broadcast %c0_i32_15 : i32 to vector<256x2xi32>
    %37 = arith.cmpi sge, %35, %36 : vector<256x2xi32>
    %c-2_i32_16 = arith.constant -2 : i32
    %38 = vector.broadcast %c-2_i32_16 : i32 to vector<256x2xi32>
    %39 = arith.addi %33, %38 : vector<256x2xi32>
    %c16_i32_17 = arith.constant 16 : i32
    %40 = vector.broadcast %c16_i32_17 : i32 to vector<256x2xi32>
    %41 = arith.cmpi slt, %39, %40 : vector<256x2xi32>
    %42 = arith.andi %37, %41 : vector<256x2xi1>
    %c-1_i32 = arith.constant -1 : i32
    %43 = vector.broadcast %c-1_i32 : i32 to vector<256x2xi32>
    %44 = arith.addi %33, %43 : vector<256x2xi32>
    %c0_i32_18 = arith.constant 0 : i32
    %45 = vector.broadcast %c0_i32_18 : i32 to vector<256x2xi32>
    %46 = arith.cmpi sge, %44, %45 : vector<256x2xi32>
    %c-1_i32_19 = arith.constant -1 : i32
    %47 = vector.broadcast %c-1_i32_19 : i32 to vector<256x2xi32>
    %48 = arith.addi %33, %47 : vector<256x2xi32>
    %c16_i32_20 = arith.constant 16 : i32
    %49 = vector.broadcast %c16_i32_20 : i32 to vector<256x2xi32>
    %50 = arith.cmpi slt, %48, %49 : vector<256x2xi32>
    %51 = arith.andi %46, %50 : vector<256x2xi1>
    %c1_i32_21 = arith.constant 1 : i32
    %52 = vector.broadcast %c1_i32_21 : i32 to vector<256x2xi32>
    %53 = arith.addi %33, %52 : vector<256x2xi32>
    %c0_i32_22 = arith.constant 0 : i32
    %54 = vector.broadcast %c0_i32_22 : i32 to vector<256x2xi32>
    %55 = arith.cmpi sge, %53, %54 : vector<256x2xi32>
    %c1_i32_23 = arith.constant 1 : i32
    %56 = vector.broadcast %c1_i32_23 : i32 to vector<256x2xi32>
    %57 = arith.addi %33, %56 : vector<256x2xi32>
    %c16_i32_24 = arith.constant 16 : i32
    %58 = vector.broadcast %c16_i32_24 : i32 to vector<256x2xi32>
    %59 = arith.cmpi slt, %57, %58 : vector<256x2xi32>
    %60 = arith.andi %55, %59 : vector<256x2xi1>
    %c2_i32 = arith.constant 2 : i32
    %61 = vector.broadcast %c2_i32 : i32 to vector<256x2xi32>
    %62 = arith.addi %33, %61 : vector<256x2xi32>
    %c0_i32_25 = arith.constant 0 : i32
    %63 = vector.broadcast %c0_i32_25 : i32 to vector<256x2xi32>
    %64 = arith.cmpi sge, %62, %63 : vector<256x2xi32>
    %c2_i32_26 = arith.constant 2 : i32
    %65 = vector.broadcast %c2_i32_26 : i32 to vector<256x2xi32>
    %66 = arith.addi %33, %65 : vector<256x2xi32>
    %c16_i32_27 = arith.constant 16 : i32
    %67 = vector.broadcast %c16_i32_27 : i32 to vector<256x2xi32>
    %68 = arith.cmpi slt, %66, %67 : vector<256x2xi32>
    %69 = arith.andi %64, %68 : vector<256x2xi1>
    %c32 = arith.constant 32 : index
    %c0_28 = arith.constant 0 : index
    %70 = vector.load %arg10[%c32, %c0_28] : memref<320x2xf32, #tpu.memory_space<vmem>>, vector<256x2xf32>
    tpu.vector_store %arg10[%c32, %c0_28], %12 {strides = array<i32>} : memref<320x2xf32, #tpu.memory_space<vmem>>, vector<256x2xf32>,
    %c0_29 = arith.constant 0 : index
    %c0_30 = arith.constant 0 : index
    %71 = vector.load %arg10[%c0_29, %c0_30] : memref<320x2xf32, #tpu.memory_space<vmem>>, vector<256x2xf32>
    %c16 = arith.constant 16 : index
    %c0_31 = arith.constant 0 : index
    %72 = vector.load %arg10[%c16, %c0_31] : memref<320x2xf32, #tpu.memory_space<vmem>>, vector<256x2xf32>
    %73 = arith.maximumf %71, %72 : vector<256x2xf32>
    %74 = arith.maximumf %73, %12 : vector<256x2xf32>
    %c48 = arith.constant 48 : index
    %c0_32 = arith.constant 0 : index
    %75 = vector.load %arg10[%c48, %c0_32] : memref<320x2xf32, #tpu.memory_space<vmem>>, vector<256x2xf32>
    %76 = arith.maximumf %74, %75 : vector<256x2xf32>
    %c64 = arith.constant 64 : index
    %c0_33 = arith.constant 0 : index
    %77 = vector.load %arg10[%c64, %c0_33] : memref<320x2xf32, #tpu.memory_space<vmem>>, vector<256x2xf32>
    %78 = arith.maximumf %76, %77 : vector<256x2xf32>
    %c32_34 = arith.constant 32 : index
    %c0_35 = arith.constant 0 : index
    %79 = vector.load %arg10[%c32_34, %c0_35] : memref<320x2xf32, #tpu.memory_space<vmem>>, vector<256x2xf32>
    tpu.vector_store %arg10[%c32_34, %c0_35], %78 {strides = array<i32>} : memref<320x2xf32, #tpu.memory_space<vmem>>, vector<256x2xf32>,
    %c30 = arith.constant 30 : index
    %c0_36 = arith.constant 0 : index
    %80 = vector.load %arg10[%c30, %c0_36] : memref<320x2xf32, #tpu.memory_space<vmem>>, vector<256x2xf32>
    %cst_37 = arith.constant 0xFF800000 : f32
    %81 = vector.broadcast %cst_37 : f32 to vector<256x2xf32>
    %82 = arith.select %42, %80, %81 : vector<256x2xi1>, vector<256x2xf32>
    %83 = arith.maximumf %78, %82 : vector<256x2xf32>
    %c31 = arith.constant 31 : index
    %c0_38 = arith.constant 0 : index
    %84 = vector.load %arg10[%c31, %c0_38] : memref<320x2xf32, #tpu.memory_space<vmem>>, vector<256x2xf32>
    %cst_39 = arith.constant 0xFF800000 : f32
    %85 = vector.broadcast %cst_39 : f32 to vector<256x2xf32>
    %86 = arith.select %51, %84, %85 : vector<256x2xi1>, vector<256x2xf32>
    %87 = arith.maximumf %83, %86 : vector<256x2xf32>
    %c33 = arith.constant 33 : index
    %c0_40 = arith.constant 0 : index
    %88 = vector.load %arg10[%c33, %c0_40] : memref<320x2xf32, #tpu.memory_space<vmem>>, vector<256x2xf32>
    %cst_41 = arith.constant 0xFF800000 : f32
    %89 = vector.broadcast %cst_41 : f32 to vector<256x2xf32>
    %90 = arith.select %60, %88, %89 : vector<256x2xi1>, vector<256x2xf32>
    %91 = arith.maximumf %87, %90 : vector<256x2xf32>
    %c34 = arith.constant 34 : index
    %c0_42 = arith.constant 0 : index
    %92 = vector.load %arg10[%c34, %c0_42] : memref<320x2xf32, #tpu.memory_space<vmem>>, vector<256x2xf32>
    %cst_43 = arith.constant 0xFF800000 : f32
    %93 = vector.broadcast %cst_43 : f32 to vector<256x2xf32>
    %94 = arith.select %69, %92, %93 : vector<256x2xi1>, vector<256x2xf32>
    %95 = arith.maximumf %91, %94 : vector<256x2xf32>
    %c32_44 = arith.constant 32 : index
    %c0_45 = arith.constant 0 : index
    %96 = vector.load %arg10[%c32_44, %c0_45] : memref<320x2xf32, #tpu.memory_space<vmem>>, vector<256x2xf32>
    tpu.vector_store %arg10[%c32_44, %c0_45], %95 {strides = array<i32>} : memref<320x2xf32, #tpu.memory_space<vmem>>, vector<256x2xf32>,
    %c0_46 = arith.constant 0 : index
    %c0_47 = arith.constant 0 : index
    %97 = vector.load %arg10[%c0_46, %c0_47] : memref<320x2xf32, #tpu.memory_space<vmem>>, vector<256x2xf32>
    %c16_48 = arith.constant 16 : index
    %c0_49 = arith.constant 0 : index
    %98 = vector.load %arg10[%c16_48, %c0_49] : memref<320x2xf32, #tpu.memory_space<vmem>>, vector<256x2xf32>
    %99 = arith.maximumf %97, %98 : vector<256x2xf32>
    %100 = arith.maximumf %99, %95 : vector<256x2xf32>
    %c48_50 = arith.constant 48 : index
    %c0_51 = arith.constant 0 : index
    %101 = vector.load %arg10[%c48_50, %c0_51] : memref<320x2xf32, #tpu.memory_space<vmem>>, vector<256x2xf32>
    %102 = arith.maximumf %100, %101 : vector<256x2xf32>
    %c64_52 = arith.constant 64 : index
    %c0_53 = arith.constant 0 : index
    %103 = vector.load %arg10[%c64_52, %c0_53] : memref<320x2xf32, #tpu.memory_space<vmem>>, vector<256x2xf32>
    %104 = arith.maximumf %102, %103 : vector<256x2xf32>
    %c32_54 = arith.constant 32 : index
    %c0_55 = arith.constant 0 : index
    %105 = vector.load %arg10[%c32_54, %c0_55] : memref<320x2xf32, #tpu.memory_space<vmem>>, vector<256x2xf32>
    tpu.vector_store %arg10[%c32_54, %c0_55], %104 {strides = array<i32>} : memref<320x2xf32, #tpu.memory_space<vmem>>, vector<256x2xf32>,
    %c30_56 = arith.constant 30 : index
    %c0_57 = arith.constant 0 : index
    %106 = vector.load %arg10[%c30_56, %c0_57] : memref<320x2xf32, #tpu.memory_space<vmem>>, vector<256x2xf32>
    %cst_58 = arith.constant 0xFF800000 : f32
    %107 = vector.broadcast %cst_58 : f32 to vector<256x2xf32>
    %108 = arith.select %42, %106, %107 : vector<256x2xi1>, vector<256x2xf32>
    %109 = arith.maximumf %104, %108 : vector<256x2xf32>
    %c31_59 = arith.constant 31 : index
    %c0_60 = arith.constant 0 : index
    %110 = vector.load %arg10[%c31_59, %c0_60] : memref<320x2xf32, #tpu.memory_space<vmem>>, vector<256x2xf32>
    %cst_61 = arith.constant 0xFF800000 : f32
    %111 = vector.broadcast %cst_61 : f32 to vector<256x2xf32>
    %112 = arith.select %51, %110, %111 : vector<256x2xi1>, vector<256x2xf32>
    %113 = arith.maximumf %109, %112 : vector<256x2xf32>
    %c33_62 = arith.constant 33 : index
    %c0_63 = arith.constant 0 : index
    %114 = vector.load %arg10[%c33_62, %c0_63] : memref<320x2xf32, #tpu.memory_space<vmem>>, vector<256x2xf32>
    %cst_64 = arith.constant 0xFF800000 : f32
    %115 = vector.broadcast %cst_64 : f32 to vector<256x2xf32>
    %116 = arith.select %60, %114, %115 : vector<256x2xi1>, vector<256x2xf32>
    %117 = arith.maximumf %113, %116 : vector<256x2xf32>
    %c34_65 = arith.constant 34 : index
    %c0_66 = arith.constant 0 : index
    %118 = vector.load %arg10[%c34_65, %c0_66] : memref<320x2xf32, #tpu.memory_space<vmem>>, vector<256x2xf32>
    %cst_67 = arith.constant 0xFF800000 : f32
    %119 = vector.broadcast %cst_67 : f32 to vector<256x2xf32>
    %120 = arith.select %69, %118, %119 : vector<256x2xi1>, vector<256x2xf32>
    %121 = arith.maximumf %117, %120 : vector<256x2xf32>
    %c32_68 = arith.constant 32 : index
    %c0_69 = arith.constant 0 : index
    %122 = vector.load %arg10[%c32_68, %c0_69] : memref<320x2xf32, #tpu.memory_space<vmem>>, vector<256x2xf32>
    tpu.vector_store %arg10[%c32_68, %c0_69], %121 {strides = array<i32>} : memref<320x2xf32, #tpu.memory_space<vmem>>, vector<256x2xf32>,
    %c0_70 = arith.constant 0 : index
    %c0_71 = arith.constant 0 : index
    %123 = vector.load %arg10[%c0_70, %c0_71] : memref<320x2xf32, #tpu.memory_space<vmem>>, vector<256x2xf32>
    %c16_72 = arith.constant 16 : index
    %c0_73 = arith.constant 0 : index
    %124 = vector.load %arg10[%c16_72, %c0_73] : memref<320x2xf32, #tpu.memory_space<vmem>>, vector<256x2xf32>
    %125 = arith.maximumf %123, %124 : vector<256x2xf32>
    %126 = arith.maximumf %125, %121 : vector<256x2xf32>
    %c48_74 = arith.constant 48 : index
    %c0_75 = arith.constant 0 : index
    %127 = vector.load %arg10[%c48_74, %c0_75] : memref<320x2xf32, #tpu.memory_space<vmem>>, vector<256x2xf32>
    %128 = arith.maximumf %126, %127 : vector<256x2xf32>
    %c64_76 = arith.constant 64 : index
    %c0_77 = arith.constant 0 : index
    %129 = vector.load %arg10[%c64_76, %c0_77] : memref<320x2xf32, #tpu.memory_space<vmem>>, vector<256x2xf32>
    %130 = arith.maximumf %128, %129 : vector<256x2xf32>
    %c32_78 = arith.constant 32 : index
    %c0_79 = arith.constant 0 : index
    %131 = vector.load %arg10[%c32_78, %c0_79] : memref<320x2xf32, #tpu.memory_space<vmem>>, vector<256x2xf32>
    tpu.vector_store %arg10[%c32_78, %c0_79], %130 {strides = array<i32>} : memref<320x2xf32, #tpu.memory_space<vmem>>, vector<256x2xf32>,
    %c30_80 = arith.constant 30 : index
    %c0_81 = arith.constant 0 : index
    %132 = vector.load %arg10[%c30_80, %c0_81] : memref<320x2xf32, #tpu.memory_space<vmem>>, vector<256x2xf32>
    %cst_82 = arith.constant 0xFF800000 : f32
    %133 = vector.broadcast %cst_82 : f32 to vector<256x2xf32>
    %134 = arith.select %42, %132, %133 : vector<256x2xi1>, vector<256x2xf32>
    %135 = arith.maximumf %130, %134 : vector<256x2xf32>
    %c31_83 = arith.constant 31 : index
    %c0_84 = arith.constant 0 : index
    %136 = vector.load %arg10[%c31_83, %c0_84] : memref<320x2xf32, #tpu.memory_space<vmem>>, vector<256x2xf32>
    %cst_85 = arith.constant 0xFF800000 : f32
    %137 = vector.broadcast %cst_85 : f32 to vector<256x2xf32>
    %138 = arith.select %51, %136, %137 : vector<256x2xi1>, vector<256x2xf32>
    %139 = arith.maximumf %135, %138 : vector<256x2xf32>
    %c33_86 = arith.constant 33 : index
    %c0_87 = arith.constant 0 : index
    %140 = vector.load %arg10[%c33_86, %c0_87] : memref<320x2xf32, #tpu.memory_space<vmem>>, vector<256x2xf32>
    %cst_88 = arith.constant 0xFF800000 : f32
    %141 = vector.broadcast %cst_88 : f32 to vector<256x2xf32>
    %142 = arith.select %60, %140, %141 : vector<256x2xi1>, vector<256x2xf32>
    %143 = arith.maximumf %139, %142 : vector<256x2xf32>
    %c34_89 = arith.constant 34 : index
    %c0_90 = arith.constant 0 : index
    %144 = vector.load %arg10[%c34_89, %c0_90] : memref<320x2xf32, #tpu.memory_space<vmem>>, vector<256x2xf32>
    %cst_91 = arith.constant 0xFF800000 : f32
    %145 = vector.broadcast %cst_91 : f32 to vector<256x2xf32>
    %146 = arith.select %69, %144, %145 : vector<256x2xi1>, vector<256x2xf32>
    %147 = arith.maximumf %143, %146 : vector<256x2xf32>
    %c0_92 = arith.constant 0 : index
    %c0_93 = arith.constant 0 : index
    %148 = vector.load %arg4[%c0_92, %c0_93] : memref<2x8xf32, #tpu.memory_space<vmem>>, vector<2x8xf32>
    %cst_94 = arith.constant dense<0.000000e+00> : vector<256x8xf32>
    %149 = tpu.matmul %12, %148, %cst_94 {dimension_numbers = #tpu.dot_dimension_numbers<[1], [0], [0], [1], [0, 0, 1, 1], [], []>} : vector<256x2xf32>, vector<2x8xf32>, vector<256x8xf32> -> vector<256x8xf32>
    %c0_95 = arith.constant 0 : index
    %c0_96 = arith.constant 0 : index
    %150 = vector.load %arg5[%c0_95, %c0_96] : memref<2x8xf32, #tpu.memory_space<vmem>>, vector<2x8xf32>
    %cst_97 = arith.constant dense<0.000000e+00> : vector<256x8xf32>
    %151 = tpu.matmul %95, %150, %cst_97 {dimension_numbers = #tpu.dot_dimension_numbers<[1], [0], [0], [1], [0, 0, 1, 1], [], []>} : vector<256x2xf32>, vector<2x8xf32>, vector<256x8xf32> -> vector<256x8xf32>
    %152 = arith.addf %149, %151 : vector<256x8xf32>
    %c0_98 = arith.constant 0 : index
    %c0_99 = arith.constant 0 : index
    %153 = vector.load %arg6[%c0_98, %c0_99] : memref<2x8xf32, #tpu.memory_space<vmem>>, vector<2x8xf32>
    %cst_100 = arith.constant dense<0.000000e+00> : vector<256x8xf32>
    %154 = tpu.matmul %121, %153, %cst_100 {dimension_numbers = #tpu.dot_dimension_numbers<[1], [0], [0], [1], [0, 0, 1, 1], [], []>} : vector<256x2xf32>, vector<2x8xf32>, vector<256x8xf32> -> vector<256x8xf32>
    %155 = arith.addf %152, %154 : vector<256x8xf32>
    %c0_101 = arith.constant 0 : index
    %c0_102 = arith.constant 0 : index
    %156 = vector.load %arg7[%c0_101, %c0_102] : memref<2x8xf32, #tpu.memory_space<vmem>>, vector<2x8xf32>
    %cst_103 = arith.constant dense<0.000000e+00> : vector<256x8xf32>
    %157 = tpu.matmul %147, %156, %cst_103 {dimension_numbers = #tpu.dot_dimension_numbers<[1], [0], [0], [1], [0, 0, 1, 1], [], []>} : vector<256x2xf32>, vector<2x8xf32>, vector<256x8xf32> -> vector<256x8xf32>
    %158 = arith.addf %155, %157 : vector<256x8xf32>
    %c0_104 = arith.constant 0 : index
    %c0_105 = arith.constant 0 : index
    %159 = vector.load %arg8[%c0_104, %c0_105] : memref<1x8xf32, #tpu.memory_space<vmem>>, vector<1x8xf32>
    %160 = vector.broadcast %159 : vector<1x8xf32> to vector<256x8xf32>
    %161 = arith.addf %158, %160 : vector<256x8xf32>
    %162 = arith.negf %161 : vector<256x8xf32>
    %163 = math.exp %162 : vector<256x8xf32>
    %cst_106 = arith.constant 1.000000e+00 : f32
    %164 = vector.broadcast %cst_106 : f32 to vector<256x8xf32>
    %165 = arith.addf %164, %163 : vector<256x8xf32>
    %166 = arith.divf %164, %165 : vector<256x8xf32>
    %167 = arith.mulf %161, %166 : vector<256x8xf32>
    %c0_107 = arith.constant 0 : index
    %c0_108 = arith.constant 0 : index
    %c0_109 = arith.constant 0 : index
    %168 = vector.load %arg9[%c0_107, %c0_108, %c0_109] : memref<1x256x8xf32, #tpu.memory_space<vmem>>, vector<1x256x8xf32>
    %169 = vector.shape_cast %168 : vector<1x256x8xf32> to vector<256x8xf32>
    %170 = vector.shape_cast %167 : vector<256x8xf32> to vector<1x256x8xf32>
    tpu.vector_store %arg9[%c0_107, %c0_108, %c0_109], %170 {strides = array<i32>} : memref<1x256x8xf32, #tpu.memory_space<vmem>>, vector<1x256x8xf32>,
    return
  }
  func.func @transform_0(%arg0: i32) -> (i32, i32, i32) {
    %c0_i32 = arith.constant 0 : i32
    %c0_i32_0 = arith.constant 0 : i32
    %c0_i32_1 = arith.constant 0 : i32
    return %arg0, %c0_i32, %c0_i32_0 : i32, i32, i32
  }
  func.func @transform_1(%arg0: i32) -> (i32, i32) {
    %c0_i32 = arith.constant 0 : i32
    %c0_i32_0 = arith.constant 0 : i32
    %c0_i32_1 = arith.constant 0 : i32
    return %c0_i32, %c0_i32_0 : i32, i32
  }
  func.func @transform_2(%arg0: i32) -> (i32, i32) {
    %c0_i32 = arith.constant 0 : i32
    %c0_i32_0 = arith.constant 0 : i32
    %c0_i32_1 = arith.constant 0 : i32
    return %c0_i32, %c0_i32_0 : i32, i32
  }
  func.func @transform_3(%arg0: i32) -> (i32, i32) {
    %c0_i32 = arith.constant 0 : i32
    %c0_i32_0 = arith.constant 0 : i32
    %c0_i32_1 = arith.constant 0 : i32
    return %c0_i32, %c0_i32_0 : i32, i32
  }
  func.func @transform_4(%arg0: i32) -> (i32, i32) {
    %c0_i32 = arith.constant 0 : i32
    %c0_i32_0 = arith.constant 0 : i32
    %c0_i32_1 = arith.constant 0 : i32
    return %c0_i32, %c0_i32_0 : i32, i32
  }
  func.func @transform_5(%arg0: i32) -> (i32, i32) {
    %c0_i32 = arith.constant 0 : i32
    %c0_i32_0 = arith.constant 0 : i32
    %c0_i32_1 = arith.constant 0 : i32
    return %c0_i32, %c0_i32_0 : i32, i32
  }
  func.func @transform_6(%arg0: i32) -> (i32, i32) {
    %c0_i32 = arith.constant 0 : i32
    %c0_i32_0 = arith.constant 0 : i32
    %c0_i32_1 = arith.constant 0 : i32
    return %c0_i32, %c0_i32_0 : i32, i32
  }
  func.func @transform_7(%arg0: i32) -> (i32, i32) {
    %c0_i32 = arith.constant 0 : i32
    %c0_i32_0 = arith.constant 0 : i32
    %c0_i32_1 = arith.constant 0 : i32
    return %c0_i32, %c0_i32_0 : i32, i32
  }
  func.func @transform_8(%arg0: i32) -> (i32, i32, i32) {
    %c0_i32 = arith.constant 0 : i32
    %c0_i32_0 = arith.constant 0 : i32
    %c0_i32_1 = arith.constant 0 : i32
    return %arg0, %c0_i32, %c0_i32_0 : i32, i32, i32
  }
}

</mosaic_0001>

<llo_original>
// kernel: sppf_forward.1
$region0: #{sppf_forward.1}
  #allocation0 [shape = 'u32[]', space=smem, size = 0x4, offset = 0x4, fixed_abs, tag = 'smem constant byte address 0x4 - core index']
  #allocation1 [shape = 'u32[144,128]{1,0:T(1,128)}', space=vmem, size = 0x12000, scoped, tag = 'internal scratch']
  #allocation2 [shape = 'f32[320,2]{1,0:T(8,128)}', space=vmem, size = 0x28000, scoped, tag = 'scratch operand']
  %s0 = inlined_call_operand.vmem [shape: f32[2,256,4], index: 0, kind: input, shape index: {}]
  %s1 = inlined_call_operand.vmem [shape: f32[4,2], index: 1, kind: input, shape index: {}]
  %s2 = inlined_call_operand.vmem [shape: f32[1,2], index: 2, kind: input, shape index: {}]
  %s3 = inlined_call_operand.vmem [shape: f32[2,8], index: 3, kind: input, shape index: {}]
  %s4 = inlined_call_operand.vmem [shape: f32[2,8], index: 4, kind: input, shape index: {}]
  %s5 = inlined_call_operand.vmem [shape: f32[2,8], index: 5, kind: input, shape index: {}]
  %s6 = inlined_call_operand.vmem [shape: f32[2,8], index: 6, kind: input, shape index: {}]
  %s7 = inlined_call_operand.vmem [shape: f32[1,8], index: 7, kind: input, shape index: {}]
  %s8 = inlined_call_operand.vmem [shape: f32[2,256,8], index: 8, kind: output, shape index: {}]
  %s9 = sld [smem:[#allocation0]]
  $region65: #{sppf_forward.1} parent=0
    _
  %s11 = ssub.s32 1, %s9
  %s12 = scalar_select 0, %s11, %s9
  loop: start=0, step=1, limit=4
  $region2: #{sppf_forward.1} parent=0 // loop_pre_header
    _
  $region3: #{sppf_forward.1} parent=0 // loop_header
    %s14 = sphi 0, %s18
    %p15 = scmp.ge.s32.totalorder %s14, 4
    %s24 = sphi 0, %s26
    %s27 = sphi 0, %s24
    %s28 = sphi 0, %s27
    %s44 = sphi 0, %s28
    %s48 = sphi 0, %s48
    %s50 = sphi 0, %s48
    %s51 = sphi 0, %s50
    %s65 = sphi 0, %s51
    %s69 = sphi 0, %s69
    %s71 = sphi 0, %s69
    %s72 = sphi 0, %s71
    %s86 = sphi 0, %s72
    %s90 = sphi 0, %s90
    %s92 = sphi 0, %s90
    %s93 = sphi 0, %s92
    %s107 = sphi 0, %s93
    %s111 = sphi 0, %s111
    %s113 = sphi 0, %s111
    %s114 = sphi 0, %s113
    %s128 = sphi 0, %s114
    %s132 = sphi 0, %s132
    %s134 = sphi 0, %s132
    %s135 = sphi 0, %s134
    %s149 = sphi 0, %s135
    %s153 = sphi 0, %s153
    %s155 = sphi 0, %s153
    %s156 = sphi 0, %s155
    %s170 = sphi 0, %s156
    %s174 = sphi 0, %s174
    %s176 = sphi 0, %s174
    %s177 = sphi 0, %s176
    %s191 = sphi 0, %s177
    %s197 = sphi 0, %s199
    %s200 = sphi 0, %s197
    %s201 = sphi 0, %s200
    %s217 = sphi 0, %s201
  $region4: #{sppf_forward.1} parent=0 // loop_header_branch
    %17 = sbr.rel (%p15) target = $region8
  $region5: #{sppf_forward.1} parent=0 // loop_body
    %s19 = ssub.s32 %s14, 1
    %s20 = ssub.s32 %s14, 2
    %s21 = sadd.s32 %s14, 1
    %s22 = ssub.s32 %s14, %s21
    %p23 = scmp.eq.s32.totalorder %s22, 0
    %s25 = sadd.s32 %s24, 1
    %s26 = scalar_select %p23, %s24, %s25
    %p29 = pneg %p23
    %p30 = scmp.eq.s32.totalorder %s14, 1
    %p31 = por %p29, %p30
    %p32 = scmp.ne.s32.totalorder %s24, %s27
    %p33 = scmp.eq.s32.totalorder %s14, 0
    %p34 = por %p32, %p33
    %p35 = scmp.ne.s32.totalorder %s24, %s27
    %p36 = scmp.eq.s32.totalorder %s19, 1
    %p37 = por %p35, %p36
    %p38 = scmp.ne.s32.totalorder %s27, %s28
    %p39 = scmp.eq.s32.totalorder %s19, 0
    %p40 = por %p38, %p39
    %p41 = scmp.ne.s32.totalorder %s27, %s28
    %p42 = scmp.eq.s32.totalorder %s20, 1
    %p43 = por %p41, %p42
    %p45 = scmp.ne.s32.totalorder %s28, %s44
    %p46 = scmp.eq.s32.totalorder %s20, 0
    %p47 = por %p45, %p46
    %s49 = sadd.s32 %s48, 1
    %p52 = scmp.eq.s32.totalorder %s14, 1
    %p53 = scmp.ne.s32.totalorder %s48, %s50
    %p54 = scmp.eq.s32.totalorder %s14, 0
    %p55 = por %p53, %p54
    %p56 = scmp.ne.s32.totalorder %s48, %s50
    %p57 = scmp.eq.s32.totalorder %s19, 1
    %p58 = por %p56, %p57
    %p59 = scmp.ne.s32.totalorder %s50, %s51
    %p60 = scmp.eq.s32.totalorder %s19, 0
    %p61 = por %p59, %p60
    %p62 = scmp.ne.s32.totalorder %s50, %s51
    %p63 = scmp.eq.s32.totalorder %s20, 1
    %p64 = por %p62, %p63
    %p66 = scmp.ne.s32.totalorder %s51, %s65
    %p67 = scmp.eq.s32.totalorder %s20, 0
    %p68 = por %p66, %p67
    %s70 = sadd.s32 %s69, 1
    %p73 = scmp.eq.s32.totalorder %s14, 1
    %p74 = scmp.ne.s32.totalorder %s69, %s71
    %p75 = scmp.eq.s32.totalorder %s14, 0
    %p76 = por %p74, %p75
    %p77 = scmp.ne.s32.totalorder %s69, %s71
    %p78 = scmp.eq.s32.totalorder %s19, 1
    %p79 = por %p77, %p78
    %p80 = scmp.ne.s32.totalorder %s71, %s72
    %p81 = scmp.eq.s32.totalorder %s19, 0
    %p82 = por %p80, %p81
    %p83 = scmp.ne.s32.totalorder %s71, %s72
    %p84 = scmp.eq.s32.totalorder %s20, 1
    %p85 = por %p83, %p84
    %p87 = scmp.ne.s32.totalorder %s72, %s86
    %p88 = scmp.eq.s32.totalorder %s20, 0
    %p89 = por %p87, %p88
    %s91 = sadd.s32 %s90, 1
    %p94 = scmp.eq.s32.totalorder %s14, 1
    %p95 = scmp.ne.s32.totalorder %s90, %s92
    %p96 = scmp.eq.s32.totalorder %s14, 0
    %p97 = por %p95, %p96
    %p98 = scmp.ne.s32.totalorder %s90, %s92
    %p99 = scmp.eq.s32.totalorder %s19, 1
    %p100 = por %p98, %p99
    %p101 = scmp.ne.s32.totalorder %s92, %s93
    %p102 = scmp.eq.s32.totalorder %s19, 0
    %p103 = por %p101, %p102
    %p104 = scmp.ne.s32.totalorder %s92, %s93
    %p105 = scmp.eq.s32.totalorder %s20, 1
    %p106 = por %p104, %p105
    %p108 = scmp.ne.s32.totalorder %s93, %s107
    %p109 = scmp.eq.s32.totalorder %s20, 0
    %p110 = por %p108, %p109
    %s112 = sadd.s32 %s111, 1
    %p115 = scmp.eq.s32.totalorder %s14, 1
    %p116 = scmp.ne.s32.totalorder %s111, %s113
    %p117 = scmp.eq.s32.totalorder %s14, 0
    %p118 = por %p116, %p117
    %p119 = scmp.ne.s32.totalorder %s111, %s113
    %p120 = scmp.eq.s32.totalorder %s19, 1
    %p121 = por %p119, %p120
    %p122 = scmp.ne.s32.totalorder %s113, %s114
    %p123 = scmp.eq.s32.totalorder %s19, 0
    %p124 = por %p122, %p123
    %p125 = scmp.ne.s32.totalorder %s113, %s114
    %p126 = scmp.eq.s32.totalorder %s20, 1
    %p127 = por %p125, %p126
    %p129 = scmp.ne.s32.totalorder %s114, %s128
    %p130 = scmp.eq.s32.totalorder %s20, 0
    %p131 = por %p129, %p130
    %s133 = sadd.s32 %s132, 1
    %p136 = scmp.eq.s32.totalorder %s14, 1
    %p137 = scmp.ne.s32.totalorder %s132, %s134
    %p138 = scmp.eq.s32.totalorder %s14, 0
    %p139 = por %p137, %p138
    %p140 = scmp.ne.s32.totalorder %s132, %s134
    %p141 = scmp.eq.s32.totalorder %s19, 1
    %p142 = por %p140, %p141
    %p143 = scmp.ne.s32.totalorder %s134, %s135
    %p144 = scmp.eq.s32.totalorder %s19, 0
    %p145 = por %p143, %p144
    %p146 = scmp.ne.s32.totalorder %s134, %s135
    %p147 = scmp.eq.s32.totalorder %s20, 1
    %p148 = por %p146, %p147
    %p150 = scmp.ne.s32.totalorder %s135, %s149
    %p151 = scmp.eq.s32.totalorder %s20, 0
    %p152 = por %p150, %p151
    %s154 = sadd.s32 %s153, 1
    %p157 = scmp.eq.s32.totalorder %s14, 1
    %p158 = scmp.ne.s32.totalorder %s153, %s155
    %p159 = scmp.eq.s32.totalorder %s14, 0
    %p160 = por %p158, %p159
    %p161 = scmp.ne.s32.totalorder %s153, %s155
    %p162 = scmp.eq.s32.totalorder %s19, 1
    %p163 = por %p161, %p162
    %p164 = scmp.ne.s32.totalorder %s155, %s156
    %p165 = scmp.eq.s32.totalorder %s19, 0
    %p166 = por %p164, %p165
    %p167 = scmp.ne.s32.totalorder %s155, %s156
    %p168 = scmp.eq.s32.totalorder %s20, 1
    %p169 = por %p167, %p168
    %p171 = scmp.ne.s32.totalorder %s156, %s170
    %p172 = scmp.eq.s32.totalorder %s20, 0
    %p173 = por %p171, %p172
    %s175 = sadd.s32 %s174, 1
    %p178 = scmp.eq.s32.totalorder %s14, 1
    %p179 = scmp.ne.s32.totalorder %s174, %s176
    %p180 = scmp.eq.s32.totalorder %s14, 0
    %p181 = por %p179, %p180
    %p182 = scmp.ne.s32.totalorder %s174, %s176
    %p183 = scmp.eq.s32.totalorder %s19, 1
    %p184 = por %p182, %p183
    %p185 = scmp.ne.s32.totalorder %s176, %s177
    %p186 = scmp.eq.s32.totalorder %s19, 0
    %p187 = por %p185, %p186
    %p188 = scmp.ne.s32.totalorder %s176, %s177
    %p189 = scmp.eq.s32.totalorder %s20, 1
    %p190 = por %p188, %p189
    %p192 = scmp.ne.s32.totalorder %s177, %s191
    %p193 = scmp.eq.s32.totalorder %s20, 0
    %p194 = por %p192, %p193
    %s195 = ssub.s32 %s14, %s21
    %p196 = scmp.eq.s32.totalorder %s195, 0
    %s198 = sadd.s32 %s197, 1
    %s199 = scalar_select %p196, %s197, %s198
    %p202 = pneg %p196
    %p203 = scmp.eq.s32.totalorder %s14, 1
    %p204 = por %p202, %p203
    %p205 = scmp.ne.s32.totalorder %s197, %s200
    %p206 = scmp.eq.s32.totalorder %s14, 0
    %p207 = por %p205, %p206
    %p208 = scmp.ne.s32.totalorder %s197, %s200
    %p209 = scmp.eq.s32.totalorder %s19, 1
    %p210 = por %p208, %p209
    %p211 = scmp.ne.s32.totalorder %s200, %s201
    %p212 = scmp.eq.s32.totalorder %s19, 0
    %p213 = por %p211, %p212
    %p214 = scmp.ne.s32.totalorder %s200, %s201
    %p215 = scmp.eq.s32.totalorder %s20, 1
    %p216 = por %p214, %p215
    %p218 = scmp.ne.s32.totalorder %s201, %s217
    %p219 = scmp.eq.s32.totalorder %s20, 0
    %p220 = por %p218, %p219
    %p221 = scmp.le.s32.totalorder 1, %s14
    %p222 = scmp.lt.s32.totalorder %s14, 3
    %p223 = pnand %p221, %p222
    %p224 = pneg %p223
    // Predicated region
    $region9: #{sppf_forward.1} parent=5 // pred_check
      _
    $region10: #{sppf_forward.1} parent=5 // pred_check_branch
      %226 = sbr.rel (%p223) target = $region12
    $region11: #{sppf_forward.1} parent=5 // pred_region
      %s227 = ssub.s32 %s14, 1
      // Predicated region
      $region13: #{sppf_forward.1} parent=11 // pred_check
        %p228 = pneg %p61
      $region14: #{sppf_forward.1} parent=11 // pred_check_branch
        %230 = sbr.rel (%p228) target = $region16
      $region15: #{sppf_forward.1} parent=11 // pred_region
        _
      $region16: #{sppf_forward.1} parent=11 // pred_fallthru
        _
      // Predicated region
      $region17: #{sppf_forward.1} parent=11 // pred_check
        %p231 = pneg %p82
      $region18: #{sppf_forward.1} parent=11 // pred_check_branch
        %233 = sbr.rel (%p231) target = $region20
      $region19: #{sppf_forward.1} parent=11 // pred_region
        _
      $region20: #{sppf_forward.1} parent=11 // pred_fallthru
        _
      // Predicated region
      $region21: #{sppf_forward.1} parent=11 // pred_check
        %p234 = pneg %p103
      $region22: #{sppf_forward.1} parent=11 // pred_check_branch
        %236 = sbr.rel (%p234) target = $region24
      $region23: #{sppf_forward.1} parent=11 // pred_region
        _
      $region24: #{sppf_forward.1} parent=11 // pred_fallthru
        _
      // Predicated region
      $region25: #{sppf_forward.1} parent=11 // pred_check
        %p237 = pneg %p124
      $region26: #{sppf_forward.1} parent=11 // pred_check_branch
        %239 = sbr.rel (%p237) target = $region28
      $region27: #{sppf_forward.1} parent=11 // pred_region
        _
      $region28: #{sppf_forward.1} parent=11 // pred_fallthru
        _
      // Predicated region
      $region29: #{sppf_forward.1} parent=11 // pred_check
        %p240 = pneg %p145
      $region30: #{sppf_forward.1} parent=11 // pred_check_branch
        %242 = sbr.rel (%p240) target = $region32
      $region31: #{sppf_forward.1} parent=11 // pred_region
        _
      $region32: #{sppf_forward.1} parent=11 // pred_fallthru
        _
      // Predicated region
      $region33: #{sppf_forward.1} parent=11 // pred_check
        %p243 = pneg %p166
      $region34: #{sppf_forward.1} parent=11 // pred_check_branch
        %245 = sbr.rel (%p243) target = $region36
      $region35: #{sppf_forward.1} parent=11 // pred_region
        _
      $region36: #{sppf_forward.1} parent=11 // pred_fallthru
        _
      // Predicated region
      $region37: #{sppf_forward.1} parent=11 // pred_check
        %p246 = pneg %p187
      $region38: #{sppf_forward.1} parent=11 // pred_check_branch
        %248 = sbr.rel (%p246) target = $region40
      $region39: #{sppf_forward.1} parent=11 // pred_region
        _
      $region40: #{sppf_forward.1} parent=11 // pred_fallthru
        _
    $region12: #{sppf_forward.1} parent=5 // pred_fallthru
      _
    %p249 = scmp.lt.s32.totalorder %s14, 2
    // Predicated region
    $region41: #{sppf_forward.1} parent=5 // pred_check
      %p250 = pneg %p249
    $region42: #{sppf_forward.1} parent=5 // pred_check_branch
      %252 = sbr.rel (%p250) target = $region44
    $region43: #{sppf_forward.1} parent=5 // pred_region
      // Predicated region
      $region45: #{sppf_forward.1} parent=43 // pred_check
        %p253 = pneg %p34
      $region46: #{sppf_forward.1} parent=43 // pred_check_branch
        %255 = sbr.rel (%p253) target = $region48
      $region47: #{sppf_forward.1} parent=43 // pred_region
        %p256 = scmp.lt.s32.totalorder %s14, 1
        %s257 = scalar_select %p256, %s14, 1
        %s258 = smul.addr %s257, 32
        %s259 = smul.addr %s258, 8
        %s260 = scalar_lea.vmem %s0, %s259
      $region48: #{sppf_forward.1} parent=43 // pred_fallthru
        _
    $region44: #{sppf_forward.1} parent=5 // pred_fallthru
      _
    %p261 = scmp.le.s32.totalorder 1, %s14
    %p262 = scmp.lt.s32.totalorder %s14, 3
    %p263 = pnand %p261, %p262
    %p264 = pneg %p263
    // Predicated region
    $region49: #{sppf_forward.1} parent=5 // pred_check
      _
    $region50: #{sppf_forward.1} parent=5 // pred_check_branch
      %266 = sbr.rel (%p263) target = $region52
    $region51: #{sppf_forward.1} parent=5 // pred_region
      %s267 = ssub.s32 %s14, 1
      %p268 = scmp.lt.s32.totalorder %s19, 1
      %s269 = scalar_select %p268, %s19, 1
      %s270 = smul.addr %s269, 32
      %s271 = smul.addr %s270, 8
      %s272 = scalar_lea.vmem %s0, %s271
      %p273 = pneg %p40
      %p274 = pneg %p37
      %p275 = pneg %p61
      %p276 = pneg %p58
      %p277 = pneg %p82
      %p278 = pneg %p79
      %p279 = pneg %p103
      %p280 = pneg %p100
      %p281 = pneg %p124
      %p282 = pneg %p121
      %p283 = pneg %p145
      %p284 = pneg %p142
      %p285 = pneg %p166
      %p286 = pneg %p163
      %p287 = pneg %p187
      %p288 = pneg %p184
      %p289 = pneg %p213
      %p290 = pneg %p210
      %p291 = scmp.lt.s32.totalorder %s19, 1
      %s292 = scalar_select %p291, %s19, 1
      %s293 = smul.addr %s292, 32
      %s294 = smul.addr %s293, 8
      %s295 = scalar_lea.vmem %s8, %s294
      %p296 = scmp.lt.s32.totalorder %s19, 1
      %s297 = scalar_select %p296, %s19, 1
      %s298 = smul.addr %s297, 32
      %s299 = smul.addr %s298, 8
      %s300 = scalar_lea.vmem %s0, %s299
      %p301 = scmp.lt.s32.totalorder %s19, 1
      %s302 = scalar_select %p301, %s19, 1
      %s303 = smul.addr %s302, 32
      %s304 = smul.addr %s303, 8
      %s305 = scalar_lea.vmem %s8, %s304
      %v306 = vld [vmem:[%s300] sm:$0xff]
      %v307 = vld [vmem:[%s300 + $0x8] sm:$0xff]
      %v308 = vld [vmem:[%s300 + $0x10] sm:$0xff]
      %v309 = vld [vmem:[%s300 + $0x18] sm:$0xff]
      %v310 = vld [vmem:[%s300 + $0x20] sm:$0xff]
      %v311 = vld [vmem:[%s300 + $0x28] sm:$0xff]
      %v312 = vld [vmem:[%s300 + $0x30] sm:$0xff]
      %v313 = vld [vmem:[%s300 + $0x38] sm:$0xff]
      %v314 = vld [vmem:[%s300 + $0x40] sm:$0xff]
      %v315 = vld [vmem:[%s300 + $0x48] sm:$0xff]
      %v316 = vld [vmem:[%s300 + $0x50] sm:$0xff]
      %v317 = vld [vmem:[%s300 + $0x58] sm:$0xff]
      %v318 = vld [vmem:[%s300 + $0x60] sm:$0xff]
      %v319 = vld [vmem:[%s300 + $0x68] sm:$0xff]
      %v320 = vld [vmem:[%s300 + $0x70] sm:$0xff]
      %v321 = vld [vmem:[%s300 + $0x78] sm:$0xff]
      %v322 = vld [vmem:[%s300 + $0x80] sm:$0xff]
      %v323 = vld [vmem:[%s300 + $0x88] sm:$0xff]
      %v324 = vld [vmem:[%s300 + $0x90] sm:$0xff]
      %v325 = vld [vmem:[%s300 + $0x98] sm:$0xff]
      %v326 = vld [vmem:[%s300 + $0xa0] sm:$0xff]
      %v327 = vld [vmem:[%s300 + $0xa8] sm:$0xff]
      %v328 = vld [vmem:[%s300 + $0xb0] sm:$0xff]
      %v329 = vld [vmem:[%s300 + $0xb8] sm:$0xff]
      %v330 = vld [vmem:[%s300 + $0xc0] sm:$0xff]
      %v331 = vld [vmem:[%s300 + $0xc8] sm:$0xff]
      %v332 = vld [vmem:[%s300 + $0xd0] sm:$0xff]
      %v333 = vld [vmem:[%s300 + $0xd8] sm:$0xff]
      %v334 = vld [vmem:[%s300 + $0xe0] sm:$0xff]
      %v335 = vld [vmem:[%s300 + $0xe8] sm:$0xff]
      %v336 = vld [vmem:[%s300 + $0xf0] sm:$0xff]
      %v337 = vld [vmem:[%s300 + $0xf8] sm:$0xff]
      %v338 = vld [vmem:[%s1] sm:$0xf]
      %v339 = vld [vmem:[%s2] sm:$0x1]
      %v341 = vlaneseq
      %v342 = vshrl.u32 %v341, 7
      %v343 = vsub.s32 0, %v342
      %v344 = vrot.slane %v339, %v343
      %vm346 = vcmask 31744
      %v348 = vsel %vm346, %v306, 0
      %v351 = vsel %vm346, %v307, 0
      %v354 = vsel %vm346, %v308, 0
      %v357 = vsel %vm346, %v309, 0
      %v360 = vsel %vm346, %v310, 0
      %v363 = vsel %vm346, %v311, 0
      %v366 = vsel %vm346, %v312, 0
      %v369 = vsel %vm346, %v313, 0
      %v372 = vsel %vm346, %v314, 0
      %v375 = vsel %vm346, %v315, 0
      %v378 = vsel %vm346, %v316, 0
      %v381 = vsel %vm346, %v317, 0
      %v384 = vsel %vm346, %v318, 0
      %v387 = vsel %vm346, %v319, 0
      %v390 = vsel %vm346, %v320, 0
      %v393 = vsel %vm346, %v321, 0
      %v396 = vsel %vm346, %v322, 0
      %v399 = vsel %vm346, %v323, 0
      %v402 = vsel %vm346, %v324, 0
      %v405 = vsel %vm346, %v325, 0
      %v408 = vsel %vm346, %v326, 0
      %v411 = vsel %vm346, %v327, 0
      %v414 = vsel %vm346, %v328, 0
      %v417 = vsel %vm346, %v329, 0
      %v420 = vsel %vm346, %v330, 0
      %v423 = vsel %vm346, %v331, 0
      %v426 = vsel %vm346, %v332, 0
      %v429 = vsel %vm346, %v333, 0
      %v432 = vsel %vm346, %v334, 0
      %v435 = vsel %vm346, %v335, 0
      %v438 = vsel %vm346, %v336, 0
      %v441 = vsel %vm346, %v337, 0
      %vm443 = vcmask 1043456
      %v445 = vsel %vm443, %v338, 0
      %447 = vmatprep.subr.mxu0 0.0
      %448 = vmatpush1.msra.mxu0 %v445
      %449 = vmatprep.subr.mxu0 0.0
      %450 = vmatpush1.msra.mxu0 0.0
      %451 = vmatprep.subr.mxu0 0.0
      %452 = vmatpush1.msra.mxu0 0.0
      %453 = vmatprep.subr.mxu0 0.0
      %454 = vmatpush1.msra.mxu0 0.0
      %455 = vmatprep.subr.mxu0 0.0
      %456 = vmatpush1.msra.mxu0 0.0
      %457 = vmatprep.subr.mxu0 0.0
      %458 = vmatpush1.msra.mxu0 0.0
      %459 = vmatprep.subr.mxu0 0.0
      %460 = vmatpush1.msra.mxu0 0.0
      %461 = vmatprep.subr.mxu0 0.0
      %462 = vmatpush1.msra.mxu0 0.0
      %463 = vmatprep.subr.mxu0 0.0
      %464 = vmatpush1.msra.mxu0 0.0
      %465 = vmatprep.subr.mxu0 0.0
      %466 = vmatpush1.msra.mxu0 0.0
      %467 = vmatprep.subr.mxu0 0.0
      %468 = vmatpush1.msra.mxu0 0.0
      %469 = vmatprep.subr.mxu0 0.0
      %470 = vmatpush1.msra.mxu0 0.0
      %471 = vmatprep.subr.mxu0 0.0
      %472 = vmatpush1.msra.mxu0 0.0
      %473 = vmatprep.subr.mxu0 0.0
      %474 = vmatpush1.msra.mxu0 0.0
      %475 = vmatprep.subr.mxu0 0.0
      %476 = vmatpush1.msra.mxu0 0.0
      %477 = vmatprep.subr.mxu0 0.0
      %478 = vmatpush1.msra.mxu0 0.0
      %479 = vmatprep.subr.mxu0 0.0
      %480 = vmatpush1.msra.mxu0 0.0
      %481 = vmatprep.subr.mxu0 0.0
      %482 = vmatpush1.msra.mxu0 0.0
      %483 = vmatprep.subr.mxu0 0.0
      %484 = vmatpush1.msra.mxu0 0.0
      %485 = vmatprep.subr.mxu0 0.0
      %486 = vmatpush1.msra.mxu0 0.0
      %487 = vmatprep.subr.mxu0 0.0
      %488 = vmatpush1.msra.mxu0 0.0
      %489 = vmatprep.subr.mxu0 0.0
      %490 = vmatpush1.msra.mxu0 0.0
      %491 = vmatprep.subr.mxu0 0.0
      %492 = vmatpush1.msra.mxu0 0.0
      %493 = vmatprep.subr.mxu0 0.0
      %494 = vmatpush1.msra.mxu0 0.0
      %495 = vmatprep.subr.mxu0 0.0
      %496 = vmatpush1.msra.mxu0 0.0
      %497 = vmatprep.subr.mxu0 0.0
      %498 = vmatpush1.msra.mxu0 0.0
      %499 = vmatprep.subr.mxu0 0.0
      %500 = vmatpush1.msra.mxu0 0.0
      %501 = vmatprep.subr.mxu0 0.0
      %502 = vmatpush1.msra.mxu0 0.0
      %503 = vmatprep.subr.mxu0 0.0
      %504 = vmatpush1.msra.mxu0 0.0
      %505 = vmatprep.subr.mxu0 0.0
      %506 = vmatpush1.msra.mxu0 0.0
      %507 = vmatprep.subr.mxu0 0.0
      %508 = vmatpush1.msra.mxu0 0.0
      %509 = vmatprep.subr.mxu0 0.0
      %510 = vmatpush1.msra.mxu0 0.0
      %511 = vmatprep.mubr.f32.mxu0 0.0
      %512 = vmatmul.mubr.f32.gmra.mrb[0].mxu0 %v348
      %v513 = vpop.f32.mrb[0].mxu0
      %v514 = vadd.f32 %v344, %v513
      %v515 = vpop.f32.mrb[0].mxu0
      %516 = vmatprep.mubr.f32.mxu0 0.0
      %517 = vmatmul.mubr.f32.gmra.mrb[0].mxu0 %v351
      %v518 = vpop.f32.mrb[0].mxu0
      %v519 = vadd.f32 %v344, %v518
      %v520 = vpop.f32.mrb[0].mxu0
      %521 = vmatprep.mubr.f32.mxu0 0.0
      %522 = vmatmul.mubr.f32.gmra.mrb[0].mxu0 %v354
      %v523 = vpop.f32.mrb[0].mxu0
      %v524 = vadd.f32 %v344, %v523
      %v525 = vpop.f32.mrb[0].mxu0
      %526 = vmatprep.mubr.f32.mxu0 0.0
      %527 = vmatmul.mubr.f32.gmra.mrb[0].mxu0 %v357
      %v528 = vpop.f32.mrb[0].mxu0
      %v529 = vadd.f32 %v344, %v528
      %v530 = vpop.f32.mrb[0].mxu0
      %531 = vmatprep.mubr.f32.mxu0 0.0
      %532 = vmatmul.mubr.f32.gmra.mrb[0].mxu0 %v360
      %v533 = vpop.f32.mrb[0].mxu0
      %v534 = vadd.f32 %v344, %v533
      %v535 = vpop.f32.mrb[0].mxu0
      %536 = vmatprep.mubr.f32.mxu0 0.0
      %537 = vmatmul.mubr.f32.gmra.mrb[0].mxu0 %v363
      %v538 = vpop.f32.mrb[0].mxu0
      %v539 = vadd.f32 %v344, %v538
      %v540 = vpop.f32.mrb[0].mxu0
      %541 = vmatprep.mubr.f32.mxu0 0.0
      %542 = vmatmul.mubr.f32.gmra.mrb[0].mxu0 %v366
      %v543 = vpop.f32.mrb[0].mxu0
      %v544 = vadd.f32 %v344, %v543
      %v545 = vpop.f32.mrb[0].mxu0
      %546 = vmatprep.mubr.f32.mxu0 0.0
      %547 = vmatmul.mubr.f32.gmra.mrb[0].mxu0 %v369
      %v548 = vpop.f32.mrb[0].mxu0
      %v549 = vadd.f32 %v344, %v548
      %v550 = vpop.f32.mrb[0].mxu0
      %551 = vmatprep.mubr.f32.mxu0 0.0
      %552 = vmatmul.mubr.f32.gmra.mrb[0].mxu0 %v372
      %v553 = vpop.f32.mrb[0].mxu0
      %v554 = vadd.f32 %v344, %v553
      %v555 = vpop.f32.mrb[0].mxu0
      %556 = vmatprep.mubr.f32.mxu0 0.0
      %557 = vmatmul.mubr.f32.gmra.mrb[0].mxu0 %v375
      %v558 = vpop.f32.mrb[0].mxu0
      %v559 = vadd.f32 %v344, %v558
      %v560 = vpop.f32.mrb[0].mxu0
      %561 = vmatprep.mubr.f32.mxu0 0.0
      %562 = vmatmul.mubr.f32.gmra.mrb[0].mxu0 %v378
      %v563 = vpop.f32.mrb[0].mxu0
      %v564 = vadd.f32 %v344, %v563
      %v565 = vpop.f32.mrb[0].mxu0
      %566 = vmatprep.mubr.f32.mxu0 0.0
      %567 = vmatmul.mubr.f32.gmra.mrb[0].mxu0 %v381
      %v568 = vpop.f32.mrb[0].mxu0
      %v569 = vadd.f32 %v344, %v568
      %v570 = vpop.f32.mrb[0].mxu0
      %571 = vmatprep.mubr.f32.mxu0 0.0
      %572 = vmatmul.mubr.f32.gmra.mrb[0].mxu0 %v384
      %v573 = vpop.f32.mrb[0].mxu0
      %v574 = vadd.f32 %v344, %v573
      %v575 = vpop.f32.mrb[0].mxu0
      %576 = vmatprep.mubr.f32.mxu0 0.0
      %577 = vmatmul.mubr.f32.gmra.mrb[0].mxu0 %v387
      %v578 = vpop.f32.mrb[0].mxu0
      %v579 = vadd.f32 %v344, %v578
      %v580 = vpop.f32.mrb[0].mxu0
      %581 = vmatprep.mubr.f32.mxu0 0.0
      %582 = vmatmul.mubr.f32.gmra.mrb[0].mxu0 %v390
      %v583 = vpop.f32.mrb[0].mxu0
      %v584 = vadd.f32 %v344, %v583
      %v585 = vpop.f32.mrb[0].mxu0
      %586 = vmatprep.mubr.f32.mxu0 0.0
      %587 = vmatmul.mubr.f32.gmra.mrb[0].mxu0 %v393
      %v588 = vpop.f32.mrb[0].mxu0
      %v589 = vadd.f32 %v344, %v588
      %v590 = vpop.f32.mrb[0].mxu0
      %591 = vmatprep.mubr.f32.mxu0 0.0
      %592 = vmatmul.mubr.f32.gmra.mrb[0].mxu0 %v396
      %v593 = vpop.f32.mrb[0].mxu0
      %v594 = vadd.f32 %v344, %v593
      %v595 = vpop.f32.mrb[0].mxu0
      %596 = vmatprep.mubr.f32.mxu0 0.0
      %597 = vmatmul.mubr.f32.gmra.mrb[0].mxu0 %v399
      %v598 = vpop.f32.mrb[0].mxu0
      %v599 = vadd.f32 %v344, %v598
      %v600 = vpop.f32.mrb[0].mxu0
      %601 = vmatprep.mubr.f32.mxu0 0.0
      %602 = vmatmul.mubr.f32.gmra.mrb[0].mxu0 %v402
      %v603 = vpop.f32.mrb[0].mxu0
      %v604 = vadd.f32 %v344, %v603
      %v605 = vpop.f32.mrb[0].mxu0
      %606 = vmatprep.mubr.f32.mxu0 0.0
      %607 = vmatmul.mubr.f32.gmra.mrb[0].mxu0 %v405
      %v608 = vpop.f32.mrb[0].mxu0
      %v609 = vadd.f32 %v344, %v608
      %v610 = vpop.f32.mrb[0].mxu0
      %611 = vmatprep.mubr.f32.mxu0 0.0
      %612 = vmatmul.mubr.f32.gmra.mrb[0].mxu0 %v408
      %v613 = vpop.f32.mrb[0].mxu0
      %v614 = vadd.f32 %v344, %v613
      %v615 = vpop.f32.mrb[0].mxu0
      %616 = vmatprep.mubr.f32.mxu0 0.0
      %617 = vmatmul.mubr.f32.gmra.mrb[0].mxu0 %v411
      %v618 = vpop.f32.mrb[0].mxu0
      %v619 = vadd.f32 %v344, %v618
      %v620 = vpop.f32.mrb[0].mxu0
      %621 = vmatprep.mubr.f32.mxu0 0.0
      %622 = vmatmul.mubr.f32.gmra.mrb[0].mxu0 %v414
      %v623 = vpop.f32.mrb[0].mxu0
      %v624 = vadd.f32 %v344, %v623
      %v625 = vpop.f32.mrb[0].mxu0
      %626 = vmatprep.mubr.f32.mxu0 0.0
      %627 = vmatmul.mubr.f32.gmra.mrb[0].mxu0 %v417
      %v628 = vpop.f32.mrb[0].mxu0
      %v629 = vadd.f32 %v344, %v628
      %v630 = vpop.f32.mrb[0].mxu0
      %631 = vmatprep.mubr.f32.mxu0 0.0
      %632 = vmatmul.mubr.f32.gmra.mrb[0].mxu0 %v420
      %v633 = vpop.f32.mrb[0].mxu0
      %v634 = vadd.f32 %v344, %v633
      %v635 = vpop.f32.mrb[0].mxu0
      %636 = vmatprep.mubr.f32.mxu0 0.0
      %637 = vmatmul.mubr.f32.gmra.mrb[0].mxu0 %v423
      %v638 = vpop.f32.mrb[0].mxu0
      %v639 = vadd.f32 %v344, %v638
      %v640 = vpop.f32.mrb[0].mxu0
      %641 = vmatprep.mubr.f32.mxu0 0.0
      %642 = vmatmul.mubr.f32.gmra.mrb[0].mxu0 %v426
      %v643 = vpop.f32.mrb[0].mxu0
      %v644 = vadd.f32 %v344, %v643
      %v645 = vpop.f32.mrb[0].mxu0
      %646 = vmatprep.mubr.f32.mxu0 0.0
      %647 = vmatmul.mubr.f32.gmra.mrb[0].mxu0 %v429
      %v648 = vpop.f32.mrb[0].mxu0
      %v649 = vadd.f32 %v344, %v648
      %v650 = vpop.f32.mrb[0].mxu0
      %651 = vmatprep.mubr.f32.mxu0 0.0
      %652 = vmatmul.mubr.f32.gmra.mrb[0].mxu0 %v432
      %v653 = vpop.f32.mrb[0].mxu0
      %v654 = vadd.f32 %v344, %v653
      %v655 = vpop.f32.mrb[0].mxu0
      %656 = vmatprep.mubr.f32.mxu0 0.0
      %657 = vmatmul.mubr.f32.gmra.mrb[0].mxu0 %v435
      %v658 = vpop.f32.mrb[0].mxu0
      %v659 = vadd.f32 %v344, %v658
      %v660 = vpop.f32.mrb[0].mxu0
      %661 = vmatprep.mubr.f32.mxu0 0.0
      %662 = vmatmul.mubr.f32.gmra.mrb[0].mxu0 %v438
      %v663 = vpop.f32.mrb[0].mxu0
      %v664 = vadd.f32 %v344, %v663
      %v665 = vpop.f32.mrb[0].mxu0
      %666 = vmatprep.mubr.f32.mxu0 0.0
      %667 = vmatmul.mubr.f32.gmra.mrb[0].mxu0 %v441
      %v668 = vpop.f32.mrb[0].mxu0
      %v669 = vadd.f32 %v344, %v668
      %v670 = vpop.f32.mrb[0].mxu0
      %671 = vdwg.mxu0
      %v672 = vxor.u32 %v514, 2147483648
      %v673 = vxor.u32 %v519, 2147483648
      %v674 = vxor.u32 %v524, 2147483648
      %v675 = vxor.u32 %v529, 2147483648
      %v676 = vxor.u32 %v534, 2147483648
      %v677 = vxor.u32 %v539, 2147483648
      %v678 = vxor.u32 %v544, 2147483648
      %v679 = vxor.u32 %v549, 2147483648
      %v680 = vxor.u32 %v554, 2147483648
      %v681 = vxor.u32 %v559, 2147483648
      %v682 = vxor.u32 %v564, 2147483648
      %v683 = vxor.u32 %v569, 2147483648
      %v684 = vxor.u32 %v574, 2147483648
      %v685 = vxor.u32 %v579, 2147483648
      %v686 = vxor.u32 %v584, 2147483648
      %v687 = vxor.u32 %v589, 2147483648
      %v688 = vxor.u32 %v594, 2147483648
      %v689 = vxor.u32 %v599, 2147483648
      %v690 = vxor.u32 %v604, 2147483648
      %v691 = vxor.u32 %v609, 2147483648
      %v692 = vxor.u32 %v614, 2147483648
      %v693 = vxor.u32 %v619, 2147483648
      %v694 = vxor.u32 %v624, 2147483648
      %v695 = vxor.u32 %v629, 2147483648
      %v696 = vxor.u32 %v634, 2147483648
      %v697 = vxor.u32 %v639, 2147483648
      %v698 = vxor.u32 %v644, 2147483648
      %v699 = vxor.u32 %v649, 2147483648
      %v700 = vxor.u32 %v654, 2147483648
      %v701 = vxor.u32 %v659, 2147483648
      %v702 = vxor.u32 %v664, 2147483648
      %v703 = vxor.u32 %v669, 2147483648
      %v704 = vmul.f32 %v672, 1.442695
      %v705 = vpow.pop %v704
      %v706 = vmul.f32 %v673, 1.442695
      %v707 = vpow.pop %v706
      %v708 = vmul.f32 %v674, 1.442695
      %v709 = vpow.pop %v708
      %v710 = vmul.f32 %v675, 1.442695
      %v711 = vpow.pop %v710
      %v712 = vmul.f32 %v676, 1.442695
      %v713 = vpow.pop %v712
      %v714 = vmul.f32 %v677, 1.442695
      %v715 = vpow.pop %v714
      %v716 = vmul.f32 %v678, 1.442695
      %v717 = vpow.pop %v716
      %v718 = vmul.f32 %v679, 1.442695
      %v719 = vpow.pop %v718
      %v720 = vmul.f32 %v680, 1.442695
      %v721 = vpow.pop %v720
      %v722 = vmul.f32 %v681, 1.442695
      %v723 = vpow.pop %v722
      %v724 = vmul.f32 %v682, 1.442695
      %v725 = vpow.pop %v724
      %v726 = vmul.f32 %v683, 1.442695
      %v727 = vpow.pop %v726
      %v728 = vmul.f32 %v684, 1.442695
      %v729 = vpow.pop %v728
      %v730 = vmul.f32 %v685, 1.442695
      %v731 = vpow.pop %v730
      %v732 = vmul.f32 %v686, 1.442695
      %v733 = vpow.pop %v732
      %v734 = vmul.f32 %v687, 1.442695
      %v735 = vpow.pop %v734
      %v736 = vmul.f32 %v688, 1.442695
      %v737 = vpow.pop %v736
      %v738 = vmul.f32 %v689, 1.442695
      %v739 = vpow.pop %v738
      %v740 = vmul.f32 %v690, 1.442695
      %v741 = vpow.pop %v740
      %v742 = vmul.f32 %v691, 1.442695
      %v743 = vpow.pop %v742
      %v744 = vmul.f32 %v692, 1.442695
      %v745 = vpow.pop %v744
      %v746 = vmul.f32 %v693, 1.442695
      %v747 = vpow.pop %v746
      %v748 = vmul.f32 %v694, 1.442695
      %v749 = vpow.pop %v748
      %v750 = vmul.f32 %v695, 1.442695
      %v751 = vpow.pop %v750
      %v752 = vmul.f32 %v696, 1.442695
      %v753 = vpow.pop %v752
      %v754 = vmul.f32 %v697, 1.442695
      %v755 = vpow.pop %v754
      %v756 = vmul.f32 %v698, 1.442695
      %v757 = vpow.pop %v756
      %v758 = vmul.f32 %v699, 1.442695
      %v759 = vpow.pop %v758
      %v760 = vmul.f32 %v700, 1.442695
      %v761 = vpow.pop %v760
      %v762 = vmul.f32 %v701, 1.442695
      %v763 = vpow.pop %v762
      %v764 = vmul.f32 %v702, 1.442695
      %v765 = vpow.pop %v764
      %v766 = vmul.f32 %v703, 1.442695
      %v767 = vpow.pop %v766
      %v768 = vadd.f32 %v705, 1.0
      %v769 = vadd.f32 %v707, 1.0
      %v770 = vadd.f32 %v709, 1.0
      %v771 = vadd.f32 %v711, 1.0
      %v772 = vadd.f32 %v713, 1.0
      %v773 = vadd.f32 %v715, 1.0
      %v774 = vadd.f32 %v717, 1.0
      %v775 = vadd.f32 %v719, 1.0
      %v776 = vadd.f32 %v721, 1.0
      %v777 = vadd.f32 %v723, 1.0
      %v778 = vadd.f32 %v725, 1.0
      %v779 = vadd.f32 %v727, 1.0
      %v780 = vadd.f32 %v729, 1.0
      %v781 = vadd.f32 %v731, 1.0
      %v782 = vadd.f32 %v733, 1.0
      %v783 = vadd.f32 %v735, 1.0
      %v784 = vadd.f32 %v737, 1.0
      %v785 = vadd.f32 %v739, 1.0
      %v786 = vadd.f32 %v741, 1.0
      %v787 = vadd.f32 %v743, 1.0
      %v788 = vadd.f32 %v745, 1.0
      %v789 = vadd.f32 %v747, 1.0
      %v790 = vadd.f32 %v749, 1.0
      %v791 = vadd.f32 %v751, 1.0
      %v792 = vadd.f32 %v753, 1.0
      %v793 = vadd.f32 %v755, 1.0
      %v794 = vadd.f32 %v757, 1.0
      %v795 = vadd.f32 %v759, 1.0
      %v796 = vadd.f32 %v761, 1.0
      %v797 = vadd.f32 %v763, 1.0
      %v798 = vadd.f32 %v765, 1.0
      %v799 = vadd.f32 %v767, 1.0
      %v800 = vrcp.pop %v768
      %v801 = vmul.f32 1.0, %v800
      %v802 = vrcp.pop %v769
      %v803 = vmul.f32 1.0, %v802
      %v804 = vrcp.pop %v770
      %v805 = vmul.f32 1.0, %v804
      %v806 = vrcp.pop %v771
      %v807 = vmul.f32 1.0, %v806
      %v808 = vrcp.pop %v772
      %v809 = vmul.f32 1.0, %v808
      %v810 = vrcp.pop %v773
      %v811 = vmul.f32 1.0, %v810
      %v812 = vrcp.pop %v774
      %v813 = vmul.f32 1.0, %v812
      %v814 = vrcp.pop %v775
      %v815 = vmul.f32 1.0, %v814
      %v816 = vrcp.pop %v776
      %v817 = vmul.f32 1.0, %v816
      %v818 = vrcp.pop %v777
      %v819 = vmul.f32 1.0, %v818
      %v820 = vrcp.pop %v778
      %v821 = vmul.f32 1.0, %v820
      %v822 = vrcp.pop %v779
      %v823 = vmul.f32 1.0, %v822
      %v824 = vrcp.pop %v780
      %v825 = vmul.f32 1.0, %v824
      %v826 = vrcp.pop %v781
      %v827 = vmul.f32 1.0, %v826
      %v828 = vrcp.pop %v782
      %v829 = vmul.f32 1.0, %v828
      %v830 = vrcp.pop %v783
      %v831 = vmul.f32 1.0, %v830
      %v832 = vrcp.pop %v784
      %v833 = vmul.f32 1.0, %v832
      %v834 = vrcp.pop %v785
      %v835 = vmul.f32 1.0, %v834
      %v836 = vrcp.pop %v786
      %v837 = vmul.f32 1.0, %v836
      %v838 = vrcp.pop %v787
      %v839 = vmul.f32 1.0, %v838
      %v840 = vrcp.pop %v788
      %v841 = vmul.f32 1.0, %v840
      %v842 = vrcp.pop %v789
      %v843 = vmul.f32 1.0, %v842
      %v844 = vrcp.pop %v790
      %v845 = vmul.f32 1.0, %v844
      %v846 = vrcp.pop %v791
      %v847 = vmul.f32 1.0, %v846
      %v848 = vrcp.pop %v792
      %v849 = vmul.f32 1.0, %v848
      %v850 = vrcp.pop %v793
      %v851 = vmul.f32 1.0, %v850
      %v852 = vrcp.pop %v794
      %v853 = vmul.f32 1.0, %v852
      %v854 = vrcp.pop %v795
      %v855 = vmul.f32 1.0, %v854
      %v856 = vrcp.pop %v796
      %v857 = vmul.f32 1.0, %v856
      %v858 = vrcp.pop %v797
      %v859 = vmul.f32 1.0, %v858
      %v860 = vrcp.pop %v798
      %v861 = vmul.f32 1.0, %v860
      %v862 = vrcp.pop %v799
      %v863 = vmul.f32 1.0, %v862
      %v864 = vmul.f32 %v514, %v801
      %v865 = vmul.f32 %v519, %v803
      %v866 = vmul.f32 %v524, %v805
      %v867 = vmul.f32 %v529, %v807
      %v868 = vmul.f32 %v534, %v809
      %v869 = vmul.f32 %v539, %v811
      %v870 = vmul.f32 %v544, %v813
      %v871 = vmul.f32 %v549, %v815
      %v872 = vmul.f32 %v554, %v817
      %v873 = vmul.f32 %v559, %v819
      %v874 = vmul.f32 %v564, %v821
      %v875 = vmul.f32 %v569, %v823
      %v876 = vmul.f32 %v574, %v825
      %v877 = vmul.f32 %v579, %v827
      %v878 = vmul.f32 %v584, %v829
      %v879 = vmul.f32 %v589, %v831
      %v880 = vmul.f32 %v594, %v833
      %v881 = vmul.f32 %v599, %v835
      %v882 = vmul.f32 %v604, %v837
      %v883 = vmul.f32 %v609, %v839
      %v884 = vmul.f32 %v614, %v841
      %v885 = vmul.f32 %v619, %v843
      %v886 = vmul.f32 %v624, %v845
      %v887 = vmul.f32 %v629, %v847
      %v888 = vmul.f32 %v634, %v849
      %v889 = vmul.f32 %v639, %v851
      %v890 = vmul.f32 %v644, %v853
      %v891 = vmul.f32 %v649, %v855
      %v892 = vmul.f32 %v654, %v857
      %v893 = vmul.f32 %v659, %v859
      %v894 = vmul.f32 %v664, %v861
      %v895 = vmul.f32 %v669, %v863
      %vm896 = vcmask 15360
      %897 = vst.msk [vmem:[#allocation2] sm:$0xff] %vm896, -inf
      %898 = vst.msk [vmem:[#allocation2 + $0x8] sm:$0xff] %vm896, -inf
      %899 = vst.msk [vmem:[#allocation2 + $0x10] sm:$0xff] %vm896, -inf
      %900 = vst.msk [vmem:[#allocation2 + $0x18] sm:$0xff] %vm896, -inf
      %901 = vst.msk [vmem:[#allocation2 + $0x120] sm:$0xff] %vm896, -inf
      %902 = vst.msk [vmem:[#allocation2 + $0x128] sm:$0xff] %vm896, -inf
      %903 = vst.msk [vmem:[#allocation2 + $0x130] sm:$0xff] %vm896, -inf
      %904 = vst.msk [vmem:[#allocation2 + $0x138] sm:$0xff] %vm896, -inf
      %v905 = vlaneseq
      %v906 = vshrl.u32 %v905, 7
      %v907 = vadd.s32 %v906, 8
      %v908 = vadd.s32 %v906, 16
      %v909 = vadd.s32 %v906, 24
      %v910 = vadd.s32 %v906, 32
      %v911 = vadd.s32 %v906, 40
      %v912 = vadd.s32 %v906, 48
      %v913 = vadd.s32 %v906, 56
      %v914 = vadd.s32 %v906, 64
      %v915 = vadd.s32 %v906, 72
      %v916 = vadd.s32 %v906, 80
      %v917 = vadd.s32 %v906, 88
      %v918 = vadd.s32 %v906, 96
      %v919 = vadd.s32 %v906, 104
      %v920 = vadd.s32 %v906, 112
      %v921 = vadd.s32 %v906, 120
      %v922 = vadd.s32 %v906, 128
      %v923 = vadd.s32 %v906, 136
      %v924 = vadd.s32 %v906, 144
      %v925 = vadd.s32 %v906, 152
      %v926 = vadd.s32 %v906, 160
      %v927 = vadd.s32 %v906, 168
      %v928 = vadd.s32 %v906, 176
      %v929 = vadd.s32 %v906, 184
      %v930 = vadd.s32 %v906, 192
      %v931 = vadd.s32 %v906, 200
      %v932 = vadd.s32 %v906, 208
      %v933 = vadd.s32 %v906, 216
      %v934 = vadd.s32 %v906, 224
      %v935 = vadd.s32 %v906, 232
      %v936 = vadd.s32 %v906, 240
      %v937 = vadd.s32 %v906, 248
      %vm938 = vcmp.lt.s32.totalorder %v906, 0
      %v939 = vsub.s32 0, %v906
      %v940 = vsel %vm938, %v939, %v906
      %v941 = vshrl.u32 %v940, 4
      %v942 = vand.u32 %v940, 15
      %v943 = vsub.s32 0, %v942
      %v944 = vsel %vm938, %v943, %v942
      %vm945 = vcmp.lt.s32.totalorder %v907, 0
      %v946 = vsub.s32 0, %v907
      %v947 = vsel %vm945, %v946, %v907
      %v948 = vshrl.u32 %v947, 4
      %v949 = vand.u32 %v947, 15
      %v950 = vsub.s32 0, %v949
      %v951 = vsel %vm945, %v950, %v949
      %vm952 = vcmp.lt.s32.totalorder %v908, 0
      %v953 = vsub.s32 0, %v908
      %v954 = vsel %vm952, %v953, %v908
      %v955 = vshrl.u32 %v954, 4
      %v956 = vand.u32 %v954, 15
      %v957 = vsub.s32 0, %v956
      %v958 = vsel %vm952, %v957, %v956
      %vm959 = vcmp.lt.s32.totalorder %v909, 0
      %v960 = vsub.s32 0, %v909
      %v961 = vsel %vm959, %v960, %v909
      %v962 = vshrl.u32 %v961, 4
      %v963 = vand.u32 %v961, 15
      %v964 = vsub.s32 0, %v963
      %v965 = vsel %vm959, %v964, %v963
      %vm966 = vcmp.lt.s32.totalorder %v910, 0
      %v967 = vsub.s32 0, %v910
      %v968 = vsel %vm966, %v967, %v910
      %v969 = vshrl.u32 %v968, 4
      %v970 = vand.u32 %v968, 15
      %v971 = vsub.s32 0, %v970
      %v972 = vsel %vm966, %v971, %v970
      %vm973 = vcmp.lt.s32.totalorder %v911, 0
      %v974 = vsub.s32 0, %v911
      %v975 = vsel %vm973, %v974, %v911
      %v976 = vshrl.u32 %v975, 4
      %v977 = vand.u32 %v975, 15
      %v978 = vsub.s32 0, %v977
      %v979 = vsel %vm973, %v978, %v977
      %vm980 = vcmp.lt.s32.totalorder %v912, 0
      %v981 = vsub.s32 0, %v912
      %v982 = vsel %vm980, %v981, %v912
      %v983 = vshrl.u32 %v982, 4
      %v984 = vand.u32 %v982, 15
      %v985 = vsub.s32 0, %v984
      %v986 = vsel %vm980, %v985, %v984
      %vm987 = vcmp.lt.s32.totalorder %v913, 0
      %v988 = vsub.s32 0, %v913
      %v989 = vsel %vm987, %v988, %v913
      %v990 = vshrl.u32 %v989, 4
      %v991 = vand.u32 %v989, 15
      %v992 = vsub.s32 0, %v991
      %v993 = vsel %vm987, %v992, %v991
      %vm994 = vcmp.lt.s32.totalorder %v914, 0
      %v995 = vsub.s32 0, %v914
      %v996 = vsel %vm994, %v995, %v914
      %v997 = vshrl.u32 %v996, 4
      %v998 = vand.u32 %v996, 15
      %v999 = vsub.s32 0, %v998
      %v1000 = vsel %vm994, %v999, %v998
      %vm1001 = vcmp.lt.s32.totalorder %v915, 0
      %v1002 = vsub.s32 0, %v915
      %v1003 = vsel %vm1001, %v1002, %v915
      %v1004 = vshrl.u32 %v1003, 4
      %v1005 = vand.u32 %v1003, 15
      %v1006 = vsub.s32 0, %v1005
      %v1007 = vsel %vm1001, %v1006, %v1005
      %vm1008 = vcmp.lt.s32.totalorder %v916, 0
      %v1009 = vsub.s32 0, %v916
      %v1010 = vsel %vm1008, %v1009, %v916
      %v1011 = vshrl.u32 %v1010, 4
      %v1012 = vand.u32 %v1010, 15
      %v1013 = vsub.s32 0, %v1012
      %v1014 = vsel %vm1008, %v1013, %v1012
      %vm1015 = vcmp.lt.s32.totalorder %v917, 0
      %v1016 = vsub.s32 0, %v917
      %v1017 = vsel %vm1015, %v1016, %v917
      %v1018 = vshrl.u32 %v1017, 4
      %v1019 = vand.u32 %v1017, 15
      %v1020 = vsub.s32 0, %v1019
      %v1021 = vsel %vm1015, %v1020, %v1019
      %vm1022 = vcmp.lt.s32.totalorder %v918, 0
      %v1023 = vsub.s32 0, %v918
      %v1024 = vsel %vm1022, %v1023, %v918
      %v1025 = vshrl.u32 %v1024, 4
      %v1026 = vand.u32 %v1024, 15
      %v1027 = vsub.s32 0, %v1026
      %v1028 = vsel %vm1022, %v1027, %v1026
      %vm1029 = vcmp.lt.s32.totalorder %v919, 0
      %v1030 = vsub.s32 0, %v919
      %v1031 = vsel %vm1029, %v1030, %v919
      %v1032 = vshrl.u32 %v1031, 4
      %v1033 = vand.u32 %v1031, 15
      %v1034 = vsub.s32 0, %v1033
      %v1035 = vsel %vm1029, %v1034, %v1033
      %vm1036 = vcmp.lt.s32.totalorder %v920, 0
      %v1037 = vsub.s32 0, %v920
      %v1038 = vsel %vm1036, %v1037, %v920
      %v1039 = vshrl.u32 %v1038, 4
      %v1040 = vand.u32 %v1038, 15
      %v1041 = vsub.s32 0, %v1040
      %v1042 = vsel %vm1036, %v1041, %v1040
      %vm1043 = vcmp.lt.s32.totalorder %v921, 0
      %v1044 = vsub.s32 0, %v921
      %v1045 = vsel %vm1043, %v1044, %v921
      %v1046 = vshrl.u32 %v1045, 4
      %v1047 = vand.u32 %v1045, 15
      %v1048 = vsub.s32 0, %v1047
      %v1049 = vsel %vm1043, %v1048, %v1047
      %vm1050 = vcmp.lt.s32.totalorder %v922, 0
      %v1051 = vsub.s32 0, %v922
      %v1052 = vsel %vm1050, %v1051, %v922
      %v1053 = vshrl.u32 %v1052, 4
      %v1054 = vand.u32 %v1052, 15
      %v1055 = vsub.s32 0, %v1054
      %v1056 = vsel %vm1050, %v1055, %v1054
      %vm1057 = vcmp.lt.s32.totalorder %v923, 0
      %v1058 = vsub.s32 0, %v923
      %v1059 = vsel %vm1057, %v1058, %v923
      %v1060 = vshrl.u32 %v1059, 4
      %v1061 = vand.u32 %v1059, 15
      %v1062 = vsub.s32 0, %v1061
      %v1063 = vsel %vm1057, %v1062, %v1061
      %vm1064 = vcmp.lt.s32.totalorder %v924, 0
      %v1065 = vsub.s32 0, %v924
      %v1066 = vsel %vm1064, %v1065, %v924
      %v1067 = vshrl.u32 %v1066, 4
      %v1068 = vand.u32 %v1066, 15
      %v1069 = vsub.s32 0, %v1068
      %v1070 = vsel %vm1064, %v1069, %v1068
      %vm1071 = vcmp.lt.s32.totalorder %v925, 0
      %v1072 = vsub.s32 0, %v925
      %v1073 = vsel %vm1071, %v1072, %v925
      %v1074 = vshrl.u32 %v1073, 4
      %v1075 = vand.u32 %v1073, 15
      %v1076 = vsub.s32 0, %v1075
      %v1077 = vsel %vm1071, %v1076, %v1075
      %vm1078 = vcmp.lt.s32.totalorder %v926, 0
      %v1079 = vsub.s32 0, %v926
      %v1080 = vsel %vm1078, %v1079, %v926
      %v1081 = vshrl.u32 %v1080, 4
      %v1082 = vand.u32 %v1080, 15
      %v1083 = vsub.s32 0, %v1082
      %v1084 = vsel %vm1078, %v1083, %v1082
      %vm1085 = vcmp.lt.s32.totalorder %v927, 0
      %v1086 = vsub.s32 0, %v927
      %v1087 = vsel %vm1085, %v1086, %v927
      %v1088 = vshrl.u32 %v1087, 4
      %v1089 = vand.u32 %v1087, 15
      %v1090 = vsub.s32 0, %v1089
      %v1091 = vsel %vm1085, %v1090, %v1089
      %vm1092 = vcmp.lt.s32.totalorder %v928, 0
      %v1093 = vsub.s32 0, %v928
      %v1094 = vsel %vm1092, %v1093, %v928
      %v1095 = vshrl.u32 %v1094, 4
      %v1096 = vand.u32 %v1094, 15
      %v1097 = vsub.s32 0, %v1096
      %v1098 = vsel %vm1092, %v1097, %v1096
      %vm1099 = vcmp.lt.s32.totalorder %v929, 0
      %v1100 = vsub.s32 0, %v929
      %v1101 = vsel %vm1099, %v1100, %v929
      %v1102 = vshrl.u32 %v1101, 4
      %v1103 = vand.u32 %v1101, 15
      %v1104 = vsub.s32 0, %v1103
      %v1105 = vsel %vm1099, %v1104, %v1103
      %vm1106 = vcmp.lt.s32.totalorder %v930, 0
      %v1107 = vsub.s32 0, %v930
      %v1108 = vsel %vm1106, %v1107, %v930
      %v1109 = vshrl.u32 %v1108, 4
      %v1110 = vand.u32 %v1108, 15
      %v1111 = vsub.s32 0, %v1110
      %v1112 = vsel %vm1106, %v1111, %v1110
      %vm1113 = vcmp.lt.s32.totalorder %v931, 0
      %v1114 = vsub.s32 0, %v931
      %v1115 = vsel %vm1113, %v1114, %v931
      %v1116 = vshrl.u32 %v1115, 4
      %v1117 = vand.u32 %v1115, 15
      %v1118 = vsub.s32 0, %v1117
      %v1119 = vsel %vm1113, %v1118, %v1117
      %vm1120 = vcmp.lt.s32.totalorder %v932, 0
      %v1121 = vsub.s32 0, %v932
      %v1122 = vsel %vm1120, %v1121, %v932
      %v1123 = vshrl.u32 %v1122, 4
      %v1124 = vand.u32 %v1122, 15
      %v1125 = vsub.s32 0, %v1124
      %v1126 = vsel %vm1120, %v1125, %v1124
      %vm1127 = vcmp.lt.s32.totalorder %v933, 0
      %v1128 = vsub.s32 0, %v933
      %v1129 = vsel %vm1127, %v1128, %v933
      %v1130 = vshrl.u32 %v1129, 4
      %v1131 = vand.u32 %v1129, 15
      %v1132 = vsub.s32 0, %v1131
      %v1133 = vsel %vm1127, %v1132, %v1131
      %vm1134 = vcmp.lt.s32.totalorder %v934, 0
      %v1135 = vsub.s32 0, %v934
      %v1136 = vsel %vm1134, %v1135, %v934
      %v1137 = vshrl.u32 %v1136, 4
      %v1138 = vand.u32 %v1136, 15
      %v1139 = vsub.s32 0, %v1138
      %v1140 = vsel %vm1134, %v1139, %v1138
      %vm1141 = vcmp.lt.s32.totalorder %v935, 0
      %v1142 = vsub.s32 0, %v935
      %v1143 = vsel %vm1141, %v1142, %v935
      %v1144 = vshrl.u32 %v1143, 4
      %v1145 = vand.u32 %v1143, 15
      %v1146 = vsub.s32 0, %v1145
      %v1147 = vsel %vm1141, %v1146, %v1145
      %vm1148 = vcmp.lt.s32.totalorder %v936, 0
      %v1149 = vsub.s32 0, %v936
      %v1150 = vsel %vm1148, %v1149, %v936
      %v1151 = vshrl.u32 %v1150, 4
      %v1152 = vand.u32 %v1150, 15
      %v1153 = vsub.s32 0, %v1152
      %v1154 = vsel %vm1148, %v1153, %v1152
      %vm1155 = vcmp.lt.s32.totalorder %v937, 0
      %v1156 = vsub.s32 0, %v937
      %v1157 = vsel %vm1155, %v1156, %v937
      %v1158 = vshrl.u32 %v1157, 4
      %v1159 = vand.u32 %v1157, 15
      %v1160 = vsub.s32 0, %v1159
      %v1161 = vsel %vm1155, %v1160, %v1159
      %vm1162 = vcmp.ne.s32.totalorder %v944, 0
      %vm1163 = vcmp.ne.s32.totalorder %v951, 0
      %vm1164 = vcmp.ne.s32.totalorder %v958, 0
      %vm1165 = vcmp.ne.s32.totalorder %v965, 0
      %vm1166 = vcmp.ne.s32.totalorder %v972, 0
      %vm1167 = vcmp.ne.s32.totalorder %v979, 0
      %vm1168 = vcmp.ne.s32.totalorder %v986, 0
      %vm1169 = vcmp.ne.s32.totalorder %v993, 0
      %vm1170 = vcmp.ne.s32.totalorder %v1000, 0
      %vm1171 = vcmp.ne.s32.totalorder %v1007, 0
      %vm1172 = vcmp.ne.s32.totalorder %v1014, 0
      %vm1173 = vcmp.ne.s32.totalorder %v1021, 0
      %vm1174 = vcmp.ne.s32.totalorder %v1028, 0
      %vm1175 = vcmp.ne.s32.totalorder %v1035, 0
      %vm1176 = vcmp.ne.s32.totalorder %v1042, 0
      %vm1177 = vcmp.ne.s32.totalorder %v1049, 0
      %vm1178 = vcmp.ne.s32.totalorder %v1056, 0
      %vm1179 = vcmp.ne.s32.totalorder %v1063, 0
      %vm1180 = vcmp.ne.s32.totalorder %v1070, 0
      %vm1181 = vcmp.ne.s32.totalorder %v1077, 0
      %vm1182 = vcmp.ne.s32.totalorder %v1084, 0
      %vm1183 = vcmp.ne.s32.totalorder %v1091, 0
      %vm1184 = vcmp.ne.s32.totalorder %v1098, 0
      %vm1185 = vcmp.ne.s32.totalorder %v1105, 0
      %vm1186 = vcmp.ne.s32.totalorder %v1112, 0
      %vm1187 = vcmp.ne.s32.totalorder %v1119, 0
      %vm1188 = vcmp.ne.s32.totalorder %v1126, 0
      %vm1189 = vcmp.ne.s32.totalorder %v1133, 0
      %vm1190 = vcmp.ne.s32.totalorder %v1140, 0
      %vm1191 = vcmp.ne.s32.totalorder %v1147, 0
      %vm1192 = vcmp.ne.s32.totalorder %v1154, 0
      %vm1193 = vcmp.ne.s32.totalorder %v1161, 0
      %vm1194 = vcmp.lt.s32.totalorder %v944, 0
      %vm1195 = vcmp.lt.s32.totalorder %v951, 0
      %vm1196 = vcmp.lt.s32.totalorder %v958, 0
      %vm1197 = vcmp.lt.s32.totalorder %v965, 0
      %vm1198 = vcmp.lt.s32.totalorder %v972, 0
      %vm1199 = vcmp.lt.s32.totalorder %v979, 0
      %vm1200 = vcmp.lt.s32.totalorder %v986, 0
      %vm1201 = vcmp.lt.s32.totalorder %v993, 0
      %vm1202 = vcmp.lt.s32.totalorder %v1000, 0
      %vm1203 = vcmp.lt.s32.totalorder %v1007, 0
      %vm1204 = vcmp.lt.s32.totalorder %v1014, 0
      %vm1205 = vcmp.lt.s32.totalorder %v1021, 0
      %vm1206 = vcmp.lt.s32.totalorder %v1028, 0
      %vm1207 = vcmp.lt.s32.totalorder %v1035, 0
      %vm1208 = vcmp.lt.s32.totalorder %v1042, 0
      %vm1209 = vcmp.lt.s32.totalorder %v1049, 0
      %vm1210 = vcmp.lt.s32.totalorder %v1056, 0
      %vm1211 = vcmp.lt.s32.totalorder %v1063, 0
      %vm1212 = vcmp.lt.s32.totalorder %v1070, 0
      %vm1213 = vcmp.lt.s32.totalorder %v1077, 0
      %vm1214 = vcmp.lt.s32.totalorder %v1084, 0
      %vm1215 = vcmp.lt.s32.totalorder %v1091, 0
      %vm1216 = vcmp.lt.s32.totalorder %v1098, 0
      %vm1217 = vcmp.lt.s32.totalorder %v1105, 0
      %vm1218 = vcmp.lt.s32.totalorder %v1112, 0
      %vm1219 = vcmp.lt.s32.totalorder %v1119, 0
      %vm1220 = vcmp.lt.s32.totalorder %v1126, 0
      %vm1221 = vcmp.lt.s32.totalorder %v1133, 0
      %vm1222 = vcmp.lt.s32.totalorder %v1140, 0
      %vm1223 = vcmp.lt.s32.totalorder %v1147, 0
      %vm1224 = vcmp.lt.s32.totalorder %v1154, 0
      %vm1225 = vcmp.lt.s32.totalorder %v1161, 0
      %vm1226 = vmand %vm1194, %vm1162
      %vm1227 = vmand %vm1195, %vm1163
      %vm1228 = vmand %vm1196, %vm1164
      %vm1229 = vmand %vm1197, %vm1165
      %vm1230 = vmand %vm1198, %vm1166
      %vm1231 = vmand %vm1199, %vm1167
      %vm1232 = vmand %vm1200, %vm1168
      %vm1233 = vmand %vm1201, %vm1169
      %vm1234 = vmand %vm1202, %vm1170
      %vm1235 = vmand %vm1203, %vm1171
      %vm1236 = vmand %vm1204, %vm1172
      %vm1237 = vmand %vm1205, %vm1173
      %vm1238 = vmand %vm1206, %vm1174
      %vm1239 = vmand %vm1207, %vm1175
      %vm1240 = vmand %vm1208, %vm1176
      %vm1241 = vmand %vm1209, %vm1177
      %vm1242 = vmand %vm1210, %vm1178
      %vm1243 = vmand %vm1211, %vm1179
      %vm1244 = vmand %vm1212, %vm1180
      %vm1245 = vmand %vm1213, %vm1181
      %vm1246 = vmand %vm1214, %vm1182
      %vm1247 = vmand %vm1215, %vm1183
      %vm1248 = vmand %vm1216, %vm1184
      %vm1249 = vmand %vm1217, %vm1185
      %vm1250 = vmand %vm1218, %vm1186
      %vm1251 = vmand %vm1219, %vm1187
      %vm1252 = vmand %vm1220, %vm1188
      %vm1253 = vmand %vm1221, %vm1189
      %vm1254 = vmand %vm1222, %vm1190
      %vm1255 = vmand %vm1223, %vm1191
      %vm1256 = vmand %vm1224, %vm1192
      %vm1257 = vmand %vm1225, %vm1193
      %v1258 = vadd.s32 %v944, 16
      %v1259 = vadd.s32 %v951, 16
      %v1260 = vadd.s32 %v958, 16
      %v1261 = vadd.s32 %v965, 16
      %v1262 = vadd.s32 %v972, 16
      %v1263 = vadd.s32 %v979, 16
      %v1264 = vadd.s32 %v986, 16
      %v1265 = vadd.s32 %v993, 16
      %v1266 = vadd.s32 %v1000, 16
      %v1267 = vadd.s32 %v1007, 16
      %v1268 = vadd.s32 %v1014, 16
      %v1269 = vadd.s32 %v1021, 16
      %v1270 = vadd.s32 %v1028, 16
      %v1271 = vadd.s32 %v1035, 16
      %v1272 = vadd.s32 %v1042, 16
      %v1273 = vadd.s32 %v1049, 16
      %v1274 = vadd.s32 %v1056, 16
      %v1275 = vadd.s32 %v1063, 16
      %v1276 = vadd.s32 %v1070, 16
      %v1277 = vadd.s32 %v1077, 16
      %v1278 = vadd.s32 %v1084, 16
      %v1279 = vadd.s32 %v1091, 16
      %v1280 = vadd.s32 %v1098, 16
      %v1281 = vadd.s32 %v1105, 16
      %v1282 = vadd.s32 %v1112, 16
      %v1283 = vadd.s32 %v1119, 16
      %v1284 = vadd.s32 %v1126, 16
      %v1285 = vadd.s32 %v1133, 16
      %v1286 = vadd.s32 %v1140, 16
      %v1287 = vadd.s32 %v1147, 16
      %v1288 = vadd.s32 %v1154, 16
      %v1289 = vadd.s32 %v1161, 16
      %v1290 = vsel %vm1226, %v1258, %v944
      %v1291 = vsel %vm1227, %v1259, %v951
      %v1292 = vsel %vm1228, %v1260, %v958
      %v1293 = vsel %vm1229, %v1261, %v965
      %v1294 = vsel %vm1230, %v1262, %v972
      %v1295 = vsel %vm1231, %v1263, %v979
      %v1296 = vsel %vm1232, %v1264, %v986
      %v1297 = vsel %vm1233, %v1265, %v993
      %v1298 = vsel %vm1234, %v1266, %v1000
      %v1299 = vsel %vm1235, %v1267, %v1007
      %v1300 = vsel %vm1236, %v1268, %v1014
      %v1301 = vsel %vm1237, %v1269, %v1021
      %v1302 = vsel %vm1238, %v1270, %v1028
      %v1303 = vsel %vm1239, %v1271, %v1035
      %v1304 = vsel %vm1240, %v1272, %v1042
      %v1305 = vsel %vm1241, %v1273, %v1049
      %v1306 = vsel %vm1242, %v1274, %v1056
      %v1307 = vsel %vm1243, %v1275, %v1063
      %v1308 = vsel %vm1244, %v1276, %v1070
      %v1309 = vsel %vm1245, %v1277, %v1077
      %v1310 = vsel %vm1246, %v1278, %v1084
      %v1311 = vsel %vm1247, %v1279, %v1091
      %v1312 = vsel %vm1248, %v1280, %v1098
      %v1313 = vsel %vm1249, %v1281, %v1105
      %v1314 = vsel %vm1250, %v1282, %v1112
      %v1315 = vsel %vm1251, %v1283, %v1119
      %v1316 = vsel %vm1252, %v1284, %v1126
      %v1317 = vsel %vm1253, %v1285, %v1133
      %v1318 = vsel %vm1254, %v1286, %v1140
      %v1319 = vsel %vm1255, %v1287, %v1147
      %v1320 = vsel %vm1256, %v1288, %v1154
      %v1321 = vsel %vm1257, %v1289, %v1161
      %v1322 = vadd.s32 %v1290, 4294967294
      %v1323 = vadd.s32 %v1291, 4294967294
      %v1324 = vadd.s32 %v1292, 4294967294
      %v1325 = vadd.s32 %v1293, 4294967294
      %v1326 = vadd.s32 %v1294, 4294967294
      %v1327 = vadd.s32 %v1295, 4294967294
      %v1328 = vadd.s32 %v1296, 4294967294
      %v1329 = vadd.s32 %v1297, 4294967294
      %v1330 = vadd.s32 %v1298, 4294967294
      %v1331 = vadd.s32 %v1299, 4294967294
      %v1332 = vadd.s32 %v1300, 4294967294
      %v1333 = vadd.s32 %v1301, 4294967294
      %v1334 = vadd.s32 %v1302, 4294967294
      %v1335 = vadd.s32 %v1303, 4294967294
      %v1336 = vadd.s32 %v1304, 4294967294
      %v1337 = vadd.s32 %v1305, 4294967294
      %v1338 = vadd.s32 %v1306, 4294967294
      %v1339 = vadd.s32 %v1307, 4294967294
      %v1340 = vadd.s32 %v1308, 4294967294
      %v1341 = vadd.s32 %v1309, 4294967294
      %v1342 = vadd.s32 %v1310, 4294967294
      %v1343 = vadd.s32 %v1311, 4294967294
      %v1344 = vadd.s32 %v1312, 4294967294
      %v1345 = vadd.s32 %v1313, 4294967294
      %v1346 = vadd.s32 %v1314, 4294967294
      %v1347 = vadd.s32 %v1315, 4294967294
      %v1348 = vadd.s32 %v1316, 4294967294
      %v1349 = vadd.s32 %v1317, 4294967294
      %v1350 = vadd.s32 %v1318, 4294967294
      %v1351 = vadd.s32 %v1319, 4294967294
      %v1352 = vadd.s32 %v1320, 4294967294
      %v1353 = vadd.s32 %v1321, 4294967294
      %vm1354 = vcmp.ge.s32.totalorder %v1322, 0
      %vm1355 = vcmp.ge.s32.totalorder %v1323, 0
      %vm1356 = vcmp.ge.s32.totalorder %v1324, 0
      %vm1357 = vcmp.ge.s32.totalorder %v1325, 0
      %vm1358 = vcmp.ge.s32.totalorder %v1326, 0
      %vm1359 = vcmp.ge.s32.totalorder %v1327, 0
      %vm1360 = vcmp.ge.s32.totalorder %v1328, 0
      %vm1361 = vcmp.ge.s32.totalorder %v1329, 0
      %vm1362 = vcmp.ge.s32.totalorder %v1330, 0
      %vm1363 = vcmp.ge.s32.totalorder %v1331, 0
      %vm1364 = vcmp.ge.s32.totalorder %v1332, 0
      %vm1365 = vcmp.ge.s32.totalorder %v1333, 0
      %vm1366 = vcmp.ge.s32.totalorder %v1334, 0
      %vm1367 = vcmp.ge.s32.totalorder %v1335, 0
      %vm1368 = vcmp.ge.s32.totalorder %v1336, 0
      %vm1369 = vcmp.ge.s32.totalorder %v1337, 0
      %vm1370 = vcmp.ge.s32.totalorder %v1338, 0
      %vm1371 = vcmp.ge.s32.totalorder %v1339, 0
      %vm1372 = vcmp.ge.s32.totalorder %v1340, 0
      %vm1373 = vcmp.ge.s32.totalorder %v1341, 0
      %vm1374 = vcmp.ge.s32.totalorder %v1342, 0
      %vm1375 = vcmp.ge.s32.totalorder %v1343, 0
      %vm1376 = vcmp.ge.s32.totalorder %v1344, 0
      %vm1377 = vcmp.ge.s32.totalorder %v1345, 0
      %vm1378 = vcmp.ge.s32.totalorder %v1346, 0
      %vm1379 = vcmp.ge.s32.totalorder %v1347, 0
      %vm1380 = vcmp.ge.s32.totalorder %v1348, 0
      %vm1381 = vcmp.ge.s32.totalorder %v1349, 0
      %vm1382 = vcmp.ge.s32.totalorder %v1350, 0
      %vm1383 = vcmp.ge.s32.totalorder %v1351, 0
      %vm1384 = vcmp.ge.s32.totalorder %v1352, 0
      %vm1385 = vcmp.ge.s32.totalorder %v1353, 0
      %vm1386 = vcmp.lt.s32.totalorder %v1322, 16
      %vm1387 = vcmp.lt.s32.totalorder %v1323, 16
      %vm1388 = vcmp.lt.s32.totalorder %v1324, 16
      %vm1389 = vcmp.lt.s32.totalorder %v1325, 16
      %vm1390 = vcmp.lt.s32.totalorder %v1326, 16
      %vm1391 = vcmp.lt.s32.totalorder %v1327, 16
      %vm1392 = vcmp.lt.s32.totalorder %v1328, 16
      %vm1393 = vcmp.lt.s32.totalorder %v1329, 16
      %vm1394 = vcmp.lt.s32.totalorder %v1330, 16
      %vm1395 = vcmp.lt.s32.totalorder %v1331, 16
      %vm1396 = vcmp.lt.s32.totalorder %v1332, 16
      %vm1397 = vcmp.lt.s32.totalorder %v1333, 16
      %vm1398 = vcmp.lt.s32.totalorder %v1334, 16
      %vm1399 = vcmp.lt.s32.totalorder %v1335, 16
      %vm1400 = vcmp.lt.s32.totalorder %v1336, 16
      %vm1401 = vcmp.lt.s32.totalorder %v1337, 16
      %vm1402 = vcmp.lt.s32.totalorder %v1338, 16
      %vm1403 = vcmp.lt.s32.totalorder %v1339, 16
      %vm1404 = vcmp.lt.s32.totalorder %v1340, 16
      %vm1405 = vcmp.lt.s32.totalorder %v1341, 16
      %vm1406 = vcmp.lt.s32.totalorder %v1342, 16
      %vm1407 = vcmp.lt.s32.totalorder %v1343, 16
      %vm1408 = vcmp.lt.s32.totalorder %v1344, 16
      %vm1409 = vcmp.lt.s32.totalorder %v1345, 16
      %vm1410 = vcmp.lt.s32.totalorder %v1346, 16
      %vm1411 = vcmp.lt.s32.totalorder %v1347, 16
      %vm1412 = vcmp.lt.s32.totalorder %v1348, 16
      %vm1413 = vcmp.lt.s32.totalorder %v1349, 16
      %vm1414 = vcmp.lt.s32.totalorder %v1350, 16
      %vm1415 = vcmp.lt.s32.totalorder %v1351, 16
      %vm1416 = vcmp.lt.s32.totalorder %v1352, 16
      %vm1417 = vcmp.lt.s32.totalorder %v1353, 16
      %vm1418 = vmand %vm1354, %vm1386
      %vm1419 = vmand %vm1355, %vm1387
      %vm1420 = vmand %vm1356, %vm1388
      %vm1421 = vmand %vm1357, %vm1389
      %vm1422 = vmand %vm1358, %vm1390
      %vm1423 = vmand %vm1359, %vm1391
      %vm1424 = vmand %vm1360, %vm1392
      %vm1425 = vmand %vm1361, %vm1393
      %vm1426 = vmand %vm1362, %vm1394
      %vm1427 = vmand %vm1363, %vm1395
      %vm1428 = vmand %vm1364, %vm1396
      %vm1429 = vmand %vm1365, %vm1397
      %vm1430 = vmand %vm1366, %vm1398
      %vm1431 = vmand %vm1367, %vm1399
      %vm1432 = vmand %vm1368, %vm1400
      %vm1433 = vmand %vm1369, %vm1401
      %vm1434 = vmand %vm1370, %vm1402
      %vm1435 = vmand %vm1371, %vm1403
      %vm1436 = vmand %vm1372, %vm1404
      %vm1437 = vmand %vm1373, %vm1405
      %vm1438 = vmand %vm1374, %vm1406
      %vm1439 = vmand %vm1375, %vm1407
      %vm1440 = vmand %vm1376, %vm1408
      %vm1441 = vmand %vm1377, %vm1409
      %vm1442 = vmand %vm1378, %vm1410
      %vm1443 = vmand %vm1379, %vm1411
      %vm1444 = vmand %vm1380, %vm1412
      %vm1445 = vmand %vm1381, %vm1413
      %vm1446 = vmand %vm1382, %vm1414
      %vm1447 = vmand %vm1383, %vm1415
      %vm1448 = vmand %vm1384, %vm1416
      %vm1449 = vmand %vm1385, %vm1417
      %v1450 = vadd.s32 %v1290, 4294967295
      %v1451 = vadd.s32 %v1291, 4294967295
      %v1452 = vadd.s32 %v1292, 4294967295
      %v1453 = vadd.s32 %v1293, 4294967295
      %v1454 = vadd.s32 %v1294, 4294967295
      %v1455 = vadd.s32 %v1295, 4294967295
      %v1456 = vadd.s32 %v1296, 4294967295
      %v1457 = vadd.s32 %v1297, 4294967295
      %v1458 = vadd.s32 %v1298, 4294967295
      %v1459 = vadd.s32 %v1299, 4294967295
      %v1460 = vadd.s32 %v1300, 4294967295
      %v1461 = vadd.s32 %v1301, 4294967295
      %v1462 = vadd.s32 %v1302, 4294967295
      %v1463 = vadd.s32 %v1303, 4294967295
      %v1464 = vadd.s32 %v1304, 4294967295
      %v1465 = vadd.s32 %v1305, 4294967295
      %v1466 = vadd.s32 %v1306, 4294967295
      %v1467 = vadd.s32 %v1307, 4294967295
      %v1468 = vadd.s32 %v1308, 4294967295
      %v1469 = vadd.s32 %v1309, 4294967295
      %v1470 = vadd.s32 %v1310, 4294967295
      %v1471 = vadd.s32 %v1311, 4294967295
      %v1472 = vadd.s32 %v1312, 4294967295
      %v1473 = vadd.s32 %v1313, 4294967295
      %v1474 = vadd.s32 %v1314, 4294967295
      %v1475 = vadd.s32 %v1315, 4294967295
      %v1476 = vadd.s32 %v1316, 4294967295
      %v1477 = vadd.s32 %v1317, 4294967295
      %v1478 = vadd.s32 %v1318, 4294967295
      %v1479 = vadd.s32 %v1319, 4294967295
      %v1480 = vadd.s32 %v1320, 4294967295
      %v1481 = vadd.s32 %v1321, 4294967295
      %vm1482 = vcmp.ge.s32.totalorder %v1450, 0
      %vm1483 = vcmp.ge.s32.totalorder %v1451, 0
      %vm1484 = vcmp.ge.s32.totalorder %v1452, 0
      %vm1485 = vcmp.ge.s32.totalorder %v1453, 0
      %vm1486 = vcmp.ge.s32.totalorder %v1454, 0
      %vm1487 = vcmp.ge.s32.totalorder %v1455, 0
      %vm1488 = vcmp.ge.s32.totalorder %v1456, 0
      %vm1489 = vcmp.ge.s32.totalorder %v1457, 0
      %vm1490 = vcmp.ge.s32.totalorder %v1458, 0
      %vm1491 = vcmp.ge.s32.totalorder %v1459, 0
      %vm1492 = vcmp.ge.s32.totalorder %v1460, 0
      %vm1493 = vcmp.ge.s32.totalorder %v1461, 0
      %vm1494 = vcmp.ge.s32.totalorder %v1462, 0
      %vm1495 = vcmp.ge.s32.totalorder %v1463, 0
      %vm1496 = vcmp.ge.s32.totalorder %v1464, 0
      %vm1497 = vcmp.ge.s32.totalorder %v1465, 0
      %vm1498 = vcmp.ge.s32.totalorder %v1466, 0
      %vm1499 = vcmp.ge.s32.totalorder %v1467, 0
      %vm1500 = vcmp.ge.s32.totalorder %v1468, 0
      %vm1501 = vcmp.ge.s32.totalorder %v1469, 0
      %vm1502 = vcmp.ge.s32.totalorder %v1470, 0
      %vm1503 = vcmp.ge.s32.totalorder %v1471, 0
      %vm1504 = vcmp.ge.s32.totalorder %v1472, 0
      %vm1505 = vcmp.ge.s32.totalorder %v1473, 0
      %vm1506 = vcmp.ge.s32.totalorder %v1474, 0
      %vm1507 = vcmp.ge.s32.totalorder %v1475, 0
      %vm1508 = vcmp.ge.s32.totalorder %v1476, 0
      %vm1509 = vcmp.ge.s32.totalorder %v1477, 0
      %vm1510 = vcmp.ge.s32.totalorder %v1478, 0
      %vm1511 = vcmp.ge.s32.totalorder %v1479, 0
      %vm1512 = vcmp.ge.s32.totalorder %v1480, 0
      %vm1513 = vcmp.ge.s32.totalorder %v1481, 0
      %vm1514 = vcmp.lt.s32.totalorder %v1450, 16
      %vm1515 = vcmp.lt.s32.totalorder %v1451, 16
      %vm1516 = vcmp.lt.s32.totalorder %v1452, 16
      %vm1517 = vcmp.lt.s32.totalorder %v1453, 16
      %vm1518 = vcmp.lt.s32.totalorder %v1454, 16
      %vm1519 = vcmp.lt.s32.totalorder %v1455, 16
      %vm1520 = vcmp.lt.s32.totalorder %v1456, 16
      %vm1521 = vcmp.lt.s32.totalorder %v1457, 16
      %vm1522 = vcmp.lt.s32.totalorder %v1458, 16
      %vm1523 = vcmp.lt.s32.totalorder %v1459, 16
      %vm1524 = vcmp.lt.s32.totalorder %v1460, 16
      %vm1525 = vcmp.lt.s32.totalorder %v1461, 16
      %vm1526 = vcmp.lt.s32.totalorder %v1462, 16
      %vm1527 = vcmp.lt.s32.totalorder %v1463, 16
      %vm1528 = vcmp.lt.s32.totalorder %v1464, 16
      %vm1529 = vcmp.lt.s32.totalorder %v1465, 16
      %vm1530 = vcmp.lt.s32.totalorder %v1466, 16
      %vm1531 = vcmp.lt.s32.totalorder %v1467, 16
      %vm1532 = vcmp.lt.s32.totalorder %v1468, 16
      %vm1533 = vcmp.lt.s32.totalorder %v1469, 16
      %vm1534 = vcmp.lt.s32.totalorder %v1470, 16
      %vm1535 = vcmp.lt.s32.totalorder %v1471, 16
      %vm1536 = vcmp.lt.s32.totalorder %v1472, 16
      %vm1537 = vcmp.lt.s32.totalorder %v1473, 16
      %vm1538 = vcmp.lt.s32.totalorder %v1474, 16
      %vm1539 = vcmp.lt.s32.totalorder %v1475, 16
      %vm1540 = vcmp.lt.s32.totalorder %v1476, 16
      %vm1541 = vcmp.lt.s32.totalorder %v1477, 16
      %vm1542 = vcmp.lt.s32.totalorder %v1478, 16
      %vm1543 = vcmp.lt.s32.totalorder %v1479, 16
      %vm1544 = vcmp.lt.s32.totalorder %v1480, 16
      %vm1545 = vcmp.lt.s32.totalorder %v1481, 16
      %vm1546 = vmand %vm1482, %vm1514
      %vm1547 = vmand %vm1483, %vm1515
      %vm1548 = vmand %vm1484, %vm1516
      %vm1549 = vmand %vm1485, %vm1517
      %vm1550 = vmand %vm1486, %vm1518
      %vm1551 = vmand %vm1487, %vm1519
      %vm1552 = vmand %vm1488, %vm1520
      %vm1553 = vmand %vm1489, %vm1521
      %vm1554 = vmand %vm1490, %vm1522
      %vm1555 = vmand %vm1491, %vm1523
      %vm1556 = vmand %vm1492, %vm1524
      %vm1557 = vmand %vm1493, %vm1525
      %vm1558 = vmand %vm1494, %vm1526
      %vm1559 = vmand %vm1495, %vm1527
      %vm1560 = vmand %vm1496, %vm1528
      %vm1561 = vmand %vm1497, %vm1529
      %vm1562 = vmand %vm1498, %vm1530
      %vm1563 = vmand %vm1499, %vm1531
      %vm1564 = vmand %vm1500, %vm1532
      %vm1565 = vmand %vm1501, %vm1533
      %vm1566 = vmand %vm1502, %vm1534
      %vm1567 = vmand %vm1503, %vm1535
      %vm1568 = vmand %vm1504, %vm1536
      %vm1569 = vmand %vm1505, %vm1537
      %vm1570 = vmand %vm1506, %vm1538
      %vm1571 = vmand %vm1507, %vm1539
      %vm1572 = vmand %vm1508, %vm1540
      %vm1573 = vmand %vm1509, %vm1541
      %vm1574 = vmand %vm1510, %vm1542
      %vm1575 = vmand %vm1511, %vm1543
      %vm1576 = vmand %vm1512, %vm1544
      %vm1577 = vmand %vm1513, %vm1545
      %v1578 = vadd.s32 %v1290, 1
      %v1579 = vadd.s32 %v1291, 1
      %v1580 = vadd.s32 %v1292, 1
      %v1581 = vadd.s32 %v1293, 1
      %v1582 = vadd.s32 %v1294, 1
      %v1583 = vadd.s32 %v1295, 1
      %v1584 = vadd.s32 %v1296, 1
      %v1585 = vadd.s32 %v1297, 1
      %v1586 = vadd.s32 %v1298, 1
      %v1587 = vadd.s32 %v1299, 1
      %v1588 = vadd.s32 %v1300, 1
      %v1589 = vadd.s32 %v1301, 1
      %v1590 = vadd.s32 %v1302, 1
      %v1591 = vadd.s32 %v1303, 1
      %v1592 = vadd.s32 %v1304, 1
      %v1593 = vadd.s32 %v1305, 1
      %v1594 = vadd.s32 %v1306, 1
      %v1595 = vadd.s32 %v1307, 1
      %v1596 = vadd.s32 %v1308, 1
      %v1597 = vadd.s32 %v1309, 1
      %v1598 = vadd.s32 %v1310, 1
      %v1599 = vadd.s32 %v1311, 1
      %v1600 = vadd.s32 %v1312, 1
      %v1601 = vadd.s32 %v1313, 1
      %v1602 = vadd.s32 %v1314, 1
      %v1603 = vadd.s32 %v1315, 1
      %v1604 = vadd.s32 %v1316, 1
      %v1605 = vadd.s32 %v1317, 1
      %v1606 = vadd.s32 %v1318, 1
      %v1607 = vadd.s32 %v1319, 1
      %v1608 = vadd.s32 %v1320, 1
      %v1609 = vadd.s32 %v1321, 1
      %vm1610 = vcmp.ge.s32.totalorder %v1578, 0
      %vm1611 = vcmp.ge.s32.totalorder %v1579, 0
      %vm1612 = vcmp.ge.s32.totalorder %v1580, 0
      %vm1613 = vcmp.ge.s32.totalorder %v1581, 0
      %vm1614 = vcmp.ge.s32.totalorder %v1582, 0
      %vm1615 = vcmp.ge.s32.totalorder %v1583, 0
      %vm1616 = vcmp.ge.s32.totalorder %v1584, 0
      %vm1617 = vcmp.ge.s32.totalorder %v1585, 0
      %vm1618 = vcmp.ge.s32.totalorder %v1586, 0
      %vm1619 = vcmp.ge.s32.totalorder %v1587, 0
      %vm1620 = vcmp.ge.s32.totalorder %v1588, 0
      %vm1621 = vcmp.ge.s32.totalorder %v1589, 0
      %vm1622 = vcmp.ge.s32.totalorder %v1590, 0
      %vm1623 = vcmp.ge.s32.totalorder %v1591, 0
      %vm1624 = vcmp.ge.s32.totalorder %v1592, 0
      %vm1625 = vcmp.ge.s32.totalorder %v1593, 0
      %vm1626 = vcmp.ge.s32.totalorder %v1594, 0
      %vm1627 = vcmp.ge.s32.totalorder %v1595, 0
      %vm1628 = vcmp.ge.s32.totalorder %v1596, 0
      %vm1629 = vcmp.ge.s32.totalorder %v1597, 0
      %vm1630 = vcmp.ge.s32.totalorder %v1598, 0
      %vm1631 = vcmp.ge.s32.totalorder %v1599, 0
      %vm1632 = vcmp.ge.s32.totalorder %v1600, 0
      %vm1633 = vcmp.ge.s32.totalorder %v1601, 0
      %vm1634 = vcmp.ge.s32.totalorder %v1602, 0
      %vm1635 = vcmp.ge.s32.totalorder %v1603, 0
      %vm1636 = vcmp.ge.s32.totalorder %v1604, 0
      %vm1637 = vcmp.ge.s32.totalorder %v1605, 0
      %vm1638 = vcmp.ge.s32.totalorder %v1606, 0
      %vm1639 = vcmp.ge.s32.totalorder %v1607, 0
      %vm1640 = vcmp.ge.s32.totalorder %v1608, 0
      %vm1641 = vcmp.ge.s32.totalorder %v1609, 0
      %vm1642 = vcmp.lt.s32.totalorder %v1578, 16
      %vm1643 = vcmp.lt.s32.totalorder %v1579, 16
      %vm1644 = vcmp.lt.s32.totalorder %v1580, 16
      %vm1645 = vcmp.lt.s32.totalorder %v1581, 16
      %vm1646 = vcmp.lt.s32.totalorder %v1582, 16
      %vm1647 = vcmp.lt.s32.totalorder %v1583, 16
      %vm1648 = vcmp.lt.s32.totalorder %v1584, 16
      %vm1649 = vcmp.lt.s32.totalorder %v1585, 16
      %vm1650 = vcmp.lt.s32.totalorder %v1586, 16
      %vm1651 = vcmp.lt.s32.totalorder %v1587, 16
      %vm1652 = vcmp.lt.s32.totalorder %v1588, 16
      %vm1653 = vcmp.lt.s32.totalorder %v1589, 16
      %vm1654 = vcmp.lt.s32.totalorder %v1590, 16
      %vm1655 = vcmp.lt.s32.totalorder %v1591, 16
      %vm1656 = vcmp.lt.s32.totalorder %v1592, 16
      %vm1657 = vcmp.lt.s32.totalorder %v1593, 16
      %vm1658 = vcmp.lt.s32.totalorder %v1594, 16
      %vm1659 = vcmp.lt.s32.totalorder %v1595, 16
      %vm1660 = vcmp.lt.s32.totalorder %v1596, 16
      %vm1661 = vcmp.lt.s32.totalorder %v1597, 16
      %vm1662 = vcmp.lt.s32.totalorder %v1598, 16
      %vm1663 = vcmp.lt.s32.totalorder %v1599, 16
      %vm1664 = vcmp.lt.s32.totalorder %v1600, 16
      %vm1665 = vcmp.lt.s32.totalorder %v1601, 16
      %vm1666 = vcmp.lt.s32.totalorder %v1602, 16
      %vm1667 = vcmp.lt.s32.totalorder %v1603, 16
      %vm1668 = vcmp.lt.s32.totalorder %v1604, 16
      %vm1669 = vcmp.lt.s32.totalorder %v1605, 16
      %vm1670 = vcmp.lt.s32.totalorder %v1606, 16
      %vm1671 = vcmp.lt.s32.totalorder %v1607, 16
      %vm1672 = vcmp.lt.s32.totalorder %v1608, 16
      %vm1673 = vcmp.lt.s32.totalorder %v1609, 16
      %vm1674 = vmand %vm1610, %vm1642
      %vm1675 = vmand %vm1611, %vm1643
      %vm1676 = vmand %vm1612, %vm1644
      %vm1677 = vmand %vm1613, %vm1645
      %vm1678 = vmand %vm1614, %vm1646
      %vm1679 = vmand %vm1615, %vm1647
      %vm1680 = vmand %vm1616, %vm1648
      %vm1681 = vmand %vm1617, %vm1649
      %vm1682 = vmand %vm1618, %vm1650
      %vm1683 = vmand %vm1619, %vm1651
      %vm1684 = vmand %vm1620, %vm1652
      %vm1685 = vmand %vm1621, %vm1653
      %vm1686 = vmand %vm1622, %vm1654
      %vm1687 = vmand %vm1623, %vm1655
      %vm1688 = vmand %vm1624, %vm1656
      %vm1689 = vmand %vm1625, %vm1657
      %vm1690 = vmand %vm1626, %vm1658
      %vm1691 = vmand %vm1627, %vm1659
      %vm1692 = vmand %vm1628, %vm1660
      %vm1693 = vmand %vm1629, %vm1661
      %vm1694 = vmand %vm1630, %vm1662
      %vm1695 = vmand %vm1631, %vm1663
      %vm1696 = vmand %vm1632, %vm1664
      %vm1697 = vmand %vm1633, %vm1665
      %vm1698 = vmand %vm1634, %vm1666
      %vm1699 = vmand %vm1635, %vm1667
      %vm1700 = vmand %vm1636, %vm1668
      %vm1701 = vmand %vm1637, %vm1669
      %vm1702 = vmand %vm1638, %vm1670
      %vm1703 = vmand %vm1639, %vm1671
      %vm1704 = vmand %vm1640, %vm1672
      %vm1705 = vmand %vm1641, %vm1673
      %v1706 = vadd.s32 %v1290, 2
      %v1707 = vadd.s32 %v1291, 2
      %v1708 = vadd.s32 %v1292, 2
      %v1709 = vadd.s32 %v1293, 2
      %v1710 = vadd.s32 %v1294, 2
      %v1711 = vadd.s32 %v1295, 2
      %v1712 = vadd.s32 %v1296, 2
      %v1713 = vadd.s32 %v1297, 2
      %v1714 = vadd.s32 %v1298, 2
      %v1715 = vadd.s32 %v1299, 2
      %v1716 = vadd.s32 %v1300, 2
      %v1717 = vadd.s32 %v1301, 2
      %v1718 = vadd.s32 %v1302, 2
      %v1719 = vadd.s32 %v1303, 2
      %v1720 = vadd.s32 %v1304, 2
      %v1721 = vadd.s32 %v1305, 2
      %v1722 = vadd.s32 %v1306, 2
      %v1723 = vadd.s32 %v1307, 2
      %v1724 = vadd.s32 %v1308, 2
      %v1725 = vadd.s32 %v1309, 2
      %v1726 = vadd.s32 %v1310, 2
      %v1727 = vadd.s32 %v1311, 2
      %v1728 = vadd.s32 %v1312, 2
      %v1729 = vadd.s32 %v1313, 2
      %v1730 = vadd.s32 %v1314, 2
      %v1731 = vadd.s32 %v1315, 2
      %v1732 = vadd.s32 %v1316, 2
      %v1733 = vadd.s32 %v1317, 2
      %v1734 = vadd.s32 %v1318, 2
      %v1735 = vadd.s32 %v1319, 2
      %v1736 = vadd.s32 %v1320, 2
      %v1737 = vadd.s32 %v1321, 2
      %vm1738 = vcmp.ge.s32.totalorder %v1706, 0
      %vm1739 = vcmp.ge.s32.totalorder %v1707, 0
      %vm1740 = vcmp.ge.s32.totalorder %v1708, 0
      %vm1741 = vcmp.ge.s32.totalorder %v1709, 0
      %vm1742 = vcmp.ge.s32.totalorder %v1710, 0
      %vm1743 = vcmp.ge.s32.totalorder %v1711, 0
      %vm1744 = vcmp.ge.s32.totalorder %v1712, 0
      %vm1745 = vcmp.ge.s32.totalorder %v1713, 0
      %vm1746 = vcmp.ge.s32.totalorder %v1714, 0
      %vm1747 = vcmp.ge.s32.totalorder %v1715, 0
      %vm1748 = vcmp.ge.s32.totalorder %v1716, 0
      %vm1749 = vcmp.ge.s32.totalorder %v1717, 0
      %vm1750 = vcmp.ge.s32.totalorder %v1718, 0
      %vm1751 = vcmp.ge.s32.totalorder %v1719, 0
      %vm1752 = vcmp.ge.s32.totalorder %v1720, 0
      %vm1753 = vcmp.ge.s32.totalorder %v1721, 0
      %vm1754 = vcmp.ge.s32.totalorder %v1722, 0
      %vm1755 = vcmp.ge.s32.totalorder %v1723, 0
      %vm1756 = vcmp.ge.s32.totalorder %v1724, 0
      %vm1757 = vcmp.ge.s32.totalorder %v1725, 0
      %vm1758 = vcmp.ge.s32.totalorder %v1726, 0
      %vm1759 = vcmp.ge.s32.totalorder %v1727, 0
      %vm1760 = vcmp.ge.s32.totalorder %v1728, 0
      %vm1761 = vcmp.ge.s32.totalorder %v1729, 0
      %vm1762 = vcmp.ge.s32.totalorder %v1730, 0
      %vm1763 = vcmp.ge.s32.totalorder %v1731, 0
      %vm1764 = vcmp.ge.s32.totalorder %v1732, 0
      %vm1765 = vcmp.ge.s32.totalorder %v1733, 0
      %vm1766 = vcmp.ge.s32.totalorder %v1734, 0
      %vm1767 = vcmp.ge.s32.totalorder %v1735, 0
      %vm1768 = vcmp.ge.s32.totalorder %v1736, 0
      %vm1769 = vcmp.ge.s32.totalorder %v1737, 0
      %vm1770 = vcmp.lt.s32.totalorder %v1706, 16
      %vm1771 = vcmp.lt.s32.totalorder %v1707, 16
      %vm1772 = vcmp.lt.s32.totalorder %v1708, 16
      %vm1773 = vcmp.lt.s32.totalorder %v1709, 16
      %vm1774 = vcmp.lt.s32.totalorder %v1710, 16
      %vm1775 = vcmp.lt.s32.totalorder %v1711, 16
      %vm1776 = vcmp.lt.s32.totalorder %v1712, 16
      %vm1777 = vcmp.lt.s32.totalorder %v1713, 16
      %vm1778 = vcmp.lt.s32.totalorder %v1714, 16
      %vm1779 = vcmp.lt.s32.totalorder %v1715, 16
      %vm1780 = vcmp.lt.s32.totalorder %v1716, 16
      %vm1781 = vcmp.lt.s32.totalorder %v1717, 16
      %vm1782 = vcmp.lt.s32.totalorder %v1718, 16
      %vm1783 = vcmp.lt.s32.totalorder %v1719, 16
      %vm1784 = vcmp.lt.s32.totalorder %v1720, 16
      %vm1785 = vcmp.lt.s32.totalorder %v1721, 16
      %vm1786 = vcmp.lt.s32.totalorder %v1722, 16
      %vm1787 = vcmp.lt.s32.totalorder %v1723, 16
      %vm1788 = vcmp.lt.s32.totalorder %v1724, 16
      %vm1789 = vcmp.lt.s32.totalorder %v1725, 16
      %vm1790 = vcmp.lt.s32.totalorder %v1726, 16
      %vm1791 = vcmp.lt.s32.totalorder %v1727, 16
      %vm1792 = vcmp.lt.s32.totalorder %v1728, 16
      %vm1793 = vcmp.lt.s32.totalorder %v1729, 16
      %vm1794 = vcmp.lt.s32.totalorder %v1730, 16
      %vm1795 = vcmp.lt.s32.totalorder %v1731, 16
      %vm1796 = vcmp.lt.s32.totalorder %v1732, 16
      %vm1797 = vcmp.lt.s32.totalorder %v1733, 16
      %vm1798 = vcmp.lt.s32.totalorder %v1734, 16
      %vm1799 = vcmp.lt.s32.totalorder %v1735, 16
      %vm1800 = vcmp.lt.s32.totalorder %v1736, 16
      %vm1801 = vcmp.lt.s32.totalorder %v1737, 16
      %vm1802 = vmand %vm1738, %vm1770
      %vm1803 = vmand %vm1739, %vm1771
      %vm1804 = vmand %vm1740, %vm1772
      %vm1805 = vmand %vm1741, %vm1773
      %vm1806 = vmand %vm1742, %vm1774
      %vm1807 = vmand %vm1743, %vm1775
      %vm1808 = vmand %vm1744, %vm1776
      %vm1809 = vmand %vm1745, %vm1777
      %vm1810 = vmand %vm1746, %vm1778
      %vm1811 = vmand %vm1747, %vm1779
      %vm1812 = vmand %vm1748, %vm1780
      %vm1813 = vmand %vm1749, %vm1781
      %vm1814 = vmand %vm1750, %vm1782
      %vm1815 = vmand %vm1751, %vm1783
      %vm1816 = vmand %vm1752, %vm1784
      %vm1817 = vmand %vm1753, %vm1785
      %vm1818 = vmand %vm1754, %vm1786
      %vm1819 = vmand %vm1755, %vm1787
      %vm1820 = vmand %vm1756, %vm1788
      %vm1821 = vmand %vm1757, %vm1789
      %vm1822 = vmand %vm1758, %vm1790
      %vm1823 = vmand %vm1759, %vm1791
      %vm1824 = vmand %vm1760, %vm1792
      %vm1825 = vmand %vm1761, %vm1793
      %vm1826 = vmand %vm1762, %vm1794
      %vm1827 = vmand %vm1763, %vm1795
      %vm1828 = vmand %vm1764, %vm1796
      %vm1829 = vmand %vm1765, %vm1797
      %vm1830 = vmand %vm1766, %vm1798
      %vm1831 = vmand %vm1767, %vm1799
      %vm1832 = vmand %vm1768, %vm1800
      %vm1833 = vmand %vm1769, %vm1801
      %1834 = vst.msk [vmem:[#allocation2 + $0x20] sm:$0xff] %vm896, %v864
      %1835 = vst.msk [vmem:[#allocation2 + $0x28] sm:$0xff] %vm896, %v865
      %1836 = vst.msk [vmem:[#allocation2 + $0x30] sm:$0xff] %vm896, %v866
      %1837 = vst.msk [vmem:[#allocation2 + $0x38] sm:$0xff] %vm896, %v867
      %1838 = vst.msk [vmem:[#allocation2 + $0x40] sm:$0xff] %vm896, %v868
      %1839 = vst.msk [vmem:[#allocation2 + $0x48] sm:$0xff] %vm896, %v869
      %1840 = vst.msk [vmem:[#allocation2 + $0x50] sm:$0xff] %vm896, %v870
      %1841 = vst.msk [vmem:[#allocation2 + $0x58] sm:$0xff] %vm896, %v871
      %1842 = vst.msk [vmem:[#allocation2 + $0x60] sm:$0xff] %vm896, %v872
      %1843 = vst.msk [vmem:[#allocation2 + $0x68] sm:$0xff] %vm896, %v873
      %1844 = vst.msk [vmem:[#allocation2 + $0x70] sm:$0xff] %vm896, %v874
      %1845 = vst.msk [vmem:[#allocation2 + $0x78] sm:$0xff] %vm896, %v875
      %1846 = vst.msk [vmem:[#allocation2 + $0x80] sm:$0xff] %vm896, %v876
      %1847 = vst.msk [vmem:[#allocation2 + $0x88] sm:$0xff] %vm896, %v877
      %1848 = vst.msk [vmem:[#allocation2 + $0x90] sm:$0xff] %vm896, %v878
      %1849 = vst.msk [vmem:[#allocation2 + $0x98] sm:$0xff] %vm896, %v879
      %1850 = vst.msk [vmem:[#allocation2 + $0xa0] sm:$0xff] %vm896, %v880
      %1851 = vst.msk [vmem:[#allocation2 + $0xa8] sm:$0xff] %vm896, %v881
      %1852 = vst.msk [vmem:[#allocation2 + $0xb0] sm:$0xff] %vm896, %v882
      %1853 = vst.msk [vmem:[#allocation2 + $0xb8] sm:$0xff] %vm896, %v883
      %1854 = vst.msk [vmem:[#allocation2 + $0xc0] sm:$0xff] %vm896, %v884
      %1855 = vst.msk [vmem:[#allocation2 + $0xc8] sm:$0xff] %vm896, %v885
      %1856 = vst.msk [vmem:[#allocation2 + $0xd0] sm:$0xff] %vm896, %v886
      %1857 = vst.msk [vmem:[#allocation2 + $0xd8] sm:$0xff] %vm896, %v887
      %1858 = vst.msk [vmem:[#allocation2 + $0xe0] sm:$0xff] %vm896, %v888
      %1859 = vst.msk [vmem:[#allocation2 + $0xe8] sm:$0xff] %vm896, %v889
      %1860 = vst.msk [vmem:[#allocation2 + $0xf0] sm:$0xff] %vm896, %v890
      %1861 = vst.msk [vmem:[#allocation2 + $0xf8] sm:$0xff] %vm896, %v891
      %1862 = vst.msk [vmem:[#allocation2 + $0x100] sm:$0xff] %vm896, %v892
      %1863 = vst.msk [vmem:[#allocation2 + $0x108] sm:$0xff] %vm896, %v893
      %1864 = vst.msk [vmem:[#allocation2 + $0x110] sm:$0xff] %vm896, %v894
      %1865 = vst.msk [vmem:[#allocation2 + $0x118] sm:$0xff] %vm896, %v895
      %v1866 = vld [vmem:[#allocation2] sm:$0xff]
      %v1867 = vld [vmem:[#allocation2 + $0x8] sm:$0xff]
      %v1868 = vld [vmem:[#allocation2 + $0x10] sm:$0xff]
      %v1869 = vld [vmem:[#allocation2 + $0x18] sm:$0xff]
      %v1870 = vld [vmem:[#allocation2 + $0x20] sm:$0xff]
      %v1871 = vld [vmem:[#allocation2 + $0x28] sm:$0xff]
      %v1872 = vld [vmem:[#allocation2 + $0x30] sm:$0xff]
      %v1873 = vld [vmem:[#allocation2 + $0x38] sm:$0xff]
      %v1874 = vld [vmem:[#allocation2 + $0x40] sm:$0xff]
      %v1875 = vld [vmem:[#allocation2 + $0x48] sm:$0xff]
      %v1876 = vld [vmem:[#allocation2 + $0x50] sm:$0xff]
      %v1877 = vld [vmem:[#allocation2 + $0x58] sm:$0xff]
      %v1878 = vld [vmem:[#allocation2 + $0x60] sm:$0xff]
      %v1879 = vld [vmem:[#allocation2 + $0x68] sm:$0xff]
      %v1880 = vld [vmem:[#allocation2 + $0x70] sm:$0xff]
      %v1881 = vld [vmem:[#allocation2 + $0x78] sm:$0xff]
      %v1882 = vld [vmem:[#allocation2 + $0x80] sm:$0xff]
      %v1883 = vld [vmem:[#allocation2 + $0x88] sm:$0xff]
      %v1884 = vld [vmem:[#allocation2 + $0x90] sm:$0xff]
      %v1885 = vld [vmem:[#allocation2 + $0x98] sm:$0xff]
      %v1886 = vld [vmem:[#allocation2 + $0xa0] sm:$0xff]
      %v1887 = vld [vmem:[#allocation2 + $0xa8] sm:$0xff]
      %v1888 = vld [vmem:[#allocation2 + $0xb0] sm:$0xff]
      %v1889 = vld [vmem:[#allocation2 + $0xb8] sm:$0xff]
      %v1890 = vld [vmem:[#allocation2 + $0xc0] sm:$0xff]
      %v1891 = vld [vmem:[#allocation2 + $0xc8] sm:$0xff]
      %v1892 = vld [vmem:[#allocation2 + $0xd0] sm:$0xff]
      %v1893 = vld [vmem:[#allocation2 + $0xd8] sm:$0xff]
      %v1894 = vld [vmem:[#allocation2 + $0xe0] sm:$0xff]
      %v1895 = vld [vmem:[#allocation2 + $0xe8] sm:$0xff]
      %v1896 = vld [vmem:[#allocation2 + $0xf0] sm:$0xff]
      %v1897 = vld [vmem:[#allocation2 + $0xf8] sm:$0xff]
      %v1898 = vld [vmem:[#allocation2 + $0x100] sm:$0xff]
      %v1899 = vld [vmem:[#allocation2 + $0x108] sm:$0xff]
      %v1900 = vmax.f32 %v1866, %v1868
      %v1901 = vmax.f32 %v1867, %v1869
      %v1902 = vmax.f32 %v1868, %v1870
      %v1903 = vmax.f32 %v1869, %v1871
      %v1904 = vmax.f32 %v1870, %v1872
      %v1905 = vmax.f32 %v1871, %v1873
      %v1906 = vmax.f32 %v1872, %v1874
      %v1907 = vmax.f32 %v1873, %v1875
      %v1908 = vmax.f32 %v1874, %v1876
      %v1909 = vmax.f32 %v1875, %v1877
      %v1910 = vmax.f32 %v1876, %v1878
      %v1911 = vmax.f32 %v1877, %v1879
      %v1912 = vmax.f32 %v1878, %v1880
      %v1913 = vmax.f32 %v1879, %v1881
      %v1914 = vmax.f32 %v1880, %v1882
      %v1915 = vmax.f32 %v1881, %v1883
      %v1916 = vmax.f32 %v1882, %v1884
      %v1917 = vmax.f32 %v1883, %v1885
      %v1918 = vmax.f32 %v1884, %v1886
      %v1919 = vmax.f32 %v1885, %v1887
      %v1920 = vmax.f32 %v1886, %v1888
      %v1921 = vmax.f32 %v1887, %v1889
      %v1922 = vmax.f32 %v1888, %v1890
      %v1923 = vmax.f32 %v1889, %v1891
      %v1924 = vmax.f32 %v1890, %v1892
      %v1925 = vmax.f32 %v1891, %v1893
      %v1926 = vmax.f32 %v1892, %v1894
      %v1927 = vmax.f32 %v1893, %v1895
      %v1928 = vmax.f32 %v1894, %v1896
      %v1929 = vmax.f32 %v1895, %v1897
      %v1930 = vmax.f32 %v1896, %v1898
      %v1931 = vmax.f32 %v1897, %v1899
      %v1932 = vmax.f32 %v1900, %v864
      %v1933 = vmax.f32 %v1901, %v865
      %v1934 = vmax.f32 %v1902, %v866
      %v1935 = vmax.f32 %v1903, %v867
      %v1936 = vmax.f32 %v1904, %v868
      %v1937 = vmax.f32 %v1905, %v869
      %v1938 = vmax.f32 %v1906, %v870
      %v1939 = vmax.f32 %v1907, %v871
      %v1940 = vmax.f32 %v1908, %v872
      %v1941 = vmax.f32 %v1909, %v873
      %v1942 = vmax.f32 %v1910, %v874
      %v1943 = vmax.f32 %v1911, %v875
      %v1944 = vmax.f32 %v1912, %v876
      %v1945 = vmax.f32 %v1913, %v877
      %v1946 = vmax.f32 %v1914, %v878
      %v1947 = vmax.f32 %v1915, %v879
      %v1948 = vmax.f32 %v1916, %v880
      %v1949 = vmax.f32 %v1917, %v881
      %v1950 = vmax.f32 %v1918, %v882
      %v1951 = vmax.f32 %v1919, %v883
      %v1952 = vmax.f32 %v1920, %v884
      %v1953 = vmax.f32 %v1921, %v885
      %v1954 = vmax.f32 %v1922, %v886
      %v1955 = vmax.f32 %v1923, %v887
      %v1956 = vmax.f32 %v1924, %v888
      %v1957 = vmax.f32 %v1925, %v889
      %v1958 = vmax.f32 %v1926, %v890
      %v1959 = vmax.f32 %v1927, %v891
      %v1960 = vmax.f32 %v1928, %v892
      %v1961 = vmax.f32 %v1929, %v893
      %v1962 = vmax.f32 %v1930, %v894
      %v1963 = vmax.f32 %v1931, %v895
      %v1964 = vld [vmem:[#allocation2 + $0x110] sm:$0xff]
      %v1965 = vld [vmem:[#allocation2 + $0x118] sm:$0xff]
      %v1966 = vld [vmem:[#allocation2 + $0x120] sm:$0xff]
      %v1967 = vld [vmem:[#allocation2 + $0x128] sm:$0xff]
      %v1968 = vmax.f32 %v1932, %v1872
      %v1969 = vmax.f32 %v1933, %v1873
      %v1970 = vmax.f32 %v1934, %v1874
      %v1971 = vmax.f32 %v1935, %v1875
      %v1972 = vmax.f32 %v1936, %v1876
      %v1973 = vmax.f32 %v1937, %v1877
      %v1974 = vmax.f32 %v1938, %v1878
      %v1975 = vmax.f32 %v1939, %v1879
      %v1976 = vmax.f32 %v1940, %v1880
      %v1977 = vmax.f32 %v1941, %v1881
      %v1978 = vmax.f32 %v1942, %v1882
      %v1979 = vmax.f32 %v1943, %v1883
      %v1980 = vmax.f32 %v1944, %v1884
      %v1981 = vmax.f32 %v1945, %v1885
      %v1982 = vmax.f32 %v1946, %v1886
      %v1983 = vmax.f32 %v1947, %v1887
      %v1984 = vmax.f32 %v1948, %v1888
      %v1985 = vmax.f32 %v1949, %v1889
      %v1986 = vmax.f32 %v1950, %v1890
      %v1987 = vmax.f32 %v1951, %v1891
      %v1988 = vmax.f32 %v1952, %v1892
      %v1989 = vmax.f32 %v1953, %v1893
      %v1990 = vmax.f32 %v1954, %v1894
      %v1991 = vmax.f32 %v1955, %v1895
      %v1992 = vmax.f32 %v1956, %v1896
      %v1993 = vmax.f32 %v1957, %v1897
      %v1994 = vmax.f32 %v1958, %v1898
      %v1995 = vmax.f32 %v1959, %v1899
      %v1996 = vmax.f32 %v1960, %v1964
      %v1997 = vmax.f32 %v1961, %v1965
      %v1998 = vmax.f32 %v1962, %v1966
      %v1999 = vmax.f32 %v1963, %v1967
      %v2000 = vld [vmem:[#allocation2 + $0x130] sm:$0xff]
      %v2001 = vld [vmem:[#allocation2 + $0x138] sm:$0xff]
      %v2002 = vmax.f32 %v1968, %v1874
      %v2003 = vmax.f32 %v1969, %v1875
      %v2004 = vmax.f32 %v1970, %v1876
      %v2005 = vmax.f32 %v1971, %v1877
      %v2006 = vmax.f32 %v1972, %v1878
      %v2007 = vmax.f32 %v1973, %v1879
      %v2008 = vmax.f32 %v1974, %v1880
      %v2009 = vmax.f32 %v1975, %v1881
      %v2010 = vmax.f32 %v1976, %v1882
      %v2011 = vmax.f32 %v1977, %v1883
      %v2012 = vmax.f32 %v1978, %v1884
      %v2013 = vmax.f32 %v1979, %v1885
      %v2014 = vmax.f32 %v1980, %v1886
      %v2015 = vmax.f32 %v1981, %v1887
      %v2016 = vmax.f32 %v1982, %v1888
      %v2017 = vmax.f32 %v1983, %v1889
      %v2018 = vmax.f32 %v1984, %v1890
      %v2019 = vmax.f32 %v1985, %v1891
      %v2020 = vmax.f32 %v1986, %v1892
      %v2021 = vmax.f32 %v1987, %v1893
      %v2022 = vmax.f32 %v1988, %v1894
      %v2023 = vmax.f32 %v1989, %v1895
      %v2024 = vmax.f32 %v1990, %v1896
      %v2025 = vmax.f32 %v1991, %v1897
      %v2026 = vmax.f32 %v1992, %v1898
      %v2027 = vmax.f32 %v1993, %v1899
      %v2028 = vmax.f32 %v1994, %v1964
      %v2029 = vmax.f32 %v1995, %v1965
      %v2030 = vmax.f32 %v1996, %v1966
      %v2031 = vmax.f32 %v1997, %v1967
      %v2032 = vmax.f32 %v1998, %v2000
      %v2033 = vmax.f32 %v1999, %v2001
      %2034 = vst.msk [vmem:[#allocation2 + $0x20] sm:$0xff] %vm896, %v2002
      %2035 = vst.msk [vmem:[#allocation2 + $0x28] sm:$0xff] %vm896, %v2003
      %2036 = vst.msk [vmem:[#allocation2 + $0x30] sm:$0xff] %vm896, %v2004
      %2037 = vst.msk [vmem:[#allocation2 + $0x38] sm:$0xff] %vm896, %v2005
      %2038 = vst.msk [vmem:[#allocation2 + $0x40] sm:$0xff] %vm896, %v2006
      %2039 = vst.msk [vmem:[#allocation2 + $0x48] sm:$0xff] %vm896, %v2007
      %2040 = vst.msk [vmem:[#allocation2 + $0x50] sm:$0xff] %vm896, %v2008
      %2041 = vst.msk [vmem:[#allocation2 + $0x58] sm:$0xff] %vm896, %v2009
      %2042 = vst.msk [vmem:[#allocation2 + $0x60] sm:$0xff] %vm896, %v2010
      %2043 = vst.msk [vmem:[#allocation2 + $0x68] sm:$0xff] %vm896, %v2011
      %2044 = vst.msk [vmem:[#allocation2 + $0x70] sm:$0xff] %vm896, %v2012
      %2045 = vst.msk [vmem:[#allocation2 + $0x78] sm:$0xff] %vm896, %v2013
      %2046 = vst.msk [vmem:[#allocation2 + $0x80] sm:$0xff] %vm896, %v2014
      %2047 = vst.msk [vmem:[#allocation2 + $0x88] sm:$0xff] %vm896, %v2015
      %2048 = vst.msk [vmem:[#allocation2 + $0x90] sm:$0xff] %vm896, %v2016
      %2049 = vst.msk [vmem:[#allocation2 + $0x98] sm:$0xff] %vm896, %v2017
      %2050 = vst.msk [vmem:[#allocation2 + $0xa0] sm:$0xff] %vm896, %v2018
      %2051 = vst.msk [vmem:[#allocation2 + $0xa8] sm:$0xff] %vm896, %v2019
      %2052 = vst.msk [vmem:[#allocation2 + $0xb0] sm:$0xff] %vm896, %v2020
      %2053 = vst.msk [vmem:[#allocation2 + $0xb8] sm:$0xff] %vm896, %v2021
      %2054 = vst.msk [vmem:[#allocation2 + $0xc0] sm:$0xff] %vm896, %v2022
      %2055 = vst.msk [vmem:[#allocation2 + $0xc8] sm:$0xff] %vm896, %v2023
      %2056 = vst.msk [vmem:[#allocation2 + $0xd0] sm:$0xff] %vm896, %v2024
      %2057 = vst.msk [vmem:[#allocation2 + $0xd8] sm:$0xff] %vm896, %v2025
      %2058 = vst.msk [vmem:[#allocation2 + $0xe0] sm:$0xff] %vm896, %v2026
      %2059 = vst.msk [vmem:[#allocation2 + $0xe8] sm:$0xff] %vm896, %v2027
      %2060 = vst.msk [vmem:[#allocation2 + $0xf0] sm:$0xff] %vm896, %v2028
      %2061 = vst.msk [vmem:[#allocation2 + $0xf8] sm:$0xff] %vm896, %v2029
      %2062 = vst.msk [vmem:[#allocation2 + $0x100] sm:$0xff] %vm896, %v2030
      %2063 = vst.msk [vmem:[#allocation2 + $0x108] sm:$0xff] %vm896, %v2031
      %2064 = vst.msk [vmem:[#allocation2 + $0x110] sm:$0xff] %vm896, %v2032
      %2065 = vst.msk [vmem:[#allocation2 + $0x118] sm:$0xff] %vm896, %v2033
      %v2066 = vld [vmem:[#allocation2 + $0x1e] sm:$0xff]
      %v2067 = vld [vmem:[#allocation2 + $0x26] sm:$0xff]
      %v2068 = vld [vmem:[#allocation2 + $0x2e] sm:$0xff]
      %v2069 = vld [vmem:[#allocation2 + $0x36] sm:$0xff]
      %v2070 = vld [vmem:[#allocation2 + $0x3e] sm:$0xff]
      %v2071 = vld [vmem:[#allocation2 + $0x46] sm:$0xff]
      %v2072 = vld [vmem:[#allocation2 + $0x4e] sm:$0xff]
      %v2073 = vld [vmem:[#allocation2 + $0x56] sm:$0xff]
      %v2074 = vld [vmem:[#allocation2 + $0x5e] sm:$0xff]
      %v2075 = vld [vmem:[#allocation2 + $0x66] sm:$0xff]
      %v2076 = vld [vmem:[#allocation2 + $0x6e] sm:$0xff]
      %v2077 = vld [vmem:[#allocation2 + $0x76] sm:$0xff]
      %v2078 = vld [vmem:[#allocation2 + $0x7e] sm:$0xff]
      %v2079 = vld [vmem:[#allocation2 + $0x86] sm:$0xff]
      %v2080 = vld [vmem:[#allocation2 + $0x8e] sm:$0xff]
      %v2081 = vld [vmem:[#allocation2 + $0x96] sm:$0xff]
      %v2082 = vld [vmem:[#allocation2 + $0x9e] sm:$0xff]
      %v2083 = vld [vmem:[#allocation2 + $0xa6] sm:$0xff]
      %v2084 = vld [vmem:[#allocation2 + $0xae] sm:$0xff]
      %v2085 = vld [vmem:[#allocation2 + $0xb6] sm:$0xff]
      %v2086 = vld [vmem:[#allocation2 + $0xbe] sm:$0xff]
      %v2087 = vld [vmem:[#allocation2 + $0xc6] sm:$0xff]
      %v2088 = vld [vmem:[#allocation2 + $0xce] sm:$0xff]
      %v2089 = vld [vmem:[#allocation2 + $0xd6] sm:$0xff]
      %v2090 = vld [vmem:[#allocation2 + $0xde] sm:$0xff]
      %v2091 = vld [vmem:[#allocation2 + $0xe6] sm:$0xff]
      %v2092 = vld [vmem:[#allocation2 + $0xee] sm:$0xff]
      %v2093 = vld [vmem:[#allocation2 + $0xf6] sm:$0xff]
      %v2094 = vld [vmem:[#allocation2 + $0xfe] sm:$0xff]
      %v2095 = vld [vmem:[#allocation2 + $0x106] sm:$0xff]
      %v2096 = vld [vmem:[#allocation2 + $0x10e] sm:$0xff]
      %v2097 = vld [vmem:[#allocation2 + $0x116] sm:$0xff]
      %v2098 = vsel %vm1418, %v2066, -inf
      %v2099 = vsel %vm1419, %v2067, -inf
      %v2100 = vsel %vm1420, %v2068, -inf
      %v2101 = vsel %vm1421, %v2069, -inf
      %v2102 = vsel %vm1422, %v2070, -inf
      %v2103 = vsel %vm1423, %v2071, -inf
      %v2104 = vsel %vm1424, %v2072, -inf
      %v2105 = vsel %vm1425, %v2073, -inf
      %v2106 = vsel %vm1426, %v2074, -inf
      %v2107 = vsel %vm1427, %v2075, -inf
      %v2108 = vsel %vm1428, %v2076, -inf
      %v2109 = vsel %vm1429, %v2077, -inf
      %v2110 = vsel %vm1430, %v2078, -inf
      %v2111 = vsel %vm1431, %v2079, -inf
      %v2112 = vsel %vm1432, %v2080, -inf
      %v2113 = vsel %vm1433, %v2081, -inf
      %v2114 = vsel %vm1434, %v2082, -inf
      %v2115 = vsel %vm1435, %v2083, -inf
      %v2116 = vsel %vm1436, %v2084, -inf
      %v2117 = vsel %vm1437, %v2085, -inf
      %v2118 = vsel %vm1438, %v2086, -inf
      %v2119 = vsel %vm1439, %v2087, -inf
      %v2120 = vsel %vm1440, %v2088, -inf
      %v2121 = vsel %vm1441, %v2089, -inf
      %v2122 = vsel %vm1442, %v2090, -inf
      %v2123 = vsel %vm1443, %v2091, -inf
      %v2124 = vsel %vm1444, %v2092, -inf
      %v2125 = vsel %vm1445, %v2093, -inf
      %v2126 = vsel %vm1446, %v2094, -inf
      %v2127 = vsel %vm1447, %v2095, -inf
      %v2128 = vsel %vm1448, %v2096, -inf
      %v2129 = vsel %vm1449, %v2097, -inf
      %v2130 = vmax.f32 %v2002, %v2098
      %v2131 = vmax.f32 %v2003, %v2099
      %v2132 = vmax.f32 %v2004, %v2100
      %v2133 = vmax.f32 %v2005, %v2101
      %v2134 = vmax.f32 %v2006, %v2102
      %v2135 = vmax.f32 %v2007, %v2103
      %v2136 = vmax.f32 %v2008, %v2104
      %v2137 = vmax.f32 %v2009, %v2105
      %v2138 = vmax.f32 %v2010, %v2106
      %v2139 = vmax.f32 %v2011, %v2107
      %v2140 = vmax.f32 %v2012, %v2108
      %v2141 = vmax.f32 %v2013, %v2109
      %v2142 = vmax.f32 %v2014, %v2110
      %v2143 = vmax.f32 %v2015, %v2111
      %v2144 = vmax.f32 %v2016, %v2112
      %v2145 = vmax.f32 %v2017, %v2113
      %v2146 = vmax.f32 %v2018, %v2114
      %v2147 = vmax.f32 %v2019, %v2115
      %v2148 = vmax.f32 %v2020, %v2116
      %v2149 = vmax.f32 %v2021, %v2117
      %v2150 = vmax.f32 %v2022, %v2118
      %v2151 = vmax.f32 %v2023, %v2119
      %v2152 = vmax.f32 %v2024, %v2120
      %v2153 = vmax.f32 %v2025, %v2121
      %v2154 = vmax.f32 %v2026, %v2122
      %v2155 = vmax.f32 %v2027, %v2123
      %v2156 = vmax.f32 %v2028, %v2124
      %v2157 = vmax.f32 %v2029, %v2125
      %v2158 = vmax.f32 %v2030, %v2126
      %v2159 = vmax.f32 %v2031, %v2127
      %v2160 = vmax.f32 %v2032, %v2128
      %v2161 = vmax.f32 %v2033, %v2129
      %v2162 = vld [vmem:[#allocation2 + $0x1f] sm:$0xff]
      %v2163 = vld [vmem:[#allocation2 + $0x27] sm:$0xff]
      %v2164 = vld [vmem:[#allocation2 + $0x2f] sm:$0xff]
      %v2165 = vld [vmem:[#allocation2 + $0x37] sm:$0xff]
      %v2166 = vld [vmem:[#allocation2 + $0x3f] sm:$0xff]
      %v2167 = vld [vmem:[#allocation2 + $0x47] sm:$0xff]
      %v2168 = vld [vmem:[#allocation2 + $0x4f] sm:$0xff]
      %v2169 = vld [vmem:[#allocation2 + $0x57] sm:$0xff]
      %v2170 = vld [vmem:[#allocation2 + $0x5f] sm:$0xff]
      %v2171 = vld [vmem:[#allocation2 + $0x67] sm:$0xff]
      %v2172 = vld [vmem:[#allocation2 + $0x6f] sm:$0xff]
      %v2173 = vld [vmem:[#allocation2 + $0x77] sm:$0xff]
      %v2174 = vld [vmem:[#allocation2 + $0x7f] sm:$0xff]
      %v2175 = vld [vmem:[#allocation2 + $0x87] sm:$0xff]
      %v2176 = vld [vmem:[#allocation2 + $0x8f] sm:$0xff]
      %v2177 = vld [vmem:[#allocation2 + $0x97] sm:$0xff]
      %v2178 = vld [vmem:[#allocation2 + $0x9f] sm:$0xff]
      %v2179 = vld [vmem:[#allocation2 + $0xa7] sm:$0xff]
      %v2180 = vld [vmem:[#allocation2 + $0xaf] sm:$0xff]
      %v2181 = vld [vmem:[#allocation2 + $0xb7] sm:$0xff]
      %v2182 = vld [vmem:[#allocation2 + $0xbf] sm:$0xff]
      %v2183 = vld [vmem:[#allocation2 + $0xc7] sm:$0xff]
      %v2184 = vld [vmem:[#allocation2 + $0xcf] sm:$0xff]
      %v2185 = vld [vmem:[#allocation2 + $0xd7] sm:$0xff]
      %v2186 = vld [vmem:[#allocation2 + $0xdf] sm:$0xff]
      %v2187 = vld [vmem:[#allocation2 + $0xe7] sm:$0xff]
      %v2188 = vld [vmem:[#allocation2 + $0xef] sm:$0xff]
      %v2189 = vld [vmem:[#allocation2 + $0xf7] sm:$0xff]
      %v2190 = vld [vmem:[#allocation2 + $0xff] sm:$0xff]
      %v2191 = vld [vmem:[#allocation2 + $0x107] sm:$0xff]
      %v2192 = vld [vmem:[#allocation2 + $0x10f] sm:$0xff]
      %v2193 = vld [vmem:[#allocation2 + $0x117] sm:$0xff]
      %v2194 = vsel %vm1546, %v2162, -inf
      %v2195 = vsel %vm1547, %v2163, -inf
      %v2196 = vsel %vm1548, %v2164, -inf
      %v2197 = vsel %vm1549, %v2165, -inf
      %v2198 = vsel %vm1550, %v2166, -inf
      %v2199 = vsel %vm1551, %v2167, -inf
      %v2200 = vsel %vm1552, %v2168, -inf
      %v2201 = vsel %vm1553, %v2169, -inf
      %v2202 = vsel %vm1554, %v2170, -inf
      %v2203 = vsel %vm1555, %v2171, -inf
      %v2204 = vsel %vm1556, %v2172, -inf
      %v2205 = vsel %vm1557, %v2173, -inf
      %v2206 = vsel %vm1558, %v2174, -inf
      %v2207 = vsel %vm1559, %v2175, -inf
      %v2208 = vsel %vm1560, %v2176, -inf
      %v2209 = vsel %vm1561, %v2177, -inf
      %v2210 = vsel %vm1562, %v2178, -inf
      %v2211 = vsel %vm1563, %v2179, -inf
      %v2212 = vsel %vm1564, %v2180, -inf
      %v2213 = vsel %vm1565, %v2181, -inf
      %v2214 = vsel %vm1566, %v2182, -inf
      %v2215 = vsel %vm1567, %v2183, -inf
      %v2216 = vsel %vm1568, %v2184, -inf
      %v2217 = vsel %vm1569, %v2185, -inf
      %v2218 = vsel %vm1570, %v2186, -inf
      %v2219 = vsel %vm1571, %v2187, -inf
      %v2220 = vsel %vm1572, %v2188, -inf
      %v2221 = vsel %vm1573, %v2189, -inf
      %v2222 = vsel %vm1574, %v2190, -inf
      %v2223 = vsel %vm1575, %v2191, -inf
      %v2224 = vsel %vm1576, %v2192, -inf
      %v2225 = vsel %vm1577, %v2193, -inf
      %v2226 = vmax.f32 %v2130, %v2194
      %v2227 = vmax.f32 %v2131, %v2195
      %v2228 = vmax.f32 %v2132, %v2196
      %v2229 = vmax.f32 %v2133, %v2197
      %v2230 = vmax.f32 %v2134, %v2198
      %v2231 = vmax.f32 %v2135, %v2199
      %v2232 = vmax.f32 %v2136, %v2200
      %v2233 = vmax.f32 %v2137, %v2201
      %v2234 = vmax.f32 %v2138, %v2202
      %v2235 = vmax.f32 %v2139, %v2203
      %v2236 = vmax.f32 %v2140, %v2204
      %v2237 = vmax.f32 %v2141, %v2205
      %v2238 = vmax.f32 %v2142, %v2206
      %v2239 = vmax.f32 %v2143, %v2207
      %v2240 = vmax.f32 %v2144, %v2208
      %v2241 = vmax.f32 %v2145, %v2209
      %v2242 = vmax.f32 %v2146, %v2210
      %v2243 = vmax.f32 %v2147, %v2211
      %v2244 = vmax.f32 %v2148, %v2212
      %v2245 = vmax.f32 %v2149, %v2213
      %v2246 = vmax.f32 %v2150, %v2214
      %v2247 = vmax.f32 %v2151, %v2215
      %v2248 = vmax.f32 %v2152, %v2216
      %v2249 = vmax.f32 %v2153, %v2217
      %v2250 = vmax.f32 %v2154, %v2218
      %v2251 = vmax.f32 %v2155, %v2219
      %v2252 = vmax.f32 %v2156, %v2220
      %v2253 = vmax.f32 %v2157, %v2221
      %v2254 = vmax.f32 %v2158, %v2222
      %v2255 = vmax.f32 %v2159, %v2223
      %v2256 = vmax.f32 %v2160, %v2224
      %v2257 = vmax.f32 %v2161, %v2225
      %v2258 = vld [vmem:[#allocation2 + $0x21] sm:$0xff]
      %v2259 = vld [vmem:[#allocation2 + $0x29] sm:$0xff]
      %v2260 = vld [vmem:[#allocation2 + $0x31] sm:$0xff]
      %v2261 = vld [vmem:[#allocation2 + $0x39] sm:$0xff]
      %v2262 = vld [vmem:[#allocation2 + $0x41] sm:$0xff]
      %v2263 = vld [vmem:[#allocation2 + $0x49] sm:$0xff]
      %v2264 = vld [vmem:[#allocation2 + $0x51] sm:$0xff]
      %v2265 = vld [vmem:[#allocation2 + $0x59] sm:$0xff]
      %v2266 = vld [vmem:[#allocation2 + $0x61] sm:$0xff]
      %v2267 = vld [vmem:[#allocation2 + $0x69] sm:$0xff]
      %v2268 = vld [vmem:[#allocation2 + $0x71] sm:$0xff]
      %v2269 = vld [vmem:[#allocation2 + $0x79] sm:$0xff]
      %v2270 = vld [vmem:[#allocation2 + $0x81] sm:$0xff]
      %v2271 = vld [vmem:[#allocation2 + $0x89] sm:$0xff]
      %v2272 = vld [vmem:[#allocation2 + $0x91] sm:$0xff]
      %v2273 = vld [vmem:[#allocation2 + $0x99] sm:$0xff]
      %v2274 = vld [vmem:[#allocation2 + $0xa1] sm:$0xff]
      %v2275 = vld [vmem:[#allocation2 + $0xa9] sm:$0xff]
      %v2276 = vld [vmem:[#allocation2 + $0xb1] sm:$0xff]
      %v2277 = vld [vmem:[#allocation2 + $0xb9] sm:$0xff]
      %v2278 = vld [vmem:[#allocation2 + $0xc1] sm:$0xff]
      %v2279 = vld [vmem:[#allocation2 + $0xc9] sm:$0xff]
      %v2280 = vld [vmem:[#allocation2 + $0xd1] sm:$0xff]
      %v2281 = vld [vmem:[#allocation2 + $0xd9] sm:$0xff]
      %v2282 = vld [vmem:[#allocation2 + $0xe1] sm:$0xff]
      %v2283 = vld [vmem:[#allocation2 + $0xe9] sm:$0xff]
      %v2284 = vld [vmem:[#allocation2 + $0xf1] sm:$0xff]
      %v2285 = vld [vmem:[#allocation2 + $0xf9] sm:$0xff]
      %v2286 = vld [vmem:[#allocation2 + $0x101] sm:$0xff]
      %v2287 = vld [vmem:[#allocation2 + $0x109] sm:$0xff]
      %v2288 = vld [vmem:[#allocation2 + $0x111] sm:$0xff]
      %v2289 = vld [vmem:[#allocation2 + $0x119] sm:$0xff]
      %v2290 = vsel %vm1674, %v2258, -inf
      %v2291 = vsel %vm1675, %v2259, -inf
      %v2292 = vsel %vm1676, %v2260, -inf
      %v2293 = vsel %vm1677, %v2261, -inf
      %v2294 = vsel %vm1678, %v2262, -inf
      %v2295 = vsel %vm1679, %v2263, -inf
      %v2296 = vsel %vm1680, %v2264, -inf
      %v2297 = vsel %vm1681, %v2265, -inf
      %v2298 = vsel %vm1682, %v2266, -inf
      %v2299 = vsel %vm1683, %v2267, -inf
      %v2300 = vsel %vm1684, %v2268, -inf
      %v2301 = vsel %vm1685, %v2269, -inf
      %v2302 = vsel %vm1686, %v2270, -inf
      %v2303 = vsel %vm1687, %v2271, -inf
      %v2304 = vsel %vm1688, %v2272, -inf
      %v2305 = vsel %vm1689, %v2273, -inf
      %v2306 = vsel %vm1690, %v2274, -inf
      %v2307 = vsel %vm1691, %v2275, -inf
      %v2308 = vsel %vm1692, %v2276, -inf
      %v2309 = vsel %vm1693, %v2277, -inf
      %v2310 = vsel %vm1694, %v2278, -inf
      %v2311 = vsel %vm1695, %v2279, -inf
      %v2312 = vsel %vm1696, %v2280, -inf
      %v2313 = vsel %vm1697, %v2281, -inf
      %v2314 = vsel %vm1698, %v2282, -inf
      %v2315 = vsel %vm1699, %v2283, -inf
      %v2316 = vsel %vm1700, %v2284, -inf
      %v2317 = vsel %vm1701, %v2285, -inf
      %v2318 = vsel %vm1702, %v2286, -inf
      %v2319 = vsel %vm1703, %v2287, -inf
      %v2320 = vsel %vm1704, %v2288, -inf
      %v2321 = vsel %vm1705, %v2289, -inf
      %v2322 = vmax.f32 %v2226, %v2290
      %v2323 = vmax.f32 %v2227, %v2291
      %v2324 = vmax.f32 %v2228, %v2292
      %v2325 = vmax.f32 %v2229, %v2293
      %v2326 = vmax.f32 %v2230, %v2294
      %v2327 = vmax.f32 %v2231, %v2295
      %v2328 = vmax.f32 %v2232, %v2296
      %v2329 = vmax.f32 %v2233, %v2297
      %v2330 = vmax.f32 %v2234, %v2298
      %v2331 = vmax.f32 %v2235, %v2299
      %v2332 = vmax.f32 %v2236, %v2300
      %v2333 = vmax.f32 %v2237, %v2301
      %v2334 = vmax.f32 %v2238, %v2302
      %v2335 = vmax.f32 %v2239, %v2303
      %v2336 = vmax.f32 %v2240, %v2304
      %v2337 = vmax.f32 %v2241, %v2305
      %v2338 = vmax.f32 %v2242, %v2306
      %v2339 = vmax.f32 %v2243, %v2307
      %v2340 = vmax.f32 %v2244, %v2308
      %v2341 = vmax.f32 %v2245, %v2309
      %v2342 = vmax.f32 %v2246, %v2310
      %v2343 = vmax.f32 %v2247, %v2311
      %v2344 = vmax.f32 %v2248, %v2312
      %v2345 = vmax.f32 %v2249, %v2313
      %v2346 = vmax.f32 %v2250, %v2314
      %v2347 = vmax.f32 %v2251, %v2315
      %v2348 = vmax.f32 %v2252, %v2316
      %v2349 = vmax.f32 %v2253, %v2317
      %v2350 = vmax.f32 %v2254, %v2318
      %v2351 = vmax.f32 %v2255, %v2319
      %v2352 = vmax.f32 %v2256, %v2320
      %v2353 = vmax.f32 %v2257, %v2321
      %v2354 = vld [vmem:[#allocation2 + $0x22] sm:$0xff]
      %v2355 = vld [vmem:[#allocation2 + $0x2a] sm:$0xff]
      %v2356 = vld [vmem:[#allocation2 + $0x32] sm:$0xff]
      %v2357 = vld [vmem:[#allocation2 + $0x3a] sm:$0xff]
      %v2358 = vld [vmem:[#allocation2 + $0x42] sm:$0xff]
      %v2359 = vld [vmem:[#allocation2 + $0x4a] sm:$0xff]
      %v2360 = vld [vmem:[#allocation2 + $0x52] sm:$0xff]
      %v2361 = vld [vmem:[#allocation2 + $0x5a] sm:$0xff]
      %v2362 = vld [vmem:[#allocation2 + $0x62] sm:$0xff]
      %v2363 = vld [vmem:[#allocation2 + $0x6a] sm:$0xff]
      %v2364 = vld [vmem:[#allocation2 + $0x72] sm:$0xff]
      %v2365 = vld [vmem:[#allocation2 + $0x7a] sm:$0xff]
      %v2366 = vld [vmem:[#allocation2 + $0x82] sm:$0xff]
      %v2367 = vld [vmem:[#allocation2 + $0x8a] sm:$0xff]
      %v2368 = vld [vmem:[#allocation2 + $0x92] sm:$0xff]
      %v2369 = vld [vmem:[#allocation2 + $0x9a] sm:$0xff]
      %v2370 = vld [vmem:[#allocation2 + $0xa2] sm:$0xff]
      %v2371 = vld [vmem:[#allocation2 + $0xaa] sm:$0xff]
      %v2372 = vld [vmem:[#allocation2 + $0xb2] sm:$0xff]
      %v2373 = vld [vmem:[#allocation2 + $0xba] sm:$0xff]
      %v2374 = vld [vmem:[#allocation2 + $0xc2] sm:$0xff]
      %v2375 = vld [vmem:[#allocation2 + $0xca] sm:$0xff]
      %v2376 = vld [vmem:[#allocation2 + $0xd2] sm:$0xff]
      %v2377 = vld [vmem:[#allocation2 + $0xda] sm:$0xff]
      %v2378 = vld [vmem:[#allocation2 + $0xe2] sm:$0xff]
      %v2379 = vld [vmem:[#allocation2 + $0xea] sm:$0xff]
      %v2380 = vld [vmem:[#allocation2 + $0xf2] sm:$0xff]
      %v2381 = vld [vmem:[#allocation2 + $0xfa] sm:$0xff]
      %v2382 = vld [vmem:[#allocation2 + $0x102] sm:$0xff]
      %v2383 = vld [vmem:[#allocation2 + $0x10a] sm:$0xff]
      %v2384 = vld [vmem:[#allocation2 + $0x112] sm:$0xff]
      %v2385 = vld [vmem:[#allocation2 + $0x11a] sm:$0xff]
      %v2386 = vsel %vm1802, %v2354, -inf
      %v2387 = vsel %vm1803, %v2355, -inf
      %v2388 = vsel %vm1804, %v2356, -inf
      %v2389 = vsel %vm1805, %v2357, -inf
      %v2390 = vsel %vm1806, %v2358, -inf
      %v2391 = vsel %vm1807, %v2359, -inf
      %v2392 = vsel %vm1808, %v2360, -inf
      %v2393 = vsel %vm1809, %v2361, -inf
      %v2394 = vsel %vm1810, %v2362, -inf
      %v2395 = vsel %vm1811, %v2363, -inf
      %v2396 = vsel %vm1812, %v2364, -inf
      %v2397 = vsel %vm1813, %v2365, -inf
      %v2398 = vsel %vm1814, %v2366, -inf
      %v2399 = vsel %vm1815, %v2367, -inf
      %v2400 = vsel %vm1816, %v2368, -inf
      %v2401 = vsel %vm1817, %v2369, -inf
      %v2402 = vsel %vm1818, %v2370, -inf
      %v2403 = vsel %vm1819, %v2371, -inf
      %v2404 = vsel %vm1820, %v2372, -inf
      %v2405 = vsel %vm1821, %v2373, -inf
      %v2406 = vsel %vm1822, %v2374, -inf
      %v2407 = vsel %vm1823, %v2375, -inf
      %v2408 = vsel %vm1824, %v2376, -inf
      %v2409 = vsel %vm1825, %v2377, -inf
      %v2410 = vsel %vm1826, %v2378, -inf
      %v2411 = vsel %vm1827, %v2379, -inf
      %v2412 = vsel %vm1828, %v2380, -inf
      %v2413 = vsel %vm1829, %v2381, -inf
      %v2414 = vsel %vm1830, %v2382, -inf
      %v2415 = vsel %vm1831, %v2383, -inf
      %v2416 = vsel %vm1832, %v2384, -inf
      %v2417 = vsel %vm1833, %v2385, -inf
      %v2418 = vmax.f32 %v2322, %v2386
      %v2419 = vmax.f32 %v2323, %v2387
      %v2420 = vmax.f32 %v2324, %v2388
      %v2421 = vmax.f32 %v2325, %v2389
      %v2422 = vmax.f32 %v2326, %v2390
      %v2423 = vmax.f32 %v2327, %v2391
      %v2424 = vmax.f32 %v2328, %v2392
      %v2425 = vmax.f32 %v2329, %v2393
      %v2426 = vmax.f32 %v2330, %v2394
      %v2427 = vmax.f32 %v2331, %v2395
      %v2428 = vmax.f32 %v2332, %v2396
      %v2429 = vmax.f32 %v2333, %v2397
      %v2430 = vmax.f32 %v2334, %v2398
      %v2431 = vmax.f32 %v2335, %v2399
      %v2432 = vmax.f32 %v2336, %v2400
      %v2433 = vmax.f32 %v2337, %v2401
      %v2434 = vmax.f32 %v2338, %v2402
      %v2435 = vmax.f32 %v2339, %v2403
      %v2436 = vmax.f32 %v2340, %v2404
      %v2437 = vmax.f32 %v2341, %v2405
      %v2438 = vmax.f32 %v2342, %v2406
      %v2439 = vmax.f32 %v2343, %v2407
      %v2440 = vmax.f32 %v2344, %v2408
      %v2441 = vmax.f32 %v2345, %v2409
      %v2442 = vmax.f32 %v2346, %v2410
      %v2443 = vmax.f32 %v2347, %v2411
      %v2444 = vmax.f32 %v2348, %v2412
      %v2445 = vmax.f32 %v2349, %v2413
      %v2446 = vmax.f32 %v2350, %v2414
      %v2447 = vmax.f32 %v2351, %v2415
      %v2448 = vmax.f32 %v2352, %v2416
      %v2449 = vmax.f32 %v2353, %v2417
      %2450 = vst.msk [vmem:[#allocation2 + $0x20] sm:$0xff] %vm896, %v2418
      %2451 = vst.msk [vmem:[#allocation2 + $0x28] sm:$0xff] %vm896, %v2419
      %2452 = vst.msk [vmem:[#allocation2 + $0x30] sm:$0xff] %vm896, %v2420
      %2453 = vst.msk [vmem:[#allocation2 + $0x38] sm:$0xff] %vm896, %v2421
      %2454 = vst.msk [vmem:[#allocation2 + $0x40] sm:$0xff] %vm896, %v2422
      %2455 = vst.msk [vmem:[#allocation2 + $0x48] sm:$0xff] %vm896, %v2423
      %2456 = vst.msk [vmem:[#allocation2 + $0x50] sm:$0xff] %vm896, %v2424
      %2457 = vst.msk [vmem:[#allocation2 + $0x58] sm:$0xff] %vm896, %v2425
      %2458 = vst.msk [vmem:[#allocation2 + $0x60] sm:$0xff] %vm896, %v2426
      %2459 = vst.msk [vmem:[#allocation2 + $0x68] sm:$0xff] %vm896, %v2427
      %2460 = vst.msk [vmem:[#allocation2 + $0x70] sm:$0xff] %vm896, %v2428
      %2461 = vst.msk [vmem:[#allocation2 + $0x78] sm:$0xff] %vm896, %v2429
      %2462 = vst.msk [vmem:[#allocation2 + $0x80] sm:$0xff] %vm896, %v2430
      %2463 = vst.msk [vmem:[#allocation2 + $0x88] sm:$0xff] %vm896, %v2431
      %2464 = vst.msk [vmem:[#allocation2 + $0x90] sm:$0xff] %vm896, %v2432
      %2465 = vst.msk [vmem:[#allocation2 + $0x98] sm:$0xff] %vm896, %v2433
      %2466 = vst.msk [vmem:[#allocation2 + $0xa0] sm:$0xff] %vm896, %v2434
      %2467 = vst.msk [vmem:[#allocation2 + $0xa8] sm:$0xff] %vm896, %v2435
      %2468 = vst.msk [vmem:[#allocation2 + $0xb0] sm:$0xff] %vm896, %v2436
      %2469 = vst.msk [vmem:[#allocation2 + $0xb8] sm:$0xff] %vm896, %v2437
      %2470 = vst.msk [vmem:[#allocation2 + $0xc0] sm:$0xff] %vm896, %v2438
      %2471 = vst.msk [vmem:[#allocation2 + $0xc8] sm:$0xff] %vm896, %v2439
      %2472 = vst.msk [vmem:[#allocation2 + $0xd0] sm:$0xff] %vm896, %v2440
      %2473 = vst.msk [vmem:[#allocation2 + $0xd8] sm:$0xff] %vm896, %v2441
      %2474 = vst.msk [vmem:[#allocation2 + $0xe0] sm:$0xff] %vm896, %v2442
      %2475 = vst.msk [vmem:[#allocation2 + $0xe8] sm:$0xff] %vm896, %v2443
      %2476 = vst.msk [vmem:[#allocation2 + $0xf0] sm:$0xff] %vm896, %v2444
      %2477 = vst.msk [vmem:[#allocation2 + $0xf8] sm:$0xff] %vm896, %v2445
      %2478 = vst.msk [vmem:[#allocation2 + $0x100] sm:$0xff] %vm896, %v2446
      %2479 = vst.msk [vmem:[#allocation2 + $0x108] sm:$0xff] %vm896, %v2447
      %2480 = vst.msk [vmem:[#allocation2 + $0x110] sm:$0xff] %vm896, %v2448
      %2481 = vst.msk [vmem:[#allocation2 + $0x118] sm:$0xff] %vm896, %v2449
      %v2482 = vld [vmem:[#allocation2] sm:$0xff]
      %v2483 = vld [vmem:[#allocation2 + $0x8] sm:$0xff]
      %v2484 = vld [vmem:[#allocation2 + $0x10] sm:$0xff]
      %v2485 = vld [vmem:[#allocation2 + $0x18] sm:$0xff]
      %v2486 = vld [vmem:[#allocation2 + $0x20] sm:$0xff]
      %v2487 = vld [vmem:[#allocation2 + $0x28] sm:$0xff]
      %v2488 = vld [vmem:[#allocation2 + $0x30] sm:$0xff]
      %v2489 = vld [vmem:[#allocation2 + $0x38] sm:$0xff]
      %v2490 = vld [vmem:[#allocation2 + $0x40] sm:$0xff]
      %v2491 = vld [vmem:[#allocation2 + $0x48] sm:$0xff]
      %v2492 = vld [vmem:[#allocation2 + $0x50] sm:$0xff]
      %v2493 = vld [vmem:[#allocation2 + $0x58] sm:$0xff]
      %v2494 = vld [vmem:[#allocation2 + $0x60] sm:$0xff]
      %v2495 = vld [vmem:[#allocation2 + $0x68] sm:$0xff]
      %v2496 = vld [vmem:[#allocation2 + $0x70] sm:$0xff]
      %v2497 = vld [vmem:[#allocation2 + $0x78] sm:$0xff]
      %v2498 = vld [vmem:[#allocation2 + $0x80] sm:$0xff]
      %v2499 = vld [vmem:[#allocation2 + $0x88] sm:$0xff]
      %v2500 = vld [vmem:[#allocation2 + $0x90] sm:$0xff]
      %v2501 = vld [vmem:[#allocation2 + $0x98] sm:$0xff]
      %v2502 = vld [vmem:[#allocation2 + $0xa0] sm:$0xff]
      %v2503 = vld [vmem:[#allocation2 + $0xa8] sm:$0xff]
      %v2504 = vld [vmem:[#allocation2 + $0xb0] sm:$0xff]
      %v2505 = vld [vmem:[#allocation2 + $0xb8] sm:$0xff]
      %v2506 = vld [vmem:[#allocation2 + $0xc0] sm:$0xff]
      %v2507 = vld [vmem:[#allocation2 + $0xc8] sm:$0xff]
      %v2508 = vld [vmem:[#allocation2 + $0xd0] sm:$0xff]
      %v2509 = vld [vmem:[#allocation2 + $0xd8] sm:$0xff]
      %v2510 = vld [vmem:[#allocation2 + $0xe0] sm:$0xff]
      %v2511 = vld [vmem:[#allocation2 + $0xe8] sm:$0xff]
      %v2512 = vld [vmem:[#allocation2 + $0xf0] sm:$0xff]
      %v2513 = vld [vmem:[#allocation2 + $0xf8] sm:$0xff]
      %v2514 = vld [vmem:[#allocation2 + $0x100] sm:$0xff]
      %v2515 = vld [vmem:[#allocation2 + $0x108] sm:$0xff]
      %v2516 = vmax.f32 %v2482, %v2484
      %v2517 = vmax.f32 %v2483, %v2485
      %v2518 = vmax.f32 %v2484, %v2486
      %v2519 = vmax.f32 %v2485, %v2487
      %v2520 = vmax.f32 %v2486, %v2488
      %v2521 = vmax.f32 %v2487, %v2489
      %v2522 = vmax.f32 %v2488, %v2490
      %v2523 = vmax.f32 %v2489, %v2491
      %v2524 = vmax.f32 %v2490, %v2492
      %v2525 = vmax.f32 %v2491, %v2493
      %v2526 = vmax.f32 %v2492, %v2494
      %v2527 = vmax.f32 %v2493, %v2495
      %v2528 = vmax.f32 %v2494, %v2496
      %v2529 = vmax.f32 %v2495, %v2497
      %v2530 = vmax.f32 %v2496, %v2498
      %v2531 = vmax.f32 %v2497, %v2499
      %v2532 = vmax.f32 %v2498, %v2500
      %v2533 = vmax.f32 %v2499, %v2501
      %v2534 = vmax.f32 %v2500, %v2502
      %v2535 = vmax.f32 %v2501, %v2503
      %v2536 = vmax.f32 %v2502, %v2504
      %v2537 = vmax.f32 %v2503, %v2505
      %v2538 = vmax.f32 %v2504, %v2506
      %v2539 = vmax.f32 %v2505, %v2507
      %v2540 = vmax.f32 %v2506, %v2508
      %v2541 = vmax.f32 %v2507, %v2509
      %v2542 = vmax.f32 %v2508, %v2510
      %v2543 = vmax.f32 %v2509, %v2511
      %v2544 = vmax.f32 %v2510, %v2512
      %v2545 = vmax.f32 %v2511, %v2513
      %v2546 = vmax.f32 %v2512, %v2514
      %v2547 = vmax.f32 %v2513, %v2515
      %v2548 = vmax.f32 %v2516, %v2418
      %v2549 = vmax.f32 %v2517, %v2419
      %v2550 = vmax.f32 %v2518, %v2420
      %v2551 = vmax.f32 %v2519, %v2421
      %v2552 = vmax.f32 %v2520, %v2422
      %v2553 = vmax.f32 %v2521, %v2423
      %v2554 = vmax.f32 %v2522, %v2424
      %v2555 = vmax.f32 %v2523, %v2425
      %v2556 = vmax.f32 %v2524, %v2426
      %v2557 = vmax.f32 %v2525, %v2427
      %v2558 = vmax.f32 %v2526, %v2428
      %v2559 = vmax.f32 %v2527, %v2429
      %v2560 = vmax.f32 %v2528, %v2430
      %v2561 = vmax.f32 %v2529, %v2431
      %v2562 = vmax.f32 %v2530, %v2432
      %v2563 = vmax.f32 %v2531, %v2433
      %v2564 = vmax.f32 %v2532, %v2434
      %v2565 = vmax.f32 %v2533, %v2435
      %v2566 = vmax.f32 %v2534, %v2436
      %v2567 = vmax.f32 %v2535, %v2437
      %v2568 = vmax.f32 %v2536, %v2438
      %v2569 = vmax.f32 %v2537, %v2439
      %v2570 = vmax.f32 %v2538, %v2440
      %v2571 = vmax.f32 %v2539, %v2441
      %v2572 = vmax.f32 %v2540, %v2442
      %v2573 = vmax.f32 %v2541, %v2443
      %v2574 = vmax.f32 %v2542, %v2444
      %v2575 = vmax.f32 %v2543, %v2445
      %v2576 = vmax.f32 %v2544, %v2446
      %v2577 = vmax.f32 %v2545, %v2447
      %v2578 = vmax.f32 %v2546, %v2448
      %v2579 = vmax.f32 %v2547, %v2449
      %v2580 = vld [vmem:[#allocation2 + $0x110] sm:$0xff]
      %v2581 = vld [vmem:[#allocation2 + $0x118] sm:$0xff]
      %v2582 = vld [vmem:[#allocation2 + $0x120] sm:$0xff]
      %v2583 = vld [vmem:[#allocation2 + $0x128] sm:$0xff]
      %v2584 = vmax.f32 %v2548, %v2488
      %v2585 = vmax.f32 %v2549, %v2489
      %v2586 = vmax.f32 %v2550, %v2490
      %v2587 = vmax.f32 %v2551, %v2491
      %v2588 = vmax.f32 %v2552, %v2492
      %v2589 = vmax.f32 %v2553, %v2493
      %v2590 = vmax.f32 %v2554, %v2494
      %v2591 = vmax.f32 %v2555, %v2495
      %v2592 = vmax.f32 %v2556, %v2496
      %v2593 = vmax.f32 %v2557, %v2497
      %v2594 = vmax.f32 %v2558, %v2498
      %v2595 = vmax.f32 %v2559, %v2499
      %v2596 = vmax.f32 %v2560, %v2500
      %v2597 = vmax.f32 %v2561, %v2501
      %v2598 = vmax.f32 %v2562, %v2502
      %v2599 = vmax.f32 %v2563, %v2503
      %v2600 = vmax.f32 %v2564, %v2504
      %v2601 = vmax.f32 %v2565, %v2505
      %v2602 = vmax.f32 %v2566, %v2506
      %v2603 = vmax.f32 %v2567, %v2507
      %v2604 = vmax.f32 %v2568, %v2508
      %v2605 = vmax.f32 %v2569, %v2509
      %v2606 = vmax.f32 %v2570, %v2510
      %v2607 = vmax.f32 %v2571, %v2511
      %v2608 = vmax.f32 %v2572, %v2512
      %v2609 = vmax.f32 %v2573, %v2513
      %v2610 = vmax.f32 %v2574, %v2514
      %v2611 = vmax.f32 %v2575, %v2515
      %v2612 = vmax.f32 %v2576, %v2580
      %v2613 = vmax.f32 %v2577, %v2581
      %v2614 = vmax.f32 %v2578, %v2582
      %v2615 = vmax.f32 %v2579, %v2583
      %v2616 = vld [vmem:[#allocation2 + $0x130] sm:$0xff]
      %v2617 = vld [vmem:[#allocation2 + $0x138] sm:$0xff]
      %v2618 = vmax.f32 %v2584, %v2490
      %v2619 = vmax.f32 %v2585, %v2491
      %v2620 = vmax.f32 %v2586, %v2492
      %v2621 = vmax.f32 %v2587, %v2493
      %v2622 = vmax.f32 %v2588, %v2494
      %v2623 = vmax.f32 %v2589, %v2495
      %v2624 = vmax.f32 %v2590, %v2496
      %v2625 = vmax.f32 %v2591, %v2497
      %v2626 = vmax.f32 %v2592, %v2498
      %v2627 = vmax.f32 %v2593, %v2499
      %v2628 = vmax.f32 %v2594, %v2500
      %v2629 = vmax.f32 %v2595, %v2501
      %v2630 = vmax.f32 %v2596, %v2502
      %v2631 = vmax.f32 %v2597, %v2503
      %v2632 = vmax.f32 %v2598, %v2504
      %v2633 = vmax.f32 %v2599, %v2505
      %v2634 = vmax.f32 %v2600, %v2506
      %v2635 = vmax.f32 %v2601, %v2507
      %v2636 = vmax.f32 %v2602, %v2508
      %v2637 = vmax.f32 %v2603, %v2509
      %v2638 = vmax.f32 %v2604, %v2510
      %v2639 = vmax.f32 %v2605, %v2511
      %v2640 = vmax.f32 %v2606, %v2512
      %v2641 = vmax.f32 %v2607, %v2513
      %v2642 = vmax.f32 %v2608, %v2514
      %v2643 = vmax.f32 %v2609, %v2515
      %v2644 = vmax.f32 %v2610, %v2580
      %v2645 = vmax.f32 %v2611, %v2581
      %v2646 = vmax.f32 %v2612, %v2582
      %v2647 = vmax.f32 %v2613, %v2583
      %v2648 = vmax.f32 %v2614, %v2616
      %v2649 = vmax.f32 %v2615, %v2617
      %2650 = vst.msk [vmem:[#allocation2 + $0x20] sm:$0xff] %vm896, %v2618
      %2651 = vst.msk [vmem:[#allocation2 + $0x28] sm:$0xff] %vm896, %v2619
      %2652 = vst.msk [vmem:[#allocation2 + $0x30] sm:$0xff] %vm896, %v2620
      %2653 = vst.msk [vmem:[#allocation2 + $0x38] sm:$0xff] %vm896, %v2621
      %2654 = vst.msk [vmem:[#allocation2 + $0x40] sm:$0xff] %vm896, %v2622
      %2655 = vst.msk [vmem:[#allocation2 + $0x48] sm:$0xff] %vm896, %v2623
      %2656 = vst.msk [vmem:[#allocation2 + $0x50] sm:$0xff] %vm896, %v2624
      %2657 = vst.msk [vmem:[#allocation2 + $0x58] sm:$0xff] %vm896, %v2625
      %2658 = vst.msk [vmem:[#allocation2 + $0x60] sm:$0xff] %vm896, %v2626
      %2659 = vst.msk [vmem:[#allocation2 + $0x68] sm:$0xff] %vm896, %v2627
      %2660 = vst.msk [vmem:[#allocation2 + $0x70] sm:$0xff] %vm896, %v2628
      %2661 = vst.msk [vmem:[#allocation2 + $0x78] sm:$0xff] %vm896, %v2629
      %2662 = vst.msk [vmem:[#allocation2 + $0x80] sm:$0xff] %vm896, %v2630
      %2663 = vst.msk [vmem:[#allocation2 + $0x88] sm:$0xff] %vm896, %v2631
      %2664 = vst.msk [vmem:[#allocation2 + $0x90] sm:$0xff] %vm896, %v2632
      %2665 = vst.msk [vmem:[#allocation2 + $0x98] sm:$0xff] %vm896, %v2633
      %2666 = vst.msk [vmem:[#allocation2 + $0xa0] sm:$0xff] %vm896, %v2634
      %2667 = vst.msk [vmem:[#allocation2 + $0xa8] sm:$0xff] %vm896, %v2635
      %2668 = vst.msk [vmem:[#allocation2 + $0xb0] sm:$0xff] %vm896, %v2636
      %2669 = vst.msk [vmem:[#allocation2 + $0xb8] sm:$0xff] %vm896, %v2637
      %2670 = vst.msk [vmem:[#allocation2 + $0xc0] sm:$0xff] %vm896, %v2638
      %2671 = vst.msk [vmem:[#allocation2 + $0xc8] sm:$0xff] %vm896, %v2639
      %2672 = vst.msk [vmem:[#allocation2 + $0xd0] sm:$0xff] %vm896, %v2640
      %2673 = vst.msk [vmem:[#allocation2 + $0xd8] sm:$0xff] %vm896, %v2641
      %2674 = vst.msk [vmem:[#allocation2 + $0xe0] sm:$0xff] %vm896, %v2642
      %2675 = vst.msk [vmem:[#allocation2 + $0xe8] sm:$0xff] %vm896, %v2643
      %2676 = vst.msk [vmem:[#allocation2 + $0xf0] sm:$0xff] %vm896, %v2644
      %2677 = vst.msk [vmem:[#allocation2 + $0xf8] sm:$0xff] %vm896, %v2645
      %2678 = vst.msk [vmem:[#allocation2 + $0x100] sm:$0xff] %vm896, %v2646
      %2679 = vst.msk [vmem:[#allocation2 + $0x108] sm:$0xff] %vm896, %v2647
      %2680 = vst.msk [vmem:[#allocation2 + $0x110] sm:$0xff] %vm896, %v2648
      %2681 = vst.msk [vmem:[#allocation2 + $0x118] sm:$0xff] %vm896, %v2649
      %v2682 = vld [vmem:[#allocation2 + $0x1e] sm:$0xff]
      %v2683 = vld [vmem:[#allocation2 + $0x26] sm:$0xff]
      %v2684 = vld [vmem:[#allocation2 + $0x2e] sm:$0xff]
      %v2685 = vld [vmem:[#allocation2 + $0x36] sm:$0xff]
      %v2686 = vld [vmem:[#allocation2 + $0x3e] sm:$0xff]
      %v2687 = vld [vmem:[#allocation2 + $0x46] sm:$0xff]
      %v2688 = vld [vmem:[#allocation2 + $0x4e] sm:$0xff]
      %v2689 = vld [vmem:[#allocation2 + $0x56] sm:$0xff]
      %v2690 = vld [vmem:[#allocation2 + $0x5e] sm:$0xff]
      %v2691 = vld [vmem:[#allocation2 + $0x66] sm:$0xff]
      %v2692 = vld [vmem:[#allocation2 + $0x6e] sm:$0xff]
      %v2693 = vld [vmem:[#allocation2 + $0x76] sm:$0xff]
      %v2694 = vld [vmem:[#allocation2 + $0x7e] sm:$0xff]
      %v2695 = vld [vmem:[#allocation2 + $0x86] sm:$0xff]
      %v2696 = vld [vmem:[#allocation2 + $0x8e] sm:$0xff]
      %v2697 = vld [vmem:[#allocation2 + $0x96] sm:$0xff]
      %v2698 = vld [vmem:[#allocation2 + $0x9e] sm:$0xff]
      %v2699 = vld [vmem:[#allocation2 + $0xa6] sm:$0xff]
      %v2700 = vld [vmem:[#allocation2 + $0xae] sm:$0xff]
      %v2701 = vld [vmem:[#allocation2 + $0xb6] sm:$0xff]
      %v2702 = vld [vmem:[#allocation2 + $0xbe] sm:$0xff]
      %v2703 = vld [vmem:[#allocation2 + $0xc6] sm:$0xff]
      %v2704 = vld [vmem:[#allocation2 + $0xce] sm:$0xff]
      %v2705 = vld [vmem:[#allocation2 + $0xd6] sm:$0xff]
      %v2706 = vld [vmem:[#allocation2 + $0xde] sm:$0xff]
      %v2707 = vld [vmem:[#allocation2 + $0xe6] sm:$0xff]
      %v2708 = vld [vmem:[#allocation2 + $0xee] sm:$0xff]
      %v2709 = vld [vmem:[#allocation2 + $0xf6] sm:$0xff]
      %v2710 = vld [vmem:[#allocation2 + $0xfe] sm:$0xff]
      %v2711 = vld [vmem:[#allocation2 + $0x106] sm:$0xff]
      %v2712 = vld [vmem:[#allocation2 + $0x10e] sm:$0xff]
      %v2713 = vld [vmem:[#allocation2 + $0x116] sm:$0xff]
      %v2714 = vsel %vm1418, %v2682, -inf
      %v2715 = vsel %vm1419, %v2683, -inf
      %v2716 = vsel %vm1420, %v2684, -inf
      %v2717 = vsel %vm1421, %v2685, -inf
      %v2718 = vsel %vm1422, %v2686, -inf
      %v2719 = vsel %vm1423, %v2687, -inf
      %v2720 = vsel %vm1424, %v2688, -inf
      %v2721 = vsel %vm1425, %v2689, -inf
      %v2722 = vsel %vm1426, %v2690, -inf
      %v2723 = vsel %vm1427, %v2691, -inf
      %v2724 = vsel %vm1428, %v2692, -inf
      %v2725 = vsel %vm1429, %v2693, -inf
      %v2726 = vsel %vm1430, %v2694, -inf
      %v2727 = vsel %vm1431, %v2695, -inf
      %v2728 = vsel %vm1432, %v2696, -inf
      %v2729 = vsel %vm1433, %v2697, -inf
      %v2730 = vsel %vm1434, %v2698, -inf
      %v2731 = vsel %vm1435, %v2699, -inf
      %v2732 = vsel %vm1436, %v2700, -inf
      %v2733 = vsel %vm1437, %v2701, -inf
      %v2734 = vsel %vm1438, %v2702, -inf
      %v2735 = vsel %vm1439, %v2703, -inf
      %v2736 = vsel %vm1440, %v2704, -inf
      %v2737 = vsel %vm1441, %v2705, -inf
      %v2738 = vsel %vm1442, %v2706, -inf
      %v2739 = vsel %vm1443, %v2707, -inf
      %v2740 = vsel %vm1444, %v2708, -inf
      %v2741 = vsel %vm1445, %v2709, -inf
      %v2742 = vsel %vm1446, %v2710, -inf
      %v2743 = vsel %vm1447, %v2711, -inf
      %v2744 = vsel %vm1448, %v2712, -inf
      %v2745 = vsel %vm1449, %v2713, -inf
      %v2746 = vmax.f32 %v2618, %v2714
      %v2747 = vmax.f32 %v2619, %v2715
      %v2748 = vmax.f32 %v2620, %v2716
      %v2749 = vmax.f32 %v2621, %v2717
      %v2750 = vmax.f32 %v2622, %v2718
      %v2751 = vmax.f32 %v2623, %v2719
      %v2752 = vmax.f32 %v2624, %v2720
      %v2753 = vmax.f32 %v2625, %v2721
      %v2754 = vmax.f32 %v2626, %v2722
      %v2755 = vmax.f32 %v2627, %v2723
      %v2756 = vmax.f32 %v2628, %v2724
      %v2757 = vmax.f32 %v2629, %v2725
      %v2758 = vmax.f32 %v2630, %v2726
      %v2759 = vmax.f32 %v2631, %v2727
      %v2760 = vmax.f32 %v2632, %v2728
      %v2761 = vmax.f32 %v2633, %v2729
      %v2762 = vmax.f32 %v2634, %v2730
      %v2763 = vmax.f32 %v2635, %v2731
      %v2764 = vmax.f32 %v2636, %v2732
      %v2765 = vmax.f32 %v2637, %v2733
      %v2766 = vmax.f32 %v2638, %v2734
      %v2767 = vmax.f32 %v2639, %v2735
      %v2768 = vmax.f32 %v2640, %v2736
      %v2769 = vmax.f32 %v2641, %v2737
      %v2770 = vmax.f32 %v2642, %v2738
      %v2771 = vmax.f32 %v2643, %v2739
      %v2772 = vmax.f32 %v2644, %v2740
      %v2773 = vmax.f32 %v2645, %v2741
      %v2774 = vmax.f32 %v2646, %v2742
      %v2775 = vmax.f32 %v2647, %v2743
      %v2776 = vmax.f32 %v2648, %v2744
      %v2777 = vmax.f32 %v2649, %v2745
      %v2778 = vld [vmem:[#allocation2 + $0x1f] sm:$0xff]
      %v2779 = vld [vmem:[#allocation2 + $0x27] sm:$0xff]
      %v2780 = vld [vmem:[#allocation2 + $0x2f] sm:$0xff]
      %v2781 = vld [vmem:[#allocation2 + $0x37] sm:$0xff]
      %v2782 = vld [vmem:[#allocation2 + $0x3f] sm:$0xff]
      %v2783 = vld [vmem:[#allocation2 + $0x47] sm:$0xff]
      %v2784 = vld [vmem:[#allocation2 + $0x4f] sm:$0xff]
      %v2785 = vld [vmem:[#allocation2 + $0x57] sm:$0xff]
      %v2786 = vld [vmem:[#allocation2 + $0x5f] sm:$0xff]
      %v2787 = vld [vmem:[#allocation2 + $0x67] sm:$0xff]
      %v2788 = vld [vmem:[#allocation2 + $0x6f] sm:$0xff]
      %v2789 = vld [vmem:[#allocation2 + $0x77] sm:$0xff]
      %v2790 = vld [vmem:[#allocation2 + $0x7f] sm:$0xff]
      %v2791 = vld [vmem:[#allocation2 + $0x87] sm:$0xff]
      %v2792 = vld [vmem:[#allocation2 + $0x8f] sm:$0xff]
      %v2793 = vld [vmem:[#allocation2 + $0x97] sm:$0xff]
      %v2794 = vld [vmem:[#allocation2 + $0x9f] sm:$0xff]
      %v2795 = vld [vmem:[#allocation2 + $0xa7] sm:$0xff]
      %v2796 = vld [vmem:[#allocation2 + $0xaf] sm:$0xff]
      %v2797 = vld [vmem:[#allocation2 + $0xb7] sm:$0xff]
      %v2798 = vld [vmem:[#allocation2 + $0xbf] sm:$0xff]
      %v2799 = vld [vmem:[#allocation2 + $0xc7] sm:$0xff]
      %v2800 = vld [vmem:[#allocation2 + $0xcf] sm:$0xff]
      %v2801 = vld [vmem:[#allocation2 + $0xd7] sm:$0xff]
      %v2802 = vld [vmem:[#allocation2 + $0xdf] sm:$0xff]
      %v2803 = vld [vmem:[#allocation2 + $0xe7] sm:$0xff]
      %v2804 = vld [vmem:[#allocation2 + $0xef] sm:$0xff]
      %v2805 = vld [vmem:[#allocation2 + $0xf7] sm:$0xff]
      %v2806 = vld [vmem:[#allocation2 + $0xff] sm:$0xff]
      %v2807 = vld [vmem:[#allocation2 + $0x107] sm:$0xff]
      %v2808 = vld [vmem:[#allocation2 + $0x10f] sm:$0xff]
      %v2809 = vld [vmem:[#allocation2 + $0x117] sm:$0xff]
      %v2810 = vsel %vm1546, %v2778, -inf
      %v2811 = vsel %vm1547, %v2779, -inf
      %v2812 = vsel %vm1548, %v2780, -inf
      %v2813 = vsel %vm1549, %v2781, -inf
      %v2814 = vsel %vm1550, %v2782, -inf
      %v2815 = vsel %vm1551, %v2783, -inf
      %v2816 = vsel %vm1552, %v2784, -inf
      %v2817 = vsel %vm1553, %v2785, -inf
      %v2818 = vsel %vm1554, %v2786, -inf
      %v2819 = vsel %vm1555, %v2787, -inf
      %v2820 = vsel %vm1556, %v2788, -inf
      %v2821 = vsel %vm1557, %v2789, -inf
      %v2822 = vsel %vm1558, %v2790, -inf
      %v2823 = vsel %vm1559, %v2791, -inf
      %v2824 = vsel %vm1560, %v2792, -inf
      %v2825 = vsel %vm1561, %v2793, -inf
      %v2826 = vsel %vm1562, %v2794, -inf
      %v2827 = vsel %vm1563, %v2795, -inf
      %v2828 = vsel %vm1564, %v2796, -inf
      %v2829 = vsel %vm1565, %v2797, -inf
      %v2830 = vsel %vm1566, %v2798, -inf
      %v2831 = vsel %vm1567, %v2799, -inf
      %v2832 = vsel %vm1568, %v2800, -inf
      %v2833 = vsel %vm1569, %v2801, -inf
      %v2834 = vsel %vm1570, %v2802, -inf
      %v2835 = vsel %vm1571, %v2803, -inf
      %v2836 = vsel %vm1572, %v2804, -inf
      %v2837 = vsel %vm1573, %v2805, -inf
      %v2838 = vsel %vm1574, %v2806, -inf
      %v2839 = vsel %vm1575, %v2807, -inf
      %v2840 = vsel %vm1576, %v2808, -inf
      %v2841 = vsel %vm1577, %v2809, -inf
      %v2842 = vmax.f32 %v2746, %v2810
      %v2843 = vmax.f32 %v2747, %v2811
      %v2844 = vmax.f32 %v2748, %v2812
      %v2845 = vmax.f32 %v2749, %v2813
      %v2846 = vmax.f32 %v2750, %v2814
      %v2847 = vmax.f32 %v2751, %v2815
      %v2848 = vmax.f32 %v2752, %v2816
      %v2849 = vmax.f32 %v2753, %v2817
      %v2850 = vmax.f32 %v2754, %v2818
      %v2851 = vmax.f32 %v2755, %v2819
      %v2852 = vmax.f32 %v2756, %v2820
      %v2853 = vmax.f32 %v2757, %v2821
      %v2854 = vmax.f32 %v2758, %v2822
      %v2855 = vmax.f32 %v2759, %v2823
      %v2856 = vmax.f32 %v2760, %v2824
      %v2857 = vmax.f32 %v2761, %v2825
      %v2858 = vmax.f32 %v2762, %v2826
      %v2859 = vmax.f32 %v2763, %v2827
      %v2860 = vmax.f32 %v2764, %v2828
      %v2861 = vmax.f32 %v2765, %v2829
      %v2862 = vmax.f32 %v2766, %v2830
      %v2863 = vmax.f32 %v2767, %v2831
      %v2864 = vmax.f32 %v2768, %v2832
      %v2865 = vmax.f32 %v2769, %v2833
      %v2866 = vmax.f32 %v2770, %v2834
      %v2867 = vmax.f32 %v2771, %v2835
      %v2868 = vmax.f32 %v2772, %v2836
      %v2869 = vmax.f32 %v2773, %v2837
      %v2870 = vmax.f32 %v2774, %v2838
      %v2871 = vmax.f32 %v2775, %v2839
      %v2872 = vmax.f32 %v2776, %v2840
      %v2873 = vmax.f32 %v2777, %v2841
      %v2874 = vld [vmem:[#allocation2 + $0x21] sm:$0xff]
      %v2875 = vld [vmem:[#allocation2 + $0x29] sm:$0xff]
      %v2876 = vld [vmem:[#allocation2 + $0x31] sm:$0xff]
      %v2877 = vld [vmem:[#allocation2 + $0x39] sm:$0xff]
      %v2878 = vld [vmem:[#allocation2 + $0x41] sm:$0xff]
      %v2879 = vld [vmem:[#allocation2 + $0x49] sm:$0xff]
      %v2880 = vld [vmem:[#allocation2 + $0x51] sm:$0xff]
      %v2881 = vld [vmem:[#allocation2 + $0x59] sm:$0xff]
      %v2882 = vld [vmem:[#allocation2 + $0x61] sm:$0xff]
      %v2883 = vld [vmem:[#allocation2 + $0x69] sm:$0xff]
      %v2884 = vld [vmem:[#allocation2 + $0x71] sm:$0xff]
      %v2885 = vld [vmem:[#allocation2 + $0x79] sm:$0xff]
      %v2886 = vld [vmem:[#allocation2 + $0x81] sm:$0xff]
      %v2887 = vld [vmem:[#allocation2 + $0x89] sm:$0xff]
      %v2888 = vld [vmem:[#allocation2 + $0x91] sm:$0xff]
      %v2889 = vld [vmem:[#allocation2 + $0x99] sm:$0xff]
      %v2890 = vld [vmem:[#allocation2 + $0xa1] sm:$0xff]
      %v2891 = vld [vmem:[#allocation2 + $0xa9] sm:$0xff]
      %v2892 = vld [vmem:[#allocation2 + $0xb1] sm:$0xff]
      %v2893 = vld [vmem:[#allocation2 + $0xb9] sm:$0xff]
      %v2894 = vld [vmem:[#allocation2 + $0xc1] sm:$0xff]
      %v2895 = vld [vmem:[#allocation2 + $0xc9] sm:$0xff]
      %v2896 = vld [vmem:[#allocation2 + $0xd1] sm:$0xff]
      %v2897 = vld [vmem:[#allocation2 + $0xd9] sm:$0xff]
      %v2898 = vld [vmem:[#allocation2 + $0xe1] sm:$0xff]
      %v2899 = vld [vmem:[#allocation2 + $0xe9] sm:$0xff]
      %v2900 = vld [vmem:[#allocation2 + $0xf1] sm:$0xff]
      %v2901 = vld [vmem:[#allocation2 + $0xf9] sm:$0xff]
      %v2902 = vld [vmem:[#allocation2 + $0x101] sm:$0xff]
      %v2903 = vld [vmem:[#allocation2 + $0x109] sm:$0xff]
      %v2904 = vld [vmem:[#allocation2 + $0x111] sm:$0xff]
      %v2905 = vld [vmem:[#allocation2 + $0x119] sm:$0xff]
      %v2906 = vsel %vm1674, %v2874, -inf
      %v2907 = vsel %vm1675, %v2875, -inf
      %v2908 = vsel %vm1676, %v2876, -inf
      %v2909 = vsel %vm1677, %v2877, -inf
      %v2910 = vsel %vm1678, %v2878, -inf
      %v2911 = vsel %vm1679, %v2879, -inf
      %v2912 = vsel %vm1680, %v2880, -inf
      %v2913 = vsel %vm1681, %v2881, -inf
      %v2914 = vsel %vm1682, %v2882, -inf
      %v2915 = vsel %vm1683, %v2883, -inf
      %v2916 = vsel %vm1684, %v2884, -inf
      %v2917 = vsel %vm1685, %v2885, -inf
      %v2918 = vsel %vm1686, %v2886, -inf
      %v2919 = vsel %vm1687, %v2887, -inf
      %v2920 = vsel %vm1688, %v2888, -inf
      %v2921 = vsel %vm1689, %v2889, -inf
      %v2922 = vsel %vm1690, %v2890, -inf
      %v2923 = vsel %vm1691, %v2891, -inf
      %v2924 = vsel %vm1692, %v2892, -inf
      %v2925 = vsel %vm1693, %v2893, -inf
      %v2926 = vsel %vm1694, %v2894, -inf
      %v2927 = vsel %vm1695, %v2895, -inf
      %v2928 = vsel %vm1696, %v2896, -inf
      %v2929 = vsel %vm1697, %v2897, -inf
      %v2930 = vsel %vm1698, %v2898, -inf
      %v2931 = vsel %vm1699, %v2899, -inf
      %v2932 = vsel %vm1700, %v2900, -inf
      %v2933 = vsel %vm1701, %v2901, -inf
      %v2934 = vsel %vm1702, %v2902, -inf
      %v2935 = vsel %vm1703, %v2903, -inf
      %v2936 = vsel %vm1704, %v2904, -inf
      %v2937 = vsel %vm1705, %v2905, -inf
      %v2938 = vmax.f32 %v2842, %v2906
      %v2939 = vmax.f32 %v2843, %v2907
      %v2940 = vmax.f32 %v2844, %v2908
      %v2941 = vmax.f32 %v2845, %v2909
      %v2942 = vmax.f32 %v2846, %v2910
      %v2943 = vmax.f32 %v2847, %v2911
      %v2944 = vmax.f32 %v2848, %v2912
      %v2945 = vmax.f32 %v2849, %v2913
      %v2946 = vmax.f32 %v2850, %v2914
      %v2947 = vmax.f32 %v2851, %v2915
      %v2948 = vmax.f32 %v2852, %v2916
      %v2949 = vmax.f32 %v2853, %v2917
      %v2950 = vmax.f32 %v2854, %v2918
      %v2951 = vmax.f32 %v2855, %v2919
      %v2952 = vmax.f32 %v2856, %v2920
      %v2953 = vmax.f32 %v2857, %v2921
      %v2954 = vmax.f32 %v2858, %v2922
      %v2955 = vmax.f32 %v2859, %v2923
      %v2956 = vmax.f32 %v2860, %v2924
      %v2957 = vmax.f32 %v2861, %v2925
      %v2958 = vmax.f32 %v2862, %v2926
      %v2959 = vmax.f32 %v2863, %v2927
      %v2960 = vmax.f32 %v2864, %v2928
      %v2961 = vmax.f32 %v2865, %v2929
      %v2962 = vmax.f32 %v2866, %v2930
      %v2963 = vmax.f32 %v2867, %v2931
      %v2964 = vmax.f32 %v2868, %v2932
      %v2965 = vmax.f32 %v2869, %v2933
      %v2966 = vmax.f32 %v2870, %v2934
      %v2967 = vmax.f32 %v2871, %v2935
      %v2968 = vmax.f32 %v2872, %v2936
      %v2969 = vmax.f32 %v2873, %v2937
      %v2970 = vld [vmem:[#allocation2 + $0x22] sm:$0xff]
      %v2971 = vld [vmem:[#allocation2 + $0x2a] sm:$0xff]
      %v2972 = vld [vmem:[#allocation2 + $0x32] sm:$0xff]
      %v2973 = vld [vmem:[#allocation2 + $0x3a] sm:$0xff]
      %v2974 = vld [vmem:[#allocation2 + $0x42] sm:$0xff]
      %v2975 = vld [vmem:[#allocation2 + $0x4a] sm:$0xff]
      %v2976 = vld [vmem:[#allocation2 + $0x52] sm:$0xff]
      %v2977 = vld [vmem:[#allocation2 + $0x5a] sm:$0xff]
      %v2978 = vld [vmem:[#allocation2 + $0x62] sm:$0xff]
      %v2979 = vld [vmem:[#allocation2 + $0x6a] sm:$0xff]
      %v2980 = vld [vmem:[#allocation2 + $0x72] sm:$0xff]
      %v2981 = vld [vmem:[#allocation2 + $0x7a] sm:$0xff]
      %v2982 = vld [vmem:[#allocation2 + $0x82] sm:$0xff]
      %v2983 = vld [vmem:[#allocation2 + $0x8a] sm:$0xff]
      %v2984 = vld [vmem:[#allocation2 + $0x92] sm:$0xff]
      %v2985 = vld [vmem:[#allocation2 + $0x9a] sm:$0xff]
      %v2986 = vld [vmem:[#allocation2 + $0xa2] sm:$0xff]
      %v2987 = vld [vmem:[#allocation2 + $0xaa] sm:$0xff]
      %v2988 = vld [vmem:[#allocation2 + $0xb2] sm:$0xff]
      %v2989 = vld [vmem:[#allocation2 + $0xba] sm:$0xff]
      %v2990 = vld [vmem:[#allocation2 + $0xc2] sm:$0xff]
      %v2991 = vld [vmem:[#allocation2 + $0xca] sm:$0xff]
      %v2992 = vld [vmem:[#allocation2 + $0xd2] sm:$0xff]
      %v2993 = vld [vmem:[#allocation2 + $0xda] sm:$0xff]
      %v2994 = vld [vmem:[#allocation2 + $0xe2] sm:$0xff]
      %v2995 = vld [vmem:[#allocation2 + $0xea] sm:$0xff]
      %v2996 = vld [vmem:[#allocation2 + $0xf2] sm:$0xff]
      %v2997 = vld [vmem:[#allocation2 + $0xfa] sm:$0xff]
      %v2998 = vld [vmem:[#allocation2 + $0x102] sm:$0xff]
      %v2999 = vld [vmem:[#allocation2 + $0x10a] sm:$0xff]
      %v3000 = vld [vmem:[#allocation2 + $0x112] sm:$0xff]
      %v3001 = vld [vmem:[#allocation2 + $0x11a] sm:$0xff]
      %v3002 = vsel %vm1802, %v2970, -inf
      %v3003 = vsel %vm1803, %v2971, -inf
      %v3004 = vsel %vm1804, %v2972, -inf
      %v3005 = vsel %vm1805, %v2973, -inf
      %v3006 = vsel %vm1806, %v2974, -inf
      %v3007 = vsel %vm1807, %v2975, -inf
      %v3008 = vsel %vm1808, %v2976, -inf
      %v3009 = vsel %vm1809, %v2977, -inf
      %v3010 = vsel %vm1810, %v2978, -inf
      %v3011 = vsel %vm1811, %v2979, -inf
      %v3012 = vsel %vm1812, %v2980, -inf
      %v3013 = vsel %vm1813, %v2981, -inf
      %v3014 = vsel %vm1814, %v2982, -inf
      %v3015 = vsel %vm1815, %v2983, -inf
      %v3016 = vsel %vm1816, %v2984, -inf
      %v3017 = vsel %vm1817, %v2985, -inf
      %v3018 = vsel %vm1818, %v2986, -inf
      %v3019 = vsel %vm1819, %v2987, -inf
      %v3020 = vsel %vm1820, %v2988, -inf
      %v3021 = vsel %vm1821, %v2989, -inf
      %v3022 = vsel %vm1822, %v2990, -inf
      %v3023 = vsel %vm1823, %v2991, -inf
      %v3024 = vsel %vm1824, %v2992, -inf
      %v3025 = vsel %vm1825, %v2993, -inf
      %v3026 = vsel %vm1826, %v2994, -inf
      %v3027 = vsel %vm1827, %v2995, -inf
      %v3028 = vsel %vm1828, %v2996, -inf
      %v3029 = vsel %vm1829, %v2997, -inf
      %v3030 = vsel %vm1830, %v2998, -inf
      %v3031 = vsel %vm1831, %v2999, -inf
      %v3032 = vsel %vm1832, %v3000, -inf
      %v3033 = vsel %vm1833, %v3001, -inf
      %v3034 = vmax.f32 %v2938, %v3002
      %v3035 = vmax.f32 %v2939, %v3003
      %v3036 = vmax.f32 %v2940, %v3004
      %v3037 = vmax.f32 %v2941, %v3005
      %v3038 = vmax.f32 %v2942, %v3006
      %v3039 = vmax.f32 %v2943, %v3007
      %v3040 = vmax.f32 %v2944, %v3008
      %v3041 = vmax.f32 %v2945, %v3009
      %v3042 = vmax.f32 %v2946, %v3010
      %v3043 = vmax.f32 %v2947, %v3011
      %v3044 = vmax.f32 %v2948, %v3012
      %v3045 = vmax.f32 %v2949, %v3013
      %v3046 = vmax.f32 %v2950, %v3014
      %v3047 = vmax.f32 %v2951, %v3015
      %v3048 = vmax.f32 %v2952, %v3016
      %v3049 = vmax.f32 %v2953, %v3017
      %v3050 = vmax.f32 %v2954, %v3018
      %v3051 = vmax.f32 %v2955, %v3019
      %v3052 = vmax.f32 %v2956, %v3020
      %v3053 = vmax.f32 %v2957, %v3021
      %v3054 = vmax.f32 %v2958, %v3022
      %v3055 = vmax.f32 %v2959, %v3023
      %v3056 = vmax.f32 %v2960, %v3024
      %v3057 = vmax.f32 %v2961, %v3025
      %v3058 = vmax.f32 %v2962, %v3026
      %v3059 = vmax.f32 %v2963, %v3027
      %v3060 = vmax.f32 %v2964, %v3028
      %v3061 = vmax.f32 %v2965, %v3029
      %v3062 = vmax.f32 %v2966, %v3030
      %v3063 = vmax.f32 %v2967, %v3031
      %v3064 = vmax.f32 %v2968, %v3032
      %v3065 = vmax.f32 %v2969, %v3033
      %3066 = vst.msk [vmem:[#allocation2 + $0x20] sm:$0xff] %vm896, %v3034
      %3067 = vst.msk [vmem:[#allocation2 + $0x28] sm:$0xff] %vm896, %v3035
      %3068 = vst.msk [vmem:[#allocation2 + $0x30] sm:$0xff] %vm896, %v3036
      %3069 = vst.msk [vmem:[#allocation2 + $0x38] sm:$0xff] %vm896, %v3037
      %3070 = vst.msk [vmem:[#allocation2 + $0x40] sm:$0xff] %vm896, %v3038
      %3071 = vst.msk [vmem:[#allocation2 + $0x48] sm:$0xff] %vm896, %v3039
      %3072 = vst.msk [vmem:[#allocation2 + $0x50] sm:$0xff] %vm896, %v3040
      %3073 = vst.msk [vmem:[#allocation2 + $0x58] sm:$0xff] %vm896, %v3041
      %3074 = vst.msk [vmem:[#allocation2 + $0x60] sm:$0xff] %vm896, %v3042
      %3075 = vst.msk [vmem:[#allocation2 + $0x68] sm:$0xff] %vm896, %v3043
      %3076 = vst.msk [vmem:[#allocation2 + $0x70] sm:$0xff] %vm896, %v3044
      %3077 = vst.msk [vmem:[#allocation2 + $0x78] sm:$0xff] %vm896, %v3045
      %3078 = vst.msk [vmem:[#allocation2 + $0x80] sm:$0xff] %vm896, %v3046
      %3079 = vst.msk [vmem:[#allocation2 + $0x88] sm:$0xff] %vm896, %v3047
      %3080 = vst.msk [vmem:[#allocation2 + $0x90] sm:$0xff] %vm896, %v3048
      %3081 = vst.msk [vmem:[#allocation2 + $0x98] sm:$0xff] %vm896, %v3049
      %3082 = vst.msk [vmem:[#allocation2 + $0xa0] sm:$0xff] %vm896, %v3050
      %3083 = vst.msk [vmem:[#allocation2 + $0xa8] sm:$0xff] %vm896, %v3051
      %3084 = vst.msk [vmem:[#allocation2 + $0xb0] sm:$0xff] %vm896, %v3052
      %3085 = vst.msk [vmem:[#allocation2 + $0xb8] sm:$0xff] %vm896, %v3053
      %3086 = vst.msk [vmem:[#allocation2 + $0xc0] sm:$0xff] %vm896, %v3054
      %3087 = vst.msk [vmem:[#allocation2 + $0xc8] sm:$0xff] %vm896, %v3055
      %3088 = vst.msk [vmem:[#allocation2 + $0xd0] sm:$0xff] %vm896, %v3056
      %3089 = vst.msk [vmem:[#allocation2 + $0xd8] sm:$0xff] %vm896, %v3057
      %3090 = vst.msk [vmem:[#allocation2 + $0xe0] sm:$0xff] %vm896, %v3058
      %3091 = vst.msk [vmem:[#allocation2 + $0xe8] sm:$0xff] %vm896, %v3059
      %3092 = vst.msk [vmem:[#allocation2 + $0xf0] sm:$0xff] %vm896, %v3060
      %3093 = vst.msk [vmem:[#allocation2 + $0xf8] sm:$0xff] %vm896, %v3061
      %3094 = vst.msk [vmem:[#allocation2 + $0x100] sm:$0xff] %vm896, %v3062
      %3095 = vst.msk [vmem:[#allocation2 + $0x108] sm:$0xff] %vm896, %v3063
      %3096 = vst.msk [vmem:[#allocation2 + $0x110] sm:$0xff] %vm896, %v3064
      %3097 = vst.msk [vmem:[#allocation2 + $0x118] sm:$0xff] %vm896, %v3065
      %v3098 = vld [vmem:[#allocation2] sm:$0xff]
      %v3099 = vld [vmem:[#allocation2 + $0x8] sm:$0xff]
      %v3100 = vld [vmem:[#allocation2 + $0x10] sm:$0xff]
      %v3101 = vld [vmem:[#allocation2 + $0x18] sm:$0xff]
      %v3102 = vld [vmem:[#allocation2 + $0x20] sm:$0xff]
      %v3103 = vld [vmem:[#allocation2 + $0x28] sm:$0xff]
      %v3104 = vld [vmem:[#allocation2 + $0x30] sm:$0xff]
      %v3105 = vld [vmem:[#allocation2 + $0x38] sm:$0xff]
      %v3106 = vld [vmem:[#allocation2 + $0x40] sm:$0xff]
      %v3107 = vld [vmem:[#allocation2 + $0x48] sm:$0xff]
      %v3108 = vld [vmem:[#allocation2 + $0x50] sm:$0xff]
      %v3109 = vld [vmem:[#allocation2 + $0x58] sm:$0xff]
      %v3110 = vld [vmem:[#allocation2 + $0x60] sm:$0xff]
      %v3111 = vld [vmem:[#allocation2 + $0x68] sm:$0xff]
      %v3112 = vld [vmem:[#allocation2 + $0x70] sm:$0xff]
      %v3113 = vld [vmem:[#allocation2 + $0x78] sm:$0xff]
      %v3114 = vld [vmem:[#allocation2 + $0x80] sm:$0xff]
      %v3115 = vld [vmem:[#allocation2 + $0x88] sm:$0xff]
      %v3116 = vld [vmem:[#allocation2 + $0x90] sm:$0xff]
      %v3117 = vld [vmem:[#allocation2 + $0x98] sm:$0xff]
      %v3118 = vld [vmem:[#allocation2 + $0xa0] sm:$0xff]
      %v3119 = vld [vmem:[#allocation2 + $0xa8] sm:$0xff]
      %v3120 = vld [vmem:[#allocation2 + $0xb0] sm:$0xff]
      %v3121 = vld [vmem:[#allocation2 + $0xb8] sm:$0xff]
      %v3122 = vld [vmem:[#allocation2 + $0xc0] sm:$0xff]
      %v3123 = vld [vmem:[#allocation2 + $0xc8] sm:$0xff]
      %v3124 = vld [vmem:[#allocation2 + $0xd0] sm:$0xff]
      %v3125 = vld [vmem:[#allocation2 + $0xd8] sm:$0xff]
      %v3126 = vld [vmem:[#allocation2 + $0xe0] sm:$0xff]
      %v3127 = vld [vmem:[#allocation2 + $0xe8] sm:$0xff]
      %v3128 = vld [vmem:[#allocation2 + $0xf0] sm:$0xff]
      %v3129 = vld [vmem:[#allocation2 + $0xf8] sm:$0xff]
      %v3130 = vld [vmem:[#allocation2 + $0x100] sm:$0xff]
      %v3131 = vld [vmem:[#allocation2 + $0x108] sm:$0xff]
      %v3132 = vmax.f32 %v3098, %v3100
      %v3133 = vmax.f32 %v3099, %v3101
      %v3134 = vmax.f32 %v3100, %v3102
      %v3135 = vmax.f32 %v3101, %v3103
      %v3136 = vmax.f32 %v3102, %v3104
      %v3137 = vmax.f32 %v3103, %v3105
      %v3138 = vmax.f32 %v3104, %v3106
      %v3139 = vmax.f32 %v3105, %v3107
      %v3140 = vmax.f32 %v3106, %v3108
      %v3141 = vmax.f32 %v3107, %v3109
      %v3142 = vmax.f32 %v3108, %v3110
      %v3143 = vmax.f32 %v3109, %v3111
      %v3144 = vmax.f32 %v3110, %v3112
      %v3145 = vmax.f32 %v3111, %v3113
      %v3146 = vmax.f32 %v3112, %v3114
      %v3147 = vmax.f32 %v3113, %v3115
      %v3148 = vmax.f32 %v3114, %v3116
      %v3149 = vmax.f32 %v3115, %v3117
      %v3150 = vmax.f32 %v3116, %v3118
      %v3151 = vmax.f32 %v3117, %v3119
      %v3152 = vmax.f32 %v3118, %v3120
      %v3153 = vmax.f32 %v3119, %v3121
      %v3154 = vmax.f32 %v3120, %v3122
      %v3155 = vmax.f32 %v3121, %v3123
      %v3156 = vmax.f32 %v3122, %v3124
      %v3157 = vmax.f32 %v3123, %v3125
      %v3158 = vmax.f32 %v3124, %v3126
      %v3159 = vmax.f32 %v3125, %v3127
      %v3160 = vmax.f32 %v3126, %v3128
      %v3161 = vmax.f32 %v3127, %v3129
      %v3162 = vmax.f32 %v3128, %v3130
      %v3163 = vmax.f32 %v3129, %v3131
      %v3164 = vmax.f32 %v3132, %v3034
      %v3165 = vmax.f32 %v3133, %v3035
      %v3166 = vmax.f32 %v3134, %v3036
      %v3167 = vmax.f32 %v3135, %v3037
      %v3168 = vmax.f32 %v3136, %v3038
      %v3169 = vmax.f32 %v3137, %v3039
      %v3170 = vmax.f32 %v3138, %v3040
      %v3171 = vmax.f32 %v3139, %v3041
      %v3172 = vmax.f32 %v3140, %v3042
      %v3173 = vmax.f32 %v3141, %v3043
      %v3174 = vmax.f32 %v3142, %v3044
      %v3175 = vmax.f32 %v3143, %v3045
      %v3176 = vmax.f32 %v3144, %v3046
      %v3177 = vmax.f32 %v3145, %v3047
      %v3178 = vmax.f32 %v3146, %v3048
      %v3179 = vmax.f32 %v3147, %v3049
      %v3180 = vmax.f32 %v3148, %v3050
      %v3181 = vmax.f32 %v3149, %v3051
      %v3182 = vmax.f32 %v3150, %v3052
      %v3183 = vmax.f32 %v3151, %v3053
      %v3184 = vmax.f32 %v3152, %v3054
      %v3185 = vmax.f32 %v3153, %v3055
      %v3186 = vmax.f32 %v3154, %v3056
      %v3187 = vmax.f32 %v3155, %v3057
      %v3188 = vmax.f32 %v3156, %v3058
      %v3189 = vmax.f32 %v3157, %v3059
      %v3190 = vmax.f32 %v3158, %v3060
      %v3191 = vmax.f32 %v3159, %v3061
      %v3192 = vmax.f32 %v3160, %v3062
      %v3193 = vmax.f32 %v3161, %v3063
      %v3194 = vmax.f32 %v3162, %v3064
      %v3195 = vmax.f32 %v3163, %v3065
      %v3196 = vld [vmem:[#allocation2 + $0x110] sm:$0xff]
      %v3197 = vld [vmem:[#allocation2 + $0x118] sm:$0xff]
      %v3198 = vld [vmem:[#allocation2 + $0x120] sm:$0xff]
      %v3199 = vld [vmem:[#allocation2 + $0x128] sm:$0xff]
      %v3200 = vmax.f32 %v3164, %v3104
      %v3201 = vmax.f32 %v3165, %v3105
      %v3202 = vmax.f32 %v3166, %v3106
      %v3203 = vmax.f32 %v3167, %v3107
      %v3204 = vmax.f32 %v3168, %v3108
      %v3205 = vmax.f32 %v3169, %v3109
      %v3206 = vmax.f32 %v3170, %v3110
      %v3207 = vmax.f32 %v3171, %v3111
      %v3208 = vmax.f32 %v3172, %v3112
      %v3209 = vmax.f32 %v3173, %v3113
      %v3210 = vmax.f32 %v3174, %v3114
      %v3211 = vmax.f32 %v3175, %v3115
      %v3212 = vmax.f32 %v3176, %v3116
      %v3213 = vmax.f32 %v3177, %v3117
      %v3214 = vmax.f32 %v3178, %v3118
      %v3215 = vmax.f32 %v3179, %v3119
      %v3216 = vmax.f32 %v3180, %v3120
      %v3217 = vmax.f32 %v3181, %v3121
      %v3218 = vmax.f32 %v3182, %v3122
      %v3219 = vmax.f32 %v3183, %v3123
      %v3220 = vmax.f32 %v3184, %v3124
      %v3221 = vmax.f32 %v3185, %v3125
      %v3222 = vmax.f32 %v3186, %v3126
      %v3223 = vmax.f32 %v3187, %v3127
      %v3224 = vmax.f32 %v3188, %v3128
      %v3225 = vmax.f32 %v3189, %v3129
      %v3226 = vmax.f32 %v3190, %v3130
      %v3227 = vmax.f32 %v3191, %v3131
      %v3228 = vmax.f32 %v3192, %v3196
      %v3229 = vmax.f32 %v3193, %v3197
      %v3230 = vmax.f32 %v3194, %v3198
      %v3231 = vmax.f32 %v3195, %v3199
      %v3232 = vld [vmem:[#allocation2 + $0x130] sm:$0xff]
      %v3233 = vld [vmem:[#allocation2 + $0x138] sm:$0xff]
      %v3234 = vmax.f32 %v3200, %v3106
      %v3235 = vmax.f32 %v3201, %v3107
      %v3236 = vmax.f32 %v3202, %v3108
      %v3237 = vmax.f32 %v3203, %v3109
      %v3238 = vmax.f32 %v3204, %v3110
      %v3239 = vmax.f32 %v3205, %v3111
      %v3240 = vmax.f32 %v3206, %v3112
      %v3241 = vmax.f32 %v3207, %v3113
      %v3242 = vmax.f32 %v3208, %v3114
      %v3243 = vmax.f32 %v3209, %v3115
      %v3244 = vmax.f32 %v3210, %v3116
      %v3245 = vmax.f32 %v3211, %v3117
      %v3246 = vmax.f32 %v3212, %v3118
      %v3247 = vmax.f32 %v3213, %v3119
      %v3248 = vmax.f32 %v3214, %v3120
      %v3249 = vmax.f32 %v3215, %v3121
      %v3250 = vmax.f32 %v3216, %v3122
      %v3251 = vmax.f32 %v3217, %v3123
      %v3252 = vmax.f32 %v3218, %v3124
      %v3253 = vmax.f32 %v3219, %v3125
      %v3254 = vmax.f32 %v3220, %v3126
      %v3255 = vmax.f32 %v3221, %v3127
      %v3256 = vmax.f32 %v3222, %v3128
      %v3257 = vmax.f32 %v3223, %v3129
      %v3258 = vmax.f32 %v3224, %v3130
      %v3259 = vmax.f32 %v3225, %v3131
      %v3260 = vmax.f32 %v3226, %v3196
      %v3261 = vmax.f32 %v3227, %v3197
      %v3262 = vmax.f32 %v3228, %v3198
      %v3263 = vmax.f32 %v3229, %v3199
      %v3264 = vmax.f32 %v3230, %v3232
      %v3265 = vmax.f32 %v3231, %v3233
      %3266 = vst.msk [vmem:[#allocation2 + $0x20] sm:$0xff] %vm896, %v3234
      %3267 = vst.msk [vmem:[#allocation2 + $0x28] sm:$0xff] %vm896, %v3235
      %3268 = vst.msk [vmem:[#allocation2 + $0x30] sm:$0xff] %vm896, %v3236
      %3269 = vst.msk [vmem:[#allocation2 + $0x38] sm:$0xff] %vm896, %v3237
      %3270 = vst.msk [vmem:[#allocation2 + $0x40] sm:$0xff] %vm896, %v3238
      %3271 = vst.msk [vmem:[#allocation2 + $0x48] sm:$0xff] %vm896, %v3239
      %3272 = vst.msk [vmem:[#allocation2 + $0x50] sm:$0xff] %vm896, %v3240
      %3273 = vst.msk [vmem:[#allocation2 + $0x58] sm:$0xff] %vm896, %v3241
      %3274 = vst.msk [vmem:[#allocation2 + $0x60] sm:$0xff] %vm896, %v3242
      %3275 = vst.msk [vmem:[#allocation2 + $0x68] sm:$0xff] %vm896, %v3243
      %3276 = vst.msk [vmem:[#allocation2 + $0x70] sm:$0xff] %vm896, %v3244
      %3277 = vst.msk [vmem:[#allocation2 + $0x78] sm:$0xff] %vm896, %v3245
      %3278 = vst.msk [vmem:[#allocation2 + $0x80] sm:$0xff] %vm896, %v3246
      %3279 = vst.msk [vmem:[#allocation2 + $0x88] sm:$0xff] %vm896, %v3247
      %3280 = vst.msk [vmem:[#allocation2 + $0x90] sm:$0xff] %vm896, %v3248
      %3281 = vst.msk [vmem:[#allocation2 + $0x98] sm:$0xff] %vm896, %v3249
      %3282 = vst.msk [vmem:[#allocation2 + $0xa0] sm:$0xff] %vm896, %v3250
      %3283 = vst.msk [vmem:[#allocation2 + $0xa8] sm:$0xff] %vm896, %v3251
      %3284 = vst.msk [vmem:[#allocation2 + $0xb0] sm:$0xff] %vm896, %v3252
      %3285 = vst.msk [vmem:[#allocation2 + $0xb8] sm:$0xff] %vm896, %v3253
      %3286 = vst.msk [vmem:[#allocation2 + $0xc0] sm:$0xff] %vm896, %v3254
      %3287 = vst.msk [vmem:[#allocation2 + $0xc8] sm:$0xff] %vm896, %v3255
      %3288 = vst.msk [vmem:[#allocation2 + $0xd0] sm:$0xff] %vm896, %v3256
      %3289 = vst.msk [vmem:[#allocation2 + $0xd8] sm:$0xff] %vm896, %v3257
      %3290 = vst.msk [vmem:[#allocation2 + $0xe0] sm:$0xff] %vm896, %v3258
      %3291 = vst.msk [vmem:[#allocation2 + $0xe8] sm:$0xff] %vm896, %v3259
      %3292 = vst.msk [vmem:[#allocation2 + $0xf0] sm:$0xff] %vm896, %v3260
      %3293 = vst.msk [vmem:[#allocation2 + $0xf8] sm:$0xff] %vm896, %v3261
      %3294 = vst.msk [vmem:[#allocation2 + $0x100] sm:$0xff] %vm896, %v3262
      %3295 = vst.msk [vmem:[#allocation2 + $0x108] sm:$0xff] %vm896, %v3263
      %3296 = vst.msk [vmem:[#allocation2 + $0x110] sm:$0xff] %vm896, %v3264
      %3297 = vst.msk [vmem:[#allocation2 + $0x118] sm:$0xff] %vm896, %v3265
      %v3298 = vld [vmem:[#allocation2 + $0x1e] sm:$0xff]
      %v3299 = vld [vmem:[#allocation2 + $0x26] sm:$0xff]
      %v3300 = vld [vmem:[#allocation2 + $0x2e] sm:$0xff]
      %v3301 = vld [vmem:[#allocation2 + $0x36] sm:$0xff]
      %v3302 = vld [vmem:[#allocation2 + $0x3e] sm:$0xff]
      %v3303 = vld [vmem:[#allocation2 + $0x46] sm:$0xff]
      %v3304 = vld [vmem:[#allocation2 + $0x4e] sm:$0xff]
      %v3305 = vld [vmem:[#allocation2 + $0x56] sm:$0xff]
      %v3306 = vld [vmem:[#allocation2 + $0x5e] sm:$0xff]
      %v3307 = vld [vmem:[#allocation2 + $0x66] sm:$0xff]
      %v3308 = vld [vmem:[#allocation2 + $0x6e] sm:$0xff]
      %v3309 = vld [vmem:[#allocation2 + $0x76] sm:$0xff]
      %v3310 = vld [vmem:[#allocation2 + $0x7e] sm:$0xff]
      %v3311 = vld [vmem:[#allocation2 + $0x86] sm:$0xff]
      %v3312 = vld [vmem:[#allocation2 + $0x8e] sm:$0xff]
      %v3313 = vld [vmem:[#allocation2 + $0x96] sm:$0xff]
      %v3314 = vld [vmem:[#allocation2 + $0x9e] sm:$0xff]
      %v3315 = vld [vmem:[#allocation2 + $0xa6] sm:$0xff]
      %v3316 = vld [vmem:[#allocation2 + $0xae] sm:$0xff]
      %v3317 = vld [vmem:[#allocation2 + $0xb6] sm:$0xff]
      %v3318 = vld [vmem:[#allocation2 + $0xbe] sm:$0xff]
      %v3319 = vld [vmem:[#allocation2 + $0xc6] sm:$0xff]
      %v3320 = vld [vmem:[#allocation2 + $0xce] sm:$0xff]
      %v3321 = vld [vmem:[#allocation2 + $0xd6] sm:$0xff]
      %v3322 = vld [vmem:[#allocation2 + $0xde] sm:$0xff]
      %v3323 = vld [vmem:[#allocation2 + $0xe6] sm:$0xff]
      %v3324 = vld [vmem:[#allocation2 + $0xee] sm:$0xff]
      %v3325 = vld [vmem:[#allocation2 + $0xf6] sm:$0xff]
      %v3326 = vld [vmem:[#allocation2 + $0xfe] sm:$0xff]
      %v3327 = vld [vmem:[#allocation2 + $0x106] sm:$0xff]
      %v3328 = vld [vmem:[#allocation2 + $0x10e] sm:$0xff]
      %v3329 = vld [vmem:[#allocation2 + $0x116] sm:$0xff]
      %v3330 = vsel %vm1418, %v3298, -inf
      %v3331 = vsel %vm1419, %v3299, -inf
      %v3332 = vsel %vm1420, %v3300, -inf
      %v3333 = vsel %vm1421, %v3301, -inf
      %v3334 = vsel %vm1422, %v3302, -inf
      %v3335 = vsel %vm1423, %v3303, -inf
      %v3336 = vsel %vm1424, %v3304, -inf
      %v3337 = vsel %vm1425, %v3305, -inf
      %v3338 = vsel %vm1426, %v3306, -inf
      %v3339 = vsel %vm1427, %v3307, -inf
      %v3340 = vsel %vm1428, %v3308, -inf
      %v3341 = vsel %vm1429, %v3309, -inf
      %v3342 = vsel %vm1430, %v3310, -inf
      %v3343 = vsel %vm1431, %v3311, -inf
      %v3344 = vsel %vm1432, %v3312, -inf
      %v3345 = vsel %vm1433, %v3313, -inf
      %v3346 = vsel %vm1434, %v3314, -inf
      %v3347 = vsel %vm1435, %v3315, -inf
      %v3348 = vsel %vm1436, %v3316, -inf
      %v3349 = vsel %vm1437, %v3317, -inf
      %v3350 = vsel %vm1438, %v3318, -inf
      %v3351 = vsel %vm1439, %v3319, -inf
      %v3352 = vsel %vm1440, %v3320, -inf
      %v3353 = vsel %vm1441, %v3321, -inf
      %v3354 = vsel %vm1442, %v3322, -inf
      %v3355 = vsel %vm1443, %v3323, -inf
      %v3356 = vsel %vm1444, %v3324, -inf
      %v3357 = vsel %vm1445, %v3325, -inf
      %v3358 = vsel %vm1446, %v3326, -inf
      %v3359 = vsel %vm1447, %v3327, -inf
      %v3360 = vsel %vm1448, %v3328, -inf
      %v3361 = vsel %vm1449, %v3329, -inf
      %v3362 = vmax.f32 %v3234, %v3330
      %v3363 = vmax.f32 %v3235, %v3331
      %v3364 = vmax.f32 %v3236, %v3332
      %v3365 = vmax.f32 %v3237, %v3333
      %v3366 = vmax.f32 %v3238, %v3334
      %v3367 = vmax.f32 %v3239, %v3335
      %v3368 = vmax.f32 %v3240, %v3336
      %v3369 = vmax.f32 %v3241, %v3337
      %v3370 = vmax.f32 %v3242, %v3338
      %v3371 = vmax.f32 %v3243, %v3339
      %v3372 = vmax.f32 %v3244, %v3340
      %v3373 = vmax.f32 %v3245, %v3341
      %v3374 = vmax.f32 %v3246, %v3342
      %v3375 = vmax.f32 %v3247, %v3343
      %v3376 = vmax.f32 %v3248, %v3344
      %v3377 = vmax.f32 %v3249, %v3345
      %v3378 = vmax.f32 %v3250, %v3346
      %v3379 = vmax.f32 %v3251, %v3347
      %v3380 = vmax.f32 %v3252, %v3348
      %v3381 = vmax.f32 %v3253, %v3349
      %v3382 = vmax.f32 %v3254, %v3350
      %v3383 = vmax.f32 %v3255, %v3351
      %v3384 = vmax.f32 %v3256, %v3352
      %v3385 = vmax.f32 %v3257, %v3353
      %v3386 = vmax.f32 %v3258, %v3354
      %v3387 = vmax.f32 %v3259, %v3355
      %v3388 = vmax.f32 %v3260, %v3356
      %v3389 = vmax.f32 %v3261, %v3357
      %v3390 = vmax.f32 %v3262, %v3358
      %v3391 = vmax.f32 %v3263, %v3359
      %v3392 = vmax.f32 %v3264, %v3360
      %v3393 = vmax.f32 %v3265, %v3361
      %v3394 = vld [vmem:[#allocation2 + $0x1f] sm:$0xff]
      %v3395 = vld [vmem:[#allocation2 + $0x27] sm:$0xff]
      %v3396 = vld [vmem:[#allocation2 + $0x2f] sm:$0xff]
      %v3397 = vld [vmem:[#allocation2 + $0x37] sm:$0xff]
      %v3398 = vld [vmem:[#allocation2 + $0x3f] sm:$0xff]
      %v3399 = vld [vmem:[#allocation2 + $0x47] sm:$0xff]
      %v3400 = vld [vmem:[#allocation2 + $0x4f] sm:$0xff]
      %v3401 = vld [vmem:[#allocation2 + $0x57] sm:$0xff]
      %v3402 = vld [vmem:[#allocation2 + $0x5f] sm:$0xff]
      %v3403 = vld [vmem:[#allocation2 + $0x67] sm:$0xff]
      %v3404 = vld [vmem:[#allocation2 + $0x6f] sm:$0xff]
      %v3405 = vld [vmem:[#allocation2 + $0x77] sm:$0xff]
      %v3406 = vld [vmem:[#allocation2 + $0x7f] sm:$0xff]
      %v3407 = vld [vmem:[#allocation2 + $0x87] sm:$0xff]
      %v3408 = vld [vmem:[#allocation2 + $0x8f] sm:$0xff]
      %v3409 = vld [vmem:[#allocation2 + $0x97] sm:$0xff]
      %v3410 = vld [vmem:[#allocation2 + $0x9f] sm:$0xff]
      %v3411 = vld [vmem:[#allocation2 + $0xa7] sm:$0xff]
      %v3412 = vld [vmem:[#allocation2 + $0xaf] sm:$0xff]
      %v3413 = vld [vmem:[#allocation2 + $0xb7] sm:$0xff]
      %v3414 = vld [vmem:[#allocation2 + $0xbf] sm:$0xff]
      %v3415 = vld [vmem:[#allocation2 + $0xc7] sm:$0xff]
      %v3416 = vld [vmem:[#allocation2 + $0xcf] sm:$0xff]
      %v3417 = vld [vmem:[#allocation2 + $0xd7] sm:$0xff]
      %v3418 = vld [vmem:[#allocation2 + $0xdf] sm:$0xff]
      %v3419 = vld [vmem:[#allocation2 + $0xe7] sm:$0xff]
      %v3420 = vld [vmem:[#allocation2 + $0xef] sm:$0xff]
      %v3421 = vld [vmem:[#allocation2 + $0xf7] sm:$0xff]
      %v3422 = vld [vmem:[#allocation2 + $0xff] sm:$0xff]
      %v3423 = vld [vmem:[#allocation2 + $0x107] sm:$0xff]
      %v3424 = vld [vmem:[#allocation2 + $0x10f] sm:$0xff]
      %v3425 = vld [vmem:[#allocation2 + $0x117] sm:$0xff]
      %v3426 = vsel %vm1546, %v3394, -inf
      %v3427 = vsel %vm1547, %v3395, -inf
      %v3428 = vsel %vm1548, %v3396, -inf
      %v3429 = vsel %vm1549, %v3397, -inf
      %v3430 = vsel %vm1550, %v3398, -inf
      %v3431 = vsel %vm1551, %v3399, -inf
      %v3432 = vsel %vm1552, %v3400, -inf
      %v3433 = vsel %vm1553, %v3401, -inf
      %v3434 = vsel %vm1554, %v3402, -inf
      %v3435 = vsel %vm1555, %v3403, -inf
      %v3436 = vsel %vm1556, %v3404, -inf
      %v3437 = vsel %vm1557, %v3405, -inf
      %v3438 = vsel %vm1558, %v3406, -inf
      %v3439 = vsel %vm1559, %v3407, -inf
      %v3440 = vsel %vm1560, %v3408, -inf
      %v3441 = vsel %vm1561, %v3409, -inf
      %v3442 = vsel %vm1562, %v3410, -inf
      %v3443 = vsel %vm1563, %v3411, -inf
      %v3444 = vsel %vm1564, %v3412, -inf
      %v3445 = vsel %vm1565, %v3413, -inf
      %v3446 = vsel %vm1566, %v3414, -inf
      %v3447 = vsel %vm1567, %v3415, -inf
      %v3448 = vsel %vm1568, %v3416, -inf
      %v3449 = vsel %vm1569, %v3417, -inf
      %v3450 = vsel %vm1570, %v3418, -inf
      %v3451 = vsel %vm1571, %v3419, -inf
      %v3452 = vsel %vm1572, %v3420, -inf
      %v3453 = vsel %vm1573, %v3421, -inf
      %v3454 = vsel %vm1574, %v3422, -inf
      %v3455 = vsel %vm1575, %v3423, -inf
      %v3456 = vsel %vm1576, %v3424, -inf
      %v3457 = vsel %vm1577, %v3425, -inf
      %v3458 = vmax.f32 %v3362, %v3426
      %v3459 = vmax.f32 %v3363, %v3427
      %v3460 = vmax.f32 %v3364, %v3428
      %v3461 = vmax.f32 %v3365, %v3429
      %v3462 = vmax.f32 %v3366, %v3430
      %v3463 = vmax.f32 %v3367, %v3431
      %v3464 = vmax.f32 %v3368, %v3432
      %v3465 = vmax.f32 %v3369, %v3433
      %v3466 = vmax.f32 %v3370, %v3434
      %v3467 = vmax.f32 %v3371, %v3435
      %v3468 = vmax.f32 %v3372, %v3436
      %v3469 = vmax.f32 %v3373, %v3437
      %v3470 = vmax.f32 %v3374, %v3438
      %v3471 = vmax.f32 %v3375, %v3439
      %v3472 = vmax.f32 %v3376, %v3440
      %v3473 = vmax.f32 %v3377, %v3441
      %v3474 = vmax.f32 %v3378, %v3442
      %v3475 = vmax.f32 %v3379, %v3443
      %v3476 = vmax.f32 %v3380, %v3444
      %v3477 = vmax.f32 %v3381, %v3445
      %v3478 = vmax.f32 %v3382, %v3446
      %v3479 = vmax.f32 %v3383, %v3447
      %v3480 = vmax.f32 %v3384, %v3448
      %v3481 = vmax.f32 %v3385, %v3449
      %v3482 = vmax.f32 %v3386, %v3450
      %v3483 = vmax.f32 %v3387, %v3451
      %v3484 = vmax.f32 %v3388, %v3452
      %v3485 = vmax.f32 %v3389, %v3453
      %v3486 = vmax.f32 %v3390, %v3454
      %v3487 = vmax.f32 %v3391, %v3455
      %v3488 = vmax.f32 %v3392, %v3456
      %v3489 = vmax.f32 %v3393, %v3457
      %v3490 = vld [vmem:[#allocation2 + $0x21] sm:$0xff]
      %v3491 = vld [vmem:[#allocation2 + $0x29] sm:$0xff]
      %v3492 = vld [vmem:[#allocation2 + $0x31] sm:$0xff]
      %v3493 = vld [vmem:[#allocation2 + $0x39] sm:$0xff]
      %v3494 = vld [vmem:[#allocation2 + $0x41] sm:$0xff]
      %v3495 = vld [vmem:[#allocation2 + $0x49] sm:$0xff]
      %v3496 = vld [vmem:[#allocation2 + $0x51] sm:$0xff]
      %v3497 = vld [vmem:[#allocation2 + $0x59] sm:$0xff]
      %v3498 = vld [vmem:[#allocation2 + $0x61] sm:$0xff]
      %v3499 = vld [vmem:[#allocation2 + $0x69] sm:$0xff]
      %v3500 = vld [vmem:[#allocation2 + $0x71] sm:$0xff]
      %v3501 = vld [vmem:[#allocation2 + $0x79] sm:$0xff]
      %v3502 = vld [vmem:[#allocation2 + $0x81] sm:$0xff]
      %v3503 = vld [vmem:[#allocation2 + $0x89] sm:$0xff]
      %v3504 = vld [vmem:[#allocation2 + $0x91] sm:$0xff]
      %v3505 = vld [vmem:[#allocation2 + $0x99] sm:$0xff]
      %v3506 = vld [vmem:[#allocation2 + $0xa1] sm:$0xff]
      %v3507 = vld [vmem:[#allocation2 + $0xa9] sm:$0xff]
      %v3508 = vld [vmem:[#allocation2 + $0xb1] sm:$0xff]
      %v3509 = vld [vmem:[#allocation2 + $0xb9] sm:$0xff]
      %v3510 = vld [vmem:[#allocation2 + $0xc1] sm:$0xff]
      %v3511 = vld [vmem:[#allocation2 + $0xc9] sm:$0xff]
      %v3512 = vld [vmem:[#allocation2 + $0xd1] sm:$0xff]
      %v3513 = vld [vmem:[#allocation2 + $0xd9] sm:$0xff]
      %v3514 = vld [vmem:[#allocation2 + $0xe1] sm:$0xff]
      %v3515 = vld [vmem:[#allocation2 + $0xe9] sm:$0xff]
      %v3516 = vld [vmem:[#allocation2 + $0xf1] sm:$0xff]
      %v3517 = vld [vmem:[#allocation2 + $0xf9] sm:$0xff]
      %v3518 = vld [vmem:[#allocation2 + $0x101] sm:$0xff]
      %v3519 = vld [vmem:[#allocation2 + $0x109] sm:$0xff]
      %v3520 = vld [vmem:[#allocation2 + $0x111] sm:$0xff]
      %v3521 = vld [vmem:[#allocation2 + $0x119] sm:$0xff]
      %v3522 = vsel %vm1674, %v3490, -inf
      %v3523 = vsel %vm1675, %v3491, -inf
      %v3524 = vsel %vm1676, %v3492, -inf
      %v3525 = vsel %vm1677, %v3493, -inf
      %v3526 = vsel %vm1678, %v3494, -inf
      %v3527 = vsel %vm1679, %v3495, -inf
      %v3528 = vsel %vm1680, %v3496, -inf
      %v3529 = vsel %vm1681, %v3497, -inf
      %v3530 = vsel %vm1682, %v3498, -inf
      %v3531 = vsel %vm1683, %v3499, -inf
      %v3532 = vsel %vm1684, %v3500, -inf
      %v3533 = vsel %vm1685, %v3501, -inf
      %v3534 = vsel %vm1686, %v3502, -inf
      %v3535 = vsel %vm1687, %v3503, -inf
      %v3536 = vsel %vm1688, %v3504, -inf
      %v3537 = vsel %vm1689, %v3505, -inf
      %v3538 = vsel %vm1690, %v3506, -inf
      %v3539 = vsel %vm1691, %v3507, -inf
      %v3540 = vsel %vm1692, %v3508, -inf
      %v3541 = vsel %vm1693, %v3509, -inf
      %v3542 = vsel %vm1694, %v3510, -inf
      %v3543 = vsel %vm1695, %v3511, -inf
      %v3544 = vsel %vm1696, %v3512, -inf
      %v3545 = vsel %vm1697, %v3513, -inf
      %v3546 = vsel %vm1698, %v3514, -inf
      %v3547 = vsel %vm1699, %v3515, -inf
      %v3548 = vsel %vm1700, %v3516, -inf
      %v3549 = vsel %vm1701, %v3517, -inf
      %v3550 = vsel %vm1702, %v3518, -inf
      %v3551 = vsel %vm1703, %v3519, -inf
      %v3552 = vsel %vm1704, %v3520, -inf
      %v3553 = vsel %vm1705, %v3521, -inf
      %v3554 = vmax.f32 %v3458, %v3522
      %v3555 = vmax.f32 %v3459, %v3523
      %v3556 = vmax.f32 %v3460, %v3524
      %v3557 = vmax.f32 %v3461, %v3525
      %v3558 = vmax.f32 %v3462, %v3526
      %v3559 = vmax.f32 %v3463, %v3527
      %v3560 = vmax.f32 %v3464, %v3528
      %v3561 = vmax.f32 %v3465, %v3529
      %v3562 = vmax.f32 %v3466, %v3530
      %v3563 = vmax.f32 %v3467, %v3531
      %v3564 = vmax.f32 %v3468, %v3532
      %v3565 = vmax.f32 %v3469, %v3533
      %v3566 = vmax.f32 %v3470, %v3534
      %v3567 = vmax.f32 %v3471, %v3535
      %v3568 = vmax.f32 %v3472, %v3536
      %v3569 = vmax.f32 %v3473, %v3537
      %v3570 = vmax.f32 %v3474, %v3538
      %v3571 = vmax.f32 %v3475, %v3539
      %v3572 = vmax.f32 %v3476, %v3540
      %v3573 = vmax.f32 %v3477, %v3541
      %v3574 = vmax.f32 %v3478, %v3542
      %v3575 = vmax.f32 %v3479, %v3543
      %v3576 = vmax.f32 %v3480, %v3544
      %v3577 = vmax.f32 %v3481, %v3545
      %v3578 = vmax.f32 %v3482, %v3546
      %v3579 = vmax.f32 %v3483, %v3547
      %v3580 = vmax.f32 %v3484, %v3548
      %v3581 = vmax.f32 %v3485, %v3549
      %v3582 = vmax.f32 %v3486, %v3550
      %v3583 = vmax.f32 %v3487, %v3551
      %v3584 = vmax.f32 %v3488, %v3552
      %v3585 = vmax.f32 %v3489, %v3553
      %v3586 = vld [vmem:[#allocation2 + $0x22] sm:$0xff]
      %v3587 = vld [vmem:[#allocation2 + $0x2a] sm:$0xff]
      %v3588 = vld [vmem:[#allocation2 + $0x32] sm:$0xff]
      %v3589 = vld [vmem:[#allocation2 + $0x3a] sm:$0xff]
      %v3590 = vld [vmem:[#allocation2 + $0x42] sm:$0xff]
      %v3591 = vld [vmem:[#allocation2 + $0x4a] sm:$0xff]
      %v3592 = vld [vmem:[#allocation2 + $0x52] sm:$0xff]
      %v3593 = vld [vmem:[#allocation2 + $0x5a] sm:$0xff]
      %v3594 = vld [vmem:[#allocation2 + $0x62] sm:$0xff]
      %v3595 = vld [vmem:[#allocation2 + $0x6a] sm:$0xff]
      %v3596 = vld [vmem:[#allocation2 + $0x72] sm:$0xff]
      %v3597 = vld [vmem:[#allocation2 + $0x7a] sm:$0xff]
      %v3598 = vld [vmem:[#allocation2 + $0x82] sm:$0xff]
      %v3599 = vld [vmem:[#allocation2 + $0x8a] sm:$0xff]
      %v3600 = vld [vmem:[#allocation2 + $0x92] sm:$0xff]
      %v3601 = vld [vmem:[#allocation2 + $0x9a] sm:$0xff]
      %v3602 = vld [vmem:[#allocation2 + $0xa2] sm:$0xff]
      %v3603 = vld [vmem:[#allocation2 + $0xaa] sm:$0xff]
      %v3604 = vld [vmem:[#allocation2 + $0xb2] sm:$0xff]
      %v3605 = vld [vmem:[#allocation2 + $0xba] sm:$0xff]
      %v3606 = vld [vmem:[#allocation2 + $0xc2] sm:$0xff]
      %v3607 = vld [vmem:[#allocation2 + $0xca] sm:$0xff]
      %v3608 = vld [vmem:[#allocation2 + $0xd2] sm:$0xff]
      %v3609 = vld [vmem:[#allocation2 + $0xda] sm:$0xff]
      %v3610 = vld [vmem:[#allocation2 + $0xe2] sm:$0xff]
      %v3611 = vld [vmem:[#allocation2 + $0xea] sm:$0xff]
      %v3612 = vld [vmem:[#allocation2 + $0xf2] sm:$0xff]
      %v3613 = vld [vmem:[#allocation2 + $0xfa] sm:$0xff]
      %v3614 = vld [vmem:[#allocation2 + $0x102] sm:$0xff]
      %v3615 = vld [vmem:[#allocation2 + $0x10a] sm:$0xff]
      %v3616 = vld [vmem:[#allocation2 + $0x112] sm:$0xff]
      %v3617 = vld [vmem:[#allocation2 + $0x11a] sm:$0xff]
      %v3618 = vsel %vm1802, %v3586, -inf
      %v3619 = vsel %vm1803, %v3587, -inf
      %v3620 = vsel %vm1804, %v3588, -inf
      %v3621 = vsel %vm1805, %v3589, -inf
      %v3622 = vsel %vm1806, %v3590, -inf
      %v3623 = vsel %vm1807, %v3591, -inf
      %v3624 = vsel %vm1808, %v3592, -inf
      %v3625 = vsel %vm1809, %v3593, -inf
      %v3626 = vsel %vm1810, %v3594, -inf
      %v3627 = vsel %vm1811, %v3595, -inf
      %v3628 = vsel %vm1812, %v3596, -inf
      %v3629 = vsel %vm1813, %v3597, -inf
      %v3630 = vsel %vm1814, %v3598, -inf
      %v3631 = vsel %vm1815, %v3599, -inf
      %v3632 = vsel %vm1816, %v3600, -inf
      %v3633 = vsel %vm1817, %v3601, -inf
      %v3634 = vsel %vm1818, %v3602, -inf
      %v3635 = vsel %vm1819, %v3603, -inf
      %v3636 = vsel %vm1820, %v3604, -inf
      %v3637 = vsel %vm1821, %v3605, -inf
      %v3638 = vsel %vm1822, %v3606, -inf
      %v3639 = vsel %vm1823, %v3607, -inf
      %v3640 = vsel %vm1824, %v3608, -inf
      %v3641 = vsel %vm1825, %v3609, -inf
      %v3642 = vsel %vm1826, %v3610, -inf
      %v3643 = vsel %vm1827, %v3611, -inf
      %v3644 = vsel %vm1828, %v3612, -inf
      %v3645 = vsel %vm1829, %v3613, -inf
      %v3646 = vsel %vm1830, %v3614, -inf
      %v3647 = vsel %vm1831, %v3615, -inf
      %v3648 = vsel %vm1832, %v3616, -inf
      %v3649 = vsel %vm1833, %v3617, -inf
      %v3650 = vmax.f32 %v3554, %v3618
      %v3651 = vmax.f32 %v3555, %v3619
      %v3652 = vmax.f32 %v3556, %v3620
      %v3653 = vmax.f32 %v3557, %v3621
      %v3654 = vmax.f32 %v3558, %v3622
      %v3655 = vmax.f32 %v3559, %v3623
      %v3656 = vmax.f32 %v3560, %v3624
      %v3657 = vmax.f32 %v3561, %v3625
      %v3658 = vmax.f32 %v3562, %v3626
      %v3659 = vmax.f32 %v3563, %v3627
      %v3660 = vmax.f32 %v3564, %v3628
      %v3661 = vmax.f32 %v3565, %v3629
      %v3662 = vmax.f32 %v3566, %v3630
      %v3663 = vmax.f32 %v3567, %v3631
      %v3664 = vmax.f32 %v3568, %v3632
      %v3665 = vmax.f32 %v3569, %v3633
      %v3666 = vmax.f32 %v3570, %v3634
      %v3667 = vmax.f32 %v3571, %v3635
      %v3668 = vmax.f32 %v3572, %v3636
      %v3669 = vmax.f32 %v3573, %v3637
      %v3670 = vmax.f32 %v3574, %v3638
      %v3671 = vmax.f32 %v3575, %v3639
      %v3672 = vmax.f32 %v3576, %v3640
      %v3673 = vmax.f32 %v3577, %v3641
      %v3674 = vmax.f32 %v3578, %v3642
      %v3675 = vmax.f32 %v3579, %v3643
      %v3676 = vmax.f32 %v3580, %v3644
      %v3677 = vmax.f32 %v3581, %v3645
      %v3678 = vmax.f32 %v3582, %v3646
      %v3679 = vmax.f32 %v3583, %v3647
      %v3680 = vmax.f32 %v3584, %v3648
      %v3681 = vmax.f32 %v3585, %v3649
      %v3682 = vld [vmem:[%s3] sm:$0x3]
      %v3683 = vld [vmem:[%s4] sm:$0x3]
      %v3685 = vsel %vm896, %v2418, 0
      %v3688 = vsel %vm896, %v2419, 0
      %v3691 = vsel %vm896, %v2420, 0
      %v3694 = vsel %vm896, %v2421, 0
      %v3697 = vsel %vm896, %v2422, 0
      %v3700 = vsel %vm896, %v2423, 0
      %v3703 = vsel %vm896, %v2424, 0
      %v3706 = vsel %vm896, %v2425, 0
      %v3709 = vsel %vm896, %v2426, 0
      %v3712 = vsel %vm896, %v2427, 0
      %v3715 = vsel %vm896, %v2428, 0
      %v3718 = vsel %vm896, %v2429, 0
      %v3721 = vsel %vm896, %v2430, 0
      %v3724 = vsel %vm896, %v2431, 0
      %v3727 = vsel %vm896, %v2432, 0
      %v3730 = vsel %vm896, %v2433, 0
      %v3733 = vsel %vm896, %v2434, 0
      %v3736 = vsel %vm896, %v2435, 0
      %v3739 = vsel %vm896, %v2436, 0
      %v3742 = vsel %vm896, %v2437, 0
      %v3745 = vsel %vm896, %v2438, 0
      %v3748 = vsel %vm896, %v2439, 0
      %v3751 = vsel %vm896, %v2440, 0
      %v3754 = vsel %vm896, %v2441, 0
      %v3757 = vsel %vm896, %v2442, 0
      %v3760 = vsel %vm896, %v2443, 0
      %v3763 = vsel %vm896, %v2444, 0
      %v3766 = vsel %vm896, %v2445, 0
      %v3769 = vsel %vm896, %v2446, 0
      %v3772 = vsel %vm896, %v2447, 0
      %v3775 = vsel %vm896, %v2448, 0
      %v3778 = vsel %vm896, %v2449, 0
      %vm3780 = vcmask 1041408
      %v3782 = vsel %vm3780, %v3683, 0
      %3784 = vmatprep.subr.mxu0 0.0
      %3785 = vmatpush1.msra.mxu0 %v3782
      %3786 = vmatprep.subr.mxu0 0.0
      %3787 = vmatpush1.msra.mxu0 0.0
      %3788 = vmatprep.subr.mxu0 0.0
      %3789 = vmatpush1.msra.mxu0 0.0
      %3790 = vmatprep.subr.mxu0 0.0
      %3791 = vmatpush1.msra.mxu0 0.0
      %3792 = vmatprep.subr.mxu0 0.0
      %3793 = vmatpush1.msra.mxu0 0.0
      %3794 = vmatprep.subr.mxu0 0.0
      %3795 = vmatpush1.msra.mxu0 0.0
      %3796 = vmatprep.subr.mxu0 0.0
      %3797 = vmatpush1.msra.mxu0 0.0
      %3798 = vmatprep.subr.mxu0 0.0
      %3799 = vmatpush1.msra.mxu0 0.0
      %3800 = vmatprep.subr.mxu0 0.0
      %3801 = vmatpush1.msra.mxu0 0.0
      %3802 = vmatprep.subr.mxu0 0.0
      %3803 = vmatpush1.msra.mxu0 0.0
      %3804 = vmatprep.subr.mxu0 0.0
      %3805 = vmatpush1.msra.mxu0 0.0
      %3806 = vmatprep.subr.mxu0 0.0
      %3807 = vmatpush1.msra.mxu0 0.0
      %3808 = vmatprep.subr.mxu0 0.0
      %3809 = vmatpush1.msra.mxu0 0.0
      %3810 = vmatprep.subr.mxu0 0.0
      %3811 = vmatpush1.msra.mxu0 0.0
      %3812 = vmatprep.subr.mxu0 0.0
      %3813 = vmatpush1.msra.mxu0 0.0
      %3814 = vmatprep.subr.mxu0 0.0
      %3815 = vmatpush1.msra.mxu0 0.0
      %3816 = vmatprep.subr.mxu0 0.0
      %3817 = vmatpush1.msra.mxu0 0.0
      %3818 = vmatprep.subr.mxu0 0.0
      %3819 = vmatpush1.msra.mxu0 0.0
      %3820 = vmatprep.subr.mxu0 0.0
      %3821 = vmatpush1.msra.mxu0 0.0
      %3822 = vmatprep.subr.mxu0 0.0
      %3823 = vmatpush1.msra.mxu0 0.0
      %3824 = vmatprep.subr.mxu0 0.0
      %3825 = vmatpush1.msra.mxu0 0.0
      %3826 = vmatprep.subr.mxu0 0.0
      %3827 = vmatpush1.msra.mxu0 0.0
      %3828 = vmatprep.subr.mxu0 0.0
      %3829 = vmatpush1.msra.mxu0 0.0
      %3830 = vmatprep.subr.mxu0 0.0
      %3831 = vmatpush1.msra.mxu0 0.0
      %3832 = vmatprep.subr.mxu0 0.0
      %3833 = vmatpush1.msra.mxu0 0.0
      %3834 = vmatprep.subr.mxu0 0.0
      %3835 = vmatpush1.msra.mxu0 0.0
      %3836 = vmatprep.subr.mxu0 0.0
      %3837 = vmatpush1.msra.mxu0 0.0
      %3838 = vmatprep.subr.mxu0 0.0
      %3839 = vmatpush1.msra.mxu0 0.0
      %3840 = vmatprep.subr.mxu0 0.0
      %3841 = vmatpush1.msra.mxu0 0.0
      %3842 = vmatprep.subr.mxu0 0.0
      %3843 = vmatpush1.msra.mxu0 0.0
      %3844 = vmatprep.subr.mxu0 0.0
      %3845 = vmatpush1.msra.mxu0 0.0
      %3846 = vmatprep.subr.mxu0 0.0
      %3847 = vmatpush1.msra.mxu0 0.0
      %3848 = vmatprep.mubr.f32.mxu0 0.0
      %3849 = vmatmul.mubr.f32.gmra.mrb[0].mxu0 %v3685
      %v3850 = vpop.f32.mrb[0].mxu0
      %v3851 = vadd.f32 0.0, %v3850
      %v3852 = vpop.f32.mrb[0].mxu0
      %3853 = vmatprep.mubr.f32.mxu0 0.0
      %3854 = vmatmul.mubr.f32.gmra.mrb[0].mxu0 %v3688
      %v3855 = vpop.f32.mrb[0].mxu0
      %v3856 = vadd.f32 0.0, %v3855
      %v3857 = vpop.f32.mrb[0].mxu0
      %3858 = vmatprep.mubr.f32.mxu0 0.0
      %3859 = vmatmul.mubr.f32.gmra.mrb[0].mxu0 %v3691
      %v3860 = vpop.f32.mrb[0].mxu0
      %v3861 = vadd.f32 0.0, %v3860
      %v3862 = vpop.f32.mrb[0].mxu0
      %3863 = vmatprep.mubr.f32.mxu0 0.0
      %3864 = vmatmul.mubr.f32.gmra.mrb[0].mxu0 %v3694
      %v3865 = vpop.f32.mrb[0].mxu0
      %v3866 = vadd.f32 0.0, %v3865
      %v3867 = vpop.f32.mrb[0].mxu0
      %3868 = vmatprep.mubr.f32.mxu0 0.0
      %3869 = vmatmul.mubr.f32.gmra.mrb[0].mxu0 %v3697
      %v3870 = vpop.f32.mrb[0].mxu0
      %v3871 = vadd.f32 0.0, %v3870
      %v3872 = vpop.f32.mrb[0].mxu0
      %3873 = vmatprep.mubr.f32.mxu0 0.0
      %3874 = vmatmul.mubr.f32.gmra.mrb[0].mxu0 %v3700
      %v3875 = vpop.f32.mrb[0].mxu0
      %v3876 = vadd.f32 0.0, %v3875
      %v3877 = vpop.f32.mrb[0].mxu0
      %3878 = vmatprep.mubr.f32.mxu0 0.0
      %3879 = vmatmul.mubr.f32.gmra.mrb[0].mxu0 %v3703
      %v3880 = vpop.f32.mrb[0].mxu0
      %v3881 = vadd.f32 0.0, %v3880
      %v3882 = vpop.f32.mrb[0].mxu0
      %3883 = vmatprep.mubr.f32.mxu0 0.0
      %3884 = vmatmul.mubr.f32.gmra.mrb[0].mxu0 %v3706
      %v3885 = vpop.f32.mrb[0].mxu0
      %v3886 = vadd.f32 0.0, %v3885
      %v3887 = vpop.f32.mrb[0].mxu0
      %3888 = vmatprep.mubr.f32.mxu0 0.0
      %3889 = vmatmul.mubr.f32.gmra.mrb[0].mxu0 %v3709
      %v3890 = vpop.f32.mrb[0].mxu0
      %v3891 = vadd.f32 0.0, %v3890
      %v3892 = vpop.f32.mrb[0].mxu0
      %3893 = vmatprep.mubr.f32.mxu0 0.0
      %3894 = vmatmul.mubr.f32.gmra.mrb[0].mxu0 %v3712
      %v3895 = vpop.f32.mrb[0].mxu0
      %v3896 = vadd.f32 0.0, %v3895
      %v3897 = vpop.f32.mrb[0].mxu0
      %3898 = vmatprep.mubr.f32.mxu0 0.0
      %3899 = vmatmul.mubr.f32.gmra.mrb[0].mxu0 %v3715
      %v3900 = vpop.f32.mrb[0].mxu0
      %v3901 = vadd.f32 0.0, %v3900
      %v3902 = vpop.f32.mrb[0].mxu0
      %3903 = vmatprep.mubr.f32.mxu0 0.0
      %3904 = vmatmul.mubr.f32.gmra.mrb[0].mxu0 %v3718
      %v3905 = vpop.f32.mrb[0].mxu0
      %v3906 = vadd.f32 0.0, %v3905
      %v3907 = vpop.f32.mrb[0].mxu0
      %3908 = vmatprep.mubr.f32.mxu0 0.0
      %3909 = vmatmul.mubr.f32.gmra.mrb[0].mxu0 %v3721
      %v3910 = vpop.f32.mrb[0].mxu0
      %v3911 = vadd.f32 0.0, %v3910
      %v3912 = vpop.f32.mrb[0].mxu0
      %3913 = vmatprep.mubr.f32.mxu0 0.0
      %3914 = vmatmul.mubr.f32.gmra.mrb[0].mxu0 %v3724
      %v3915 = vpop.f32.mrb[0].mxu0
      %v3916 = vadd.f32 0.0, %v3915
      %v3917 = vpop.f32.mrb[0].mxu0
      %3918 = vmatprep.mubr.f32.mxu0 0.0
      %3919 = vmatmul.mubr.f32.gmra.mrb[0].mxu0 %v3727
      %v3920 = vpop.f32.mrb[0].mxu0
      %v3921 = vadd.f32 0.0, %v3920
      %v3922 = vpop.f32.mrb[0].mxu0
      %3923 = vmatprep.mubr.f32.mxu0 0.0
      %3924 = vmatmul.mubr.f32.gmra.mrb[0].mxu0 %v3730
      %v3925 = vpop.f32.mrb[0].mxu0
      %v3926 = vadd.f32 0.0, %v3925
      %v3927 = vpop.f32.mrb[0].mxu0
      %3928 = vmatprep.mubr.f32.mxu0 0.0
      %3929 = vmatmul.mubr.f32.gmra.mrb[0].mxu0 %v3733
      %v3930 = vpop.f32.mrb[0].mxu0
      %v3931 = vadd.f32 0.0, %v3930
      %v3932 = vpop.f32.mrb[0].mxu0
      %3933 = vmatprep.mubr.f32.mxu0 0.0
      %3934 = vmatmul.mubr.f32.gmra.mrb[0].mxu0 %v3736
      %v3935 = vpop.f32.mrb[0].mxu0
      %v3936 = vadd.f32 0.0, %v3935
      %v3937 = vpop.f32.mrb[0].mxu0
      %3938 = vmatprep.mubr.f32.mxu0 0.0
      %3939 = vmatmul.mubr.f32.gmra.mrb[0].mxu0 %v3739
      %v3940 = vpop.f32.mrb[0].mxu0
      %v3941 = vadd.f32 0.0, %v3940
      %v3942 = vpop.f32.mrb[0].mxu0
      %3943 = vmatprep.mubr.f32.mxu0 0.0
      %3944 = vmatmul.mubr.f32.gmra.mrb[0].mxu0 %v3742
      %v3945 = vpop.f32.mrb[0].mxu0
      %v3946 = vadd.f32 0.0, %v3945
      %v3947 = vpop.f32.mrb[0].mxu0
      %3948 = vmatprep.mubr.f32.mxu0 0.0
      %3949 = vmatmul.mubr.f32.gmra.mrb[0].mxu0 %v3745
      %v3950 = vpop.f32.mrb[0].mxu0
      %v3951 = vadd.f32 0.0, %v3950
      %v3952 = vpop.f32.mrb[0].mxu0
      %3953 = vmatprep.mubr.f32.mxu0 0.0
      %3954 = vmatmul.mubr.f32.gmra.mrb[0].mxu0 %v3748
      %v3955 = vpop.f32.mrb[0].mxu0
      %v3956 = vadd.f32 0.0, %v3955
      %v3957 = vpop.f32.mrb[0].mxu0
      %3958 = vmatprep.mubr.f32.mxu0 0.0
      %3959 = vmatmul.mubr.f32.gmra.mrb[0].mxu0 %v3751
      %v3960 = vpop.f32.mrb[0].mxu0
      %v3961 = vadd.f32 0.0, %v3960
      %v3962 = vpop.f32.mrb[0].mxu0
      %3963 = vmatprep.mubr.f32.mxu0 0.0
      %3964 = vmatmul.mubr.f32.gmra.mrb[0].mxu0 %v3754
      %v3965 = vpop.f32.mrb[0].mxu0
      %v3966 = vadd.f32 0.0, %v3965
      %v3967 = vpop.f32.mrb[0].mxu0
      %3968 = vmatprep.mubr.f32.mxu0 0.0
      %3969 = vmatmul.mubr.f32.gmra.mrb[0].mxu0 %v3757
      %v3970 = vpop.f32.mrb[0].mxu0
      %v3971 = vadd.f32 0.0, %v3970
      %v3972 = vpop.f32.mrb[0].mxu0
      %3973 = vmatprep.mubr.f32.mxu0 0.0
      %3974 = vmatmul.mubr.f32.gmra.mrb[0].mxu0 %v3760
      %v3975 = vpop.f32.mrb[0].mxu0
      %v3976 = vadd.f32 0.0, %v3975
      %v3977 = vpop.f32.mrb[0].mxu0
      %3978 = vmatprep.mubr.f32.mxu0 0.0
      %3979 = vmatmul.mubr.f32.gmra.mrb[0].mxu0 %v3763
      %v3980 = vpop.f32.mrb[0].mxu0
      %v3981 = vadd.f32 0.0, %v3980
      %v3982 = vpop.f32.mrb[0].mxu0
      %3983 = vmatprep.mubr.f32.mxu0 0.0
      %3984 = vmatmul.mubr.f32.gmra.mrb[0].mxu0 %v3766
      %v3985 = vpop.f32.mrb[0].mxu0
      %v3986 = vadd.f32 0.0, %v3985
      %v3987 = vpop.f32.mrb[0].mxu0
      %3988 = vmatprep.mubr.f32.mxu0 0.0
      %3989 = vmatmul.mubr.f32.gmra.mrb[0].mxu0 %v3769
      %v3990 = vpop.f32.mrb[0].mxu0
      %v3991 = vadd.f32 0.0, %v3990
      %v3992 = vpop.f32.mrb[0].mxu0
      %3993 = vmatprep.mubr.f32.mxu0 0.0
      %3994 = vmatmul.mubr.f32.gmra.mrb[0].mxu0 %v3772
      %v3995 = vpop.f32.mrb[0].mxu0
      %v3996 = vadd.f32 0.0, %v3995
      %v3997 = vpop.f32.mrb[0].mxu0
      %3998 = vmatprep.mubr.f32.mxu0 0.0
      %3999 = vmatmul.mubr.f32.gmra.mrb[0].mxu0 %v3775
      %v4000 = vpop.f32.mrb[0].mxu0
      %v4001 = vadd.f32 0.0, %v4000
      %v4002 = vpop.f32.mrb[0].mxu0
      %4003 = vmatprep.mubr.f32.mxu0 0.0
      %4004 = vmatmul.mubr.f32.gmra.mrb[0].mxu0 %v3778
      %v4005 = vpop.f32.mrb[0].mxu0
      %v4006 = vadd.f32 0.0, %v4005
      %v4007 = vpop.f32.mrb[0].mxu0
      %4008 = vdwg.mxu0
      %v4010 = vsel %vm896, %v864, 0
      %v4013 = vsel %vm896, %v865, 0
      %v4016 = vsel %vm896, %v866, 0
      %v4019 = vsel %vm896, %v867, 0
      %v4022 = vsel %vm896, %v868, 0
      %v4025 = vsel %vm896, %v869, 0
      %v4028 = vsel %vm896, %v870, 0
      %v4031 = vsel %vm896, %v871, 0
      %v4034 = vsel %vm896, %v872, 0
      %v4037 = vsel %vm896, %v873, 0
      %v4040 = vsel %vm896, %v874, 0
      %v4043 = vsel %vm896, %v875, 0
      %v4046 = vsel %vm896, %v876, 0
      %v4049 = vsel %vm896, %v877, 0
      %v4052 = vsel %vm896, %v878, 0
      %v4055 = vsel %vm896, %v879, 0
      %v4058 = vsel %vm896, %v880, 0
      %v4061 = vsel %vm896, %v881, 0
      %v4064 = vsel %vm896, %v882, 0
      %v4067 = vsel %vm896, %v883, 0
      %v4070 = vsel %vm896, %v884, 0
      %v4073 = vsel %vm896, %v885, 0
      %v4076 = vsel %vm896, %v886, 0
      %v4079 = vsel %vm896, %v887, 0
      %v4082 = vsel %vm896, %v888, 0
      %v4085 = vsel %vm896, %v889, 0
      %v4088 = vsel %vm896, %v890, 0
      %v4091 = vsel %vm896, %v891, 0
      %v4094 = vsel %vm896, %v892, 0
      %v4097 = vsel %vm896, %v893, 0
      %v4100 = vsel %vm896, %v894, 0
      %v4103 = vsel %vm896, %v895, 0
      %v4106 = vsel %vm3780, %v3682, 0
      %4108 = vmatprep.subr.mxu0 0.0
      %4109 = vmatpush1.msra.mxu0 %v4106
      %4110 = vmatprep.subr.mxu0 0.0
      %4111 = vmatpush1.msra.mxu0 0.0
      %4112 = vmatprep.subr.mxu0 0.0
      %4113 = vmatpush1.msra.mxu0 0.0
      %4114 = vmatprep.subr.mxu0 0.0
      %4115 = vmatpush1.msra.mxu0 0.0
      %4116 = vmatprep.subr.mxu0 0.0
      %4117 = vmatpush1.msra.mxu0 0.0
      %4118 = vmatprep.subr.mxu0 0.0
      %4119 = vmatpush1.msra.mxu0 0.0
      %4120 = vmatprep.subr.mxu0 0.0
      %4121 = vmatpush1.msra.mxu0 0.0
      %4122 = vmatprep.subr.mxu0 0.0
      %4123 = vmatpush1.msra.mxu0 0.0
      %4124 = vmatprep.subr.mxu0 0.0
      %4125 = vmatpush1.msra.mxu0 0.0
      %4126 = vmatprep.subr.mxu0 0.0
      %4127 = vmatpush1.msra.mxu0 0.0
      %4128 = vmatprep.subr.mxu0 0.0
      %4129 = vmatpush1.msra.mxu0 0.0
      %4130 = vmatprep.subr.mxu0 0.0
      %4131 = vmatpush1.msra.mxu0 0.0
      %4132 = vmatprep.subr.mxu0 0.0
      %4133 = vmatpush1.msra.mxu0 0.0
      %4134 = vmatprep.subr.mxu0 0.0
      %4135 = vmatpush1.msra.mxu0 0.0
      %4136 = vmatprep.subr.mxu0 0.0
      %4137 = vmatpush1.msra.mxu0 0.0
      %4138 = vmatprep.subr.mxu0 0.0
      %4139 = vmatpush1.msra.mxu0 0.0
      %4140 = vmatprep.subr.mxu0 0.0
      %4141 = vmatpush1.msra.mxu0 0.0
      %4142 = vmatprep.subr.mxu0 0.0
      %4143 = vmatpush1.msra.mxu0 0.0
      %4144 = vmatprep.subr.mxu0 0.0
      %4145 = vmatpush1.msra.mxu0 0.0
      %4146 = vmatprep.subr.mxu0 0.0
      %4147 = vmatpush1.msra.mxu0 0.0
      %4148 = vmatprep.subr.mxu0 0.0
      %4149 = vmatpush1.msra.mxu0 0.0
      %4150 = vmatprep.subr.mxu0 0.0
      %4151 = vmatpush1.msra.mxu0 0.0
      %4152 = vmatprep.subr.mxu0 0.0
      %4153 = vmatpush1.msra.mxu0 0.0
      %4154 = vmatprep.subr.mxu0 0.0
      %4155 = vmatpush1.msra.mxu0 0.0
      %4156 = vmatprep.subr.mxu0 0.0
      %4157 = vmatpush1.msra.mxu0 0.0
      %4158 = vmatprep.subr.mxu0 0.0
      %4159 = vmatpush1.msra.mxu0 0.0
      %4160 = vmatprep.subr.mxu0 0.0
      %4161 = vmatpush1.msra.mxu0 0.0
      %4162 = vmatprep.subr.mxu0 0.0
      %4163 = vmatpush1.msra.mxu0 0.0
      %4164 = vmatprep.subr.mxu0 0.0
      %4165 = vmatpush1.msra.mxu0 0.0
      %4166 = vmatprep.subr.mxu0 0.0
      %4167 = vmatpush1.msra.mxu0 0.0
      %4168 = vmatprep.subr.mxu0 0.0
      %4169 = vmatpush1.msra.mxu0 0.0
      %4170 = vmatprep.subr.mxu0 0.0
      %4171 = vmatpush1.msra.mxu0 0.0
      %4172 = vmatprep.mubr.f32.mxu0 0.0
      %4173 = vmatmul.mubr.f32.gmra.mrb[0].mxu0 %v4010
      %v4174 = vpop.f32.mrb[0].mxu0
      %v4175 = vadd.f32 %v3851, %v4174
      %v4176 = vpop.f32.mrb[0].mxu0
      %4177 = vmatprep.mubr.f32.mxu0 0.0
      %4178 = vmatmul.mubr.f32.gmra.mrb[0].mxu0 %v4013
      %v4179 = vpop.f32.mrb[0].mxu0
      %v4180 = vadd.f32 %v3856, %v4179
      %v4181 = vpop.f32.mrb[0].mxu0
      %4182 = vmatprep.mubr.f32.mxu0 0.0
      %4183 = vmatmul.mubr.f32.gmra.mrb[0].mxu0 %v4016
      %v4184 = vpop.f32.mrb[0].mxu0
      %v4185 = vadd.f32 %v3861, %v4184
      %v4186 = vpop.f32.mrb[0].mxu0
      %4187 = vmatprep.mubr.f32.mxu0 0.0
      %4188 = vmatmul.mubr.f32.gmra.mrb[0].mxu0 %v4019
      %v4189 = vpop.f32.mrb[0].mxu0
      %v4190 = vadd.f32 %v3866, %v4189
      %v4191 = vpop.f32.mrb[0].mxu0
      %4192 = vmatprep.mubr.f32.mxu0 0.0
      %4193 = vmatmul.mubr.f32.gmra.mrb[0].mxu0 %v4022
      %v4194 = vpop.f32.mrb[0].mxu0
      %v4195 = vadd.f32 %v3871, %v4194
      %v4196 = vpop.f32.mrb[0].mxu0
      %4197 = vmatprep.mubr.f32.mxu0 0.0
      %4198 = vmatmul.mubr.f32.gmra.mrb[0].mxu0 %v4025
      %v4199 = vpop.f32.mrb[0].mxu0
      %v4200 = vadd.f32 %v3876, %v4199
      %v4201 = vpop.f32.mrb[0].mxu0
      %4202 = vmatprep.mubr.f32.mxu0 0.0
      %4203 = vmatmul.mubr.f32.gmra.mrb[0].mxu0 %v4028
      %v4204 = vpop.f32.mrb[0].mxu0
      %v4205 = vadd.f32 %v3881, %v4204
      %v4206 = vpop.f32.mrb[0].mxu0
      %4207 = vmatprep.mubr.f32.mxu0 0.0
      %4208 = vmatmul.mubr.f32.gmra.mrb[0].mxu0 %v4031
      %v4209 = vpop.f32.mrb[0].mxu0
      %v4210 = vadd.f32 %v3886, %v4209
      %v4211 = vpop.f32.mrb[0].mxu0
      %4212 = vmatprep.mubr.f32.mxu0 0.0
      %4213 = vmatmul.mubr.f32.gmra.mrb[0].mxu0 %v4034
      %v4214 = vpop.f32.mrb[0].mxu0
      %v4215 = vadd.f32 %v3891, %v4214
      %v4216 = vpop.f32.mrb[0].mxu0
      %4217 = vmatprep.mubr.f32.mxu0 0.0
      %4218 = vmatmul.mubr.f32.gmra.mrb[0].mxu0 %v4037
      %v4219 = vpop.f32.mrb[0].mxu0
      %v4220 = vadd.f32 %v3896, %v4219
      %v4221 = vpop.f32.mrb[0].mxu0
      %4222 = vmatprep.mubr.f32.mxu0 0.0
      %4223 = vmatmul.mubr.f32.gmra.mrb[0].mxu0 %v4040
      %v4224 = vpop.f32.mrb[0].mxu0
      %v4225 = vadd.f32 %v3901, %v4224
      %v4226 = vpop.f32.mrb[0].mxu0
      %4227 = vmatprep.mubr.f32.mxu0 0.0
      %4228 = vmatmul.mubr.f32.gmra.mrb[0].mxu0 %v4043
      %v4229 = vpop.f32.mrb[0].mxu0
      %v4230 = vadd.f32 %v3906, %v4229
      %v4231 = vpop.f32.mrb[0].mxu0
      %4232 = vmatprep.mubr.f32.mxu0 0.0
      %4233 = vmatmul.mubr.f32.gmra.mrb[0].mxu0 %v4046
      %v4234 = vpop.f32.mrb[0].mxu0
      %v4235 = vadd.f32 %v3911, %v4234
      %v4236 = vpop.f32.mrb[0].mxu0
      %4237 = vmatprep.mubr.f32.mxu0 0.0
      %4238 = vmatmul.mubr.f32.gmra.mrb[0].mxu0 %v4049
      %v4239 = vpop.f32.mrb[0].mxu0
      %v4240 = vadd.f32 %v3916, %v4239
      %v4241 = vpop.f32.mrb[0].mxu0
      %4242 = vmatprep.mubr.f32.mxu0 0.0
      %4243 = vmatmul.mubr.f32.gmra.mrb[0].mxu0 %v4052
      %v4244 = vpop.f32.mrb[0].mxu0
      %v4245 = vadd.f32 %v3921, %v4244
      %v4246 = vpop.f32.mrb[0].mxu0
      %4247 = vmatprep.mubr.f32.mxu0 0.0
      %4248 = vmatmul.mubr.f32.gmra.mrb[0].mxu0 %v4055
      %v4249 = vpop.f32.mrb[0].mxu0
      %v4250 = vadd.f32 %v3926, %v4249
      %v4251 = vpop.f32.mrb[0].mxu0
      %4252 = vmatprep.mubr.f32.mxu0 0.0
      %4253 = vmatmul.mubr.f32.gmra.mrb[0].mxu0 %v4058
      %v4254 = vpop.f32.mrb[0].mxu0
      %v4255 = vadd.f32 %v3931, %v4254
      %v4256 = vpop.f32.mrb[0].mxu0
      %4257 = vmatprep.mubr.f32.mxu0 0.0
      %4258 = vmatmul.mubr.f32.gmra.mrb[0].mxu0 %v4061
      %v4259 = vpop.f32.mrb[0].mxu0
      %v4260 = vadd.f32 %v3936, %v4259
      %v4261 = vpop.f32.mrb[0].mxu0
      %4262 = vmatprep.mubr.f32.mxu0 0.0
      %4263 = vmatmul.mubr.f32.gmra.mrb[0].mxu0 %v4064
      %v4264 = vpop.f32.mrb[0].mxu0
      %v4265 = vadd.f32 %v3941, %v4264
      %v4266 = vpop.f32.mrb[0].mxu0
      %4267 = vmatprep.mubr.f32.mxu0 0.0
      %4268 = vmatmul.mubr.f32.gmra.mrb[0].mxu0 %v4067
      %v4269 = vpop.f32.mrb[0].mxu0
      %v4270 = vadd.f32 %v3946, %v4269
      %v4271 = vpop.f32.mrb[0].mxu0
      %4272 = vmatprep.mubr.f32.mxu0 0.0
      %4273 = vmatmul.mubr.f32.gmra.mrb[0].mxu0 %v4070
      %v4274 = vpop.f32.mrb[0].mxu0
      %v4275 = vadd.f32 %v3951, %v4274
      %v4276 = vpop.f32.mrb[0].mxu0
      %4277 = vmatprep.mubr.f32.mxu0 0.0
      %4278 = vmatmul.mubr.f32.gmra.mrb[0].mxu0 %v4073
      %v4279 = vpop.f32.mrb[0].mxu0
      %v4280 = vadd.f32 %v3956, %v4279
      %v4281 = vpop.f32.mrb[0].mxu0
      %4282 = vmatprep.mubr.f32.mxu0 0.0
      %4283 = vmatmul.mubr.f32.gmra.mrb[0].mxu0 %v4076
      %v4284 = vpop.f32.mrb[0].mxu0
      %v4285 = vadd.f32 %v3961, %v4284
      %v4286 = vpop.f32.mrb[0].mxu0
      %4287 = vmatprep.mubr.f32.mxu0 0.0
      %4288 = vmatmul.mubr.f32.gmra.mrb[0].mxu0 %v4079
      %v4289 = vpop.f32.mrb[0].mxu0
      %v4290 = vadd.f32 %v3966, %v4289
      %v4291 = vpop.f32.mrb[0].mxu0
      %4292 = vmatprep.mubr.f32.mxu0 0.0
      %4293 = vmatmul.mubr.f32.gmra.mrb[0].mxu0 %v4082
      %v4294 = vpop.f32.mrb[0].mxu0
      %v4295 = vadd.f32 %v3971, %v4294
      %v4296 = vpop.f32.mrb[0].mxu0
      %4297 = vmatprep.mubr.f32.mxu0 0.0
      %4298 = vmatmul.mubr.f32.gmra.mrb[0].mxu0 %v4085
      %v4299 = vpop.f32.mrb[0].mxu0
      %v4300 = vadd.f32 %v3976, %v4299
      %v4301 = vpop.f32.mrb[0].mxu0
      %4302 = vmatprep.mubr.f32.mxu0 0.0
      %4303 = vmatmul.mubr.f32.gmra.mrb[0].mxu0 %v4088
      %v4304 = vpop.f32.mrb[0].mxu0
      %v4305 = vadd.f32 %v3981, %v4304
      %v4306 = vpop.f32.mrb[0].mxu0
      %4307 = vmatprep.mubr.f32.mxu0 0.0
      %4308 = vmatmul.mubr.f32.gmra.mrb[0].mxu0 %v4091
      %v4309 = vpop.f32.mrb[0].mxu0
      %v4310 = vadd.f32 %v3986, %v4309
      %v4311 = vpop.f32.mrb[0].mxu0
      %4312 = vmatprep.mubr.f32.mxu0 0.0
      %4313 = vmatmul.mubr.f32.gmra.mrb[0].mxu0 %v4094
      %v4314 = vpop.f32.mrb[0].mxu0
      %v4315 = vadd.f32 %v3991, %v4314
      %v4316 = vpop.f32.mrb[0].mxu0
      %4317 = vmatprep.mubr.f32.mxu0 0.0
      %4318 = vmatmul.mubr.f32.gmra.mrb[0].mxu0 %v4097
      %v4319 = vpop.f32.mrb[0].mxu0
      %v4320 = vadd.f32 %v3996, %v4319
      %v4321 = vpop.f32.mrb[0].mxu0
      %4322 = vmatprep.mubr.f32.mxu0 0.0
      %4323 = vmatmul.mubr.f32.gmra.mrb[0].mxu0 %v4100
      %v4324 = vpop.f32.mrb[0].mxu0
      %v4325 = vadd.f32 %v4001, %v4324
      %v4326 = vpop.f32.mrb[0].mxu0
      %4327 = vmatprep.mubr.f32.mxu0 0.0
      %4328 = vmatmul.mubr.f32.gmra.mrb[0].mxu0 %v4103
      %v4329 = vpop.f32.mrb[0].mxu0
      %v4330 = vadd.f32 %v4006, %v4329
      %v4331 = vpop.f32.mrb[0].mxu0
      %4332 = vdwg.mxu0
      %v4333 = vld [vmem:[%s5] sm:$0x3]
      %v4335 = vsel %vm896, %v3034, 0
      %v4338 = vsel %vm896, %v3035, 0
      %v4341 = vsel %vm896, %v3036, 0
      %v4344 = vsel %vm896, %v3037, 0
      %v4347 = vsel %vm896, %v3038, 0
      %v4350 = vsel %vm896, %v3039, 0
      %v4353 = vsel %vm896, %v3040, 0
      %v4356 = vsel %vm896, %v3041, 0
      %v4359 = vsel %vm896, %v3042, 0
      %v4362 = vsel %vm896, %v3043, 0
      %v4365 = vsel %vm896, %v3044, 0
      %v4368 = vsel %vm896, %v3045, 0
      %v4371 = vsel %vm896, %v3046, 0
      %v4374 = vsel %vm896, %v3047, 0
      %v4377 = vsel %vm896, %v3048, 0
      %v4380 = vsel %vm896, %v3049, 0
      %v4383 = vsel %vm896, %v3050, 0
      %v4386 = vsel %vm896, %v3051, 0
      %v4389 = vsel %vm896, %v3052, 0
      %v4392 = vsel %vm896, %v3053, 0
      %v4395 = vsel %vm896, %v3054, 0
      %v4398 = vsel %vm896, %v3055, 0
      %v4401 = vsel %vm896, %v3056, 0
      %v4404 = vsel %vm896, %v3057, 0
      %v4407 = vsel %vm896, %v3058, 0
      %v4410 = vsel %vm896, %v3059, 0
      %v4413 = vsel %vm896, %v3060, 0
      %v4416 = vsel %vm896, %v3061, 0
      %v4419 = vsel %vm896, %v3062, 0
      %v4422 = vsel %vm896, %v3063, 0
      %v4425 = vsel %vm896, %v3064, 0
      %v4428 = vsel %vm896, %v3065, 0
      %v4431 = vsel %vm3780, %v4333, 0
      %4433 = vmatprep.subr.mxu0 0.0
      %4434 = vmatpush1.msra.mxu0 %v4431
      %4435 = vmatprep.subr.mxu0 0.0
      %4436 = vmatpush1.msra.mxu0 0.0
      %4437 = vmatprep.subr.mxu0 0.0
      %4438 = vmatpush1.msra.mxu0 0.0
      %4439 = vmatprep.subr.mxu0 0.0
      %4440 = vmatpush1.msra.mxu0 0.0
      %4441 = vmatprep.subr.mxu0 0.0
      %4442 = vmatpush1.msra.mxu0 0.0
      %4443 = vmatprep.subr.mxu0 0.0
      %4444 = vmatpush1.msra.mxu0 0.0
      %4445 = vmatprep.subr.mxu0 0.0
      %4446 = vmatpush1.msra.mxu0 0.0
      %4447 = vmatprep.subr.mxu0 0.0
      %4448 = vmatpush1.msra.mxu0 0.0
      %4449 = vmatprep.subr.mxu0 0.0
      %4450 = vmatpush1.msra.mxu0 0.0
      %4451 = vmatprep.subr.mxu0 0.0
      %4452 = vmatpush1.msra.mxu0 0.0
      %4453 = vmatprep.subr.mxu0 0.0
      %4454 = vmatpush1.msra.mxu0 0.0
      %4455 = vmatprep.subr.mxu0 0.0
      %4456 = vmatpush1.msra.mxu0 0.0
      %4457 = vmatprep.subr.mxu0 0.0
      %4458 = vmatpush1.msra.mxu0 0.0
      %4459 = vmatprep.subr.mxu0 0.0
      %4460 = vmatpush1.msra.mxu0 0.0
      %4461 = vmatprep.subr.mxu0 0.0
      %4462 = vmatpush1.msra.mxu0 0.0
      %4463 = vmatprep.subr.mxu0 0.0
      %4464 = vmatpush1.msra.mxu0 0.0
      %4465 = vmatprep.subr.mxu0 0.0
      %4466 = vmatpush1.msra.mxu0 0.0
      %4467 = vmatprep.subr.mxu0 0.0
      %4468 = vmatpush1.msra.mxu0 0.0
      %4469 = vmatprep.subr.mxu0 0.0
      %4470 = vmatpush1.msra.mxu0 0.0
      %4471 = vmatprep.subr.mxu0 0.0
      %4472 = vmatpush1.msra.mxu0 0.0
      %4473 = vmatprep.subr.mxu0 0.0
      %4474 = vmatpush1.msra.mxu0 0.0
      %4475 = vmatprep.subr.mxu0 0.0
      %4476 = vmatpush1.msra.mxu0 0.0
      %4477 = vmatprep.subr.mxu0 0.0
      %4478 = vmatpush1.msra.mxu0 0.0
      %4479 = vmatprep.subr.mxu0 0.0
      %4480 = vmatpush1.msra.mxu0 0.0
      %4481 = vmatprep.subr.mxu0 0.0
      %4482 = vmatpush1.msra.mxu0 0.0
      %4483 = vmatprep.subr.mxu0 0.0
      %4484 = vmatpush1.msra.mxu0 0.0
      %4485 = vmatprep.subr.mxu0 0.0
      %4486 = vmatpush1.msra.mxu0 0.0
      %4487 = vmatprep.subr.mxu0 0.0
      %4488 = vmatpush1.msra.mxu0 0.0
      %4489 = vmatprep.subr.mxu0 0.0
      %4490 = vmatpush1.msra.mxu0 0.0
      %4491 = vmatprep.subr.mxu0 0.0
      %4492 = vmatpush1.msra.mxu0 0.0
      %4493 = vmatprep.subr.mxu0 0.0
      %4494 = vmatpush1.msra.mxu0 0.0
      %4495 = vmatprep.subr.mxu0 0.0
      %4496 = vmatpush1.msra.mxu0 0.0
      %4497 = vmatprep.mubr.f32.mxu0 0.0
      %4498 = vmatmul.mubr.f32.gmra.mrb[0].mxu0 %v4335
      %v4499 = vpop.f32.mrb[0].mxu0
      %v4500 = vadd.f32 0.0, %v4499
      %v4501 = vpop.f32.mrb[0].mxu0
      %4502 = vmatprep.mubr.f32.mxu0 0.0
      %4503 = vmatmul.mubr.f32.gmra.mrb[0].mxu0 %v4338
      %v4504 = vpop.f32.mrb[0].mxu0
      %v4505 = vadd.f32 0.0, %v4504
      %v4506 = vpop.f32.mrb[0].mxu0
      %4507 = vmatprep.mubr.f32.mxu0 0.0
      %4508 = vmatmul.mubr.f32.gmra.mrb[0].mxu0 %v4341
      %v4509 = vpop.f32.mrb[0].mxu0
      %v4510 = vadd.f32 0.0, %v4509
      %v4511 = vpop.f32.mrb[0].mxu0
      %4512 = vmatprep.mubr.f32.mxu0 0.0
      %4513 = vmatmul.mubr.f32.gmra.mrb[0].mxu0 %v4344
      %v4514 = vpop.f32.mrb[0].mxu0
      %v4515 = vadd.f32 0.0, %v4514
      %v4516 = vpop.f32.mrb[0].mxu0
      %4517 = vmatprep.mubr.f32.mxu0 0.0
      %4518 = vmatmul.mubr.f32.gmra.mrb[0].mxu0 %v4347
      %v4519 = vpop.f32.mrb[0].mxu0
      %v4520 = vadd.f32 0.0, %v4519
      %v4521 = vpop.f32.mrb[0].mxu0
      %4522 = vmatprep.mubr.f32.mxu0 0.0
      %4523 = vmatmul.mubr.f32.gmra.mrb[0].mxu0 %v4350
      %v4524 = vpop.f32.mrb[0].mxu0
      %v4525 = vadd.f32 0.0, %v4524
      %v4526 = vpop.f32.mrb[0].mxu0
      %4527 = vmatprep.mubr.f32.mxu0 0.0
      %4528 = vmatmul.mubr.f32.gmra.mrb[0].mxu0 %v4353
      %v4529 = vpop.f32.mrb[0].mxu0
      %v4530 = vadd.f32 0.0, %v4529
      %v4531 = vpop.f32.mrb[0].mxu0
      %4532 = vmatprep.mubr.f32.mxu0 0.0
      %4533 = vmatmul.mubr.f32.gmra.mrb[0].mxu0 %v4356
      %v4534 = vpop.f32.mrb[0].mxu0
      %v4535 = vadd.f32 0.0, %v4534
      %v4536 = vpop.f32.mrb[0].mxu0
      %4537 = vmatprep.mubr.f32.mxu0 0.0
      %4538 = vmatmul.mubr.f32.gmra.mrb[0].mxu0 %v4359
      %v4539 = vpop.f32.mrb[0].mxu0
      %v4540 = vadd.f32 0.0, %v4539
      %v4541 = vpop.f32.mrb[0].mxu0
      %4542 = vmatprep.mubr.f32.mxu0 0.0
      %4543 = vmatmul.mubr.f32.gmra.mrb[0].mxu0 %v4362
      %v4544 = vpop.f32.mrb[0].mxu0
      %v4545 = vadd.f32 0.0, %v4544
      %v4546 = vpop.f32.mrb[0].mxu0
      %4547 = vmatprep.mubr.f32.mxu0 0.0
      %4548 = vmatmul.mubr.f32.gmra.mrb[0].mxu0 %v4365
      %v4549 = vpop.f32.mrb[0].mxu0
      %v4550 = vadd.f32 0.0, %v4549
      %v4551 = vpop.f32.mrb[0].mxu0
      %4552 = vmatprep.mubr.f32.mxu0 0.0
      %4553 = vmatmul.mubr.f32.gmra.mrb[0].mxu0 %v4368
      %v4554 = vpop.f32.mrb[0].mxu0
      %v4555 = vadd.f32 0.0, %v4554
      %v4556 = vpop.f32.mrb[0].mxu0
      %4557 = vmatprep.mubr.f32.mxu0 0.0
      %4558 = vmatmul.mubr.f32.gmra.mrb[0].mxu0 %v4371
      %v4559 = vpop.f32.mrb[0].mxu0
      %v4560 = vadd.f32 0.0, %v4559
      %v4561 = vpop.f32.mrb[0].mxu0
      %4562 = vmatprep.mubr.f32.mxu0 0.0
      %4563 = vmatmul.mubr.f32.gmra.mrb[0].mxu0 %v4374
      %v4564 = vpop.f32.mrb[0].mxu0
      %v4565 = vadd.f32 0.0, %v4564
      %v4566 = vpop.f32.mrb[0].mxu0
      %4567 = vmatprep.mubr.f32.mxu0 0.0
      %4568 = vmatmul.mubr.f32.gmra.mrb[0].mxu0 %v4377
      %v4569 = vpop.f32.mrb[0].mxu0
      %v4570 = vadd.f32 0.0, %v4569
      %v4571 = vpop.f32.mrb[0].mxu0
      %4572 = vmatprep.mubr.f32.mxu0 0.0
      %4573 = vmatmul.mubr.f32.gmra.mrb[0].mxu0 %v4380
      %v4574 = vpop.f32.mrb[0].mxu0
      %v4575 = vadd.f32 0.0, %v4574
      %v4576 = vpop.f32.mrb[0].mxu0
      %4577 = vmatprep.mubr.f32.mxu0 0.0
      %4578 = vmatmul.mubr.f32.gmra.mrb[0].mxu0 %v4383
      %v4579 = vpop.f32.mrb[0].mxu0
      %v4580 = vadd.f32 0.0, %v4579
      %v4581 = vpop.f32.mrb[0].mxu0
      %4582 = vmatprep.mubr.f32.mxu0 0.0
      %4583 = vmatmul.mubr.f32.gmra.mrb[0].mxu0 %v4386
      %v4584 = vpop.f32.mrb[0].mxu0
      %v4585 = vadd.f32 0.0, %v4584
      %v4586 = vpop.f32.mrb[0].mxu0
      %4587 = vmatprep.mubr.f32.mxu0 0.0
      %4588 = vmatmul.mubr.f32.gmra.mrb[0].mxu0 %v4389
      %v4589 = vpop.f32.mrb[0].mxu0
      %v4590 = vadd.f32 0.0, %v4589
      %v4591 = vpop.f32.mrb[0].mxu0
      %4592 = vmatprep.mubr.f32.mxu0 0.0
      %4593 = vmatmul.mubr.f32.gmra.mrb[0].mxu0 %v4392
      %v4594 = vpop.f32.mrb[0].mxu0
      %v4595 = vadd.f32 0.0, %v4594
      %v4596 = vpop.f32.mrb[0].mxu0
      %4597 = vmatprep.mubr.f32.mxu0 0.0
      %4598 = vmatmul.mubr.f32.gmra.mrb[0].mxu0 %v4395
      %v4599 = vpop.f32.mrb[0].mxu0
      %v4600 = vadd.f32 0.0, %v4599
      %v4601 = vpop.f32.mrb[0].mxu0
      %4602 = vmatprep.mubr.f32.mxu0 0.0
      %4603 = vmatmul.mubr.f32.gmra.mrb[0].mxu0 %v4398
      %v4604 = vpop.f32.mrb[0].mxu0
      %v4605 = vadd.f32 0.0, %v4604
      %v4606 = vpop.f32.mrb[0].mxu0
      %4607 = vmatprep.mubr.f32.mxu0 0.0
      %4608 = vmatmul.mubr.f32.gmra.mrb[0].mxu0 %v4401
      %v4609 = vpop.f32.mrb[0].mxu0
      %v4610 = vadd.f32 0.0, %v4609
      %v4611 = vpop.f32.mrb[0].mxu0
      %4612 = vmatprep.mubr.f32.mxu0 0.0
      %4613 = vmatmul.mubr.f32.gmra.mrb[0].mxu0 %v4404
      %v4614 = vpop.f32.mrb[0].mxu0
      %v4615 = vadd.f32 0.0, %v4614
      %v4616 = vpop.f32.mrb[0].mxu0
      %4617 = vmatprep.mubr.f32.mxu0 0.0
      %4618 = vmatmul.mubr.f32.gmra.mrb[0].mxu0 %v4407
      %v4619 = vpop.f32.mrb[0].mxu0
      %v4620 = vadd.f32 0.0, %v4619
      %v4621 = vpop.f32.mrb[0].mxu0
      %4622 = vmatprep.mubr.f32.mxu0 0.0
      %4623 = vmatmul.mubr.f32.gmra.mrb[0].mxu0 %v4410
      %v4624 = vpop.f32.mrb[0].mxu0
      %v4625 = vadd.f32 0.0, %v4624
      %v4626 = vpop.f32.mrb[0].mxu0
      %4627 = vmatprep.mubr.f32.mxu0 0.0
      %4628 = vmatmul.mubr.f32.gmra.mrb[0].mxu0 %v4413
      %v4629 = vpop.f32.mrb[0].mxu0
      %v4630 = vadd.f32 0.0, %v4629
      %v4631 = vpop.f32.mrb[0].mxu0
      %4632 = vmatprep.mubr.f32.mxu0 0.0
      %4633 = vmatmul.mubr.f32.gmra.mrb[0].mxu0 %v4416
      %v4634 = vpop.f32.mrb[0].mxu0
      %v4635 = vadd.f32 0.0, %v4634
      %v4636 = vpop.f32.mrb[0].mxu0
      %4637 = vmatprep.mubr.f32.mxu0 0.0
      %4638 = vmatmul.mubr.f32.gmra.mrb[0].mxu0 %v4419
      %v4639 = vpop.f32.mrb[0].mxu0
      %v4640 = vadd.f32 0.0, %v4639
      %v4641 = vpop.f32.mrb[0].mxu0
      %4642 = vmatprep.mubr.f32.mxu0 0.0
      %4643 = vmatmul.mubr.f32.gmra.mrb[0].mxu0 %v4422
      %v4644 = vpop.f32.mrb[0].mxu0
      %v4645 = vadd.f32 0.0, %v4644
      %v4646 = vpop.f32.mrb[0].mxu0
      %4647 = vmatprep.mubr.f32.mxu0 0.0
      %4648 = vmatmul.mubr.f32.gmra.mrb[0].mxu0 %v4425
      %v4649 = vpop.f32.mrb[0].mxu0
      %v4650 = vadd.f32 0.0, %v4649
      %v4651 = vpop.f32.mrb[0].mxu0
      %4652 = vmatprep.mubr.f32.mxu0 0.0
      %4653 = vmatmul.mubr.f32.gmra.mrb[0].mxu0 %v4428
      %v4654 = vpop.f32.mrb[0].mxu0
      %v4655 = vadd.f32 0.0, %v4654
      %v4656 = vpop.f32.mrb[0].mxu0
      %4657 = vdwg.mxu0
      %v4658 = vadd.f32 %v4175, %v4500
      %v4659 = vadd.f32 %v4180, %v4505
      %v4660 = vadd.f32 %v4185, %v4510
      %v4661 = vadd.f32 %v4190, %v4515
      %v4662 = vadd.f32 %v4195, %v4520
      %v4663 = vadd.f32 %v4200, %v4525
      %v4664 = vadd.f32 %v4205, %v4530
      %v4665 = vadd.f32 %v4210, %v4535
      %v4666 = vadd.f32 %v4215, %v4540
      %v4667 = vadd.f32 %v4220, %v4545
      %v4668 = vadd.f32 %v4225, %v4550
      %v4669 = vadd.f32 %v4230, %v4555
      %v4670 = vadd.f32 %v4235, %v4560
      %v4671 = vadd.f32 %v4240, %v4565
      %v4672 = vadd.f32 %v4245, %v4570
      %v4673 = vadd.f32 %v4250, %v4575
      %v4674 = vadd.f32 %v4255, %v4580
      %v4675 = vadd.f32 %v4260, %v4585
      %v4676 = vadd.f32 %v4265, %v4590
      %v4677 = vadd.f32 %v4270, %v4595
      %v4678 = vadd.f32 %v4275, %v4600
      %v4679 = vadd.f32 %v4280, %v4605
      %v4680 = vadd.f32 %v4285, %v4610
      %v4681 = vadd.f32 %v4290, %v4615
      %v4682 = vadd.f32 %v4295, %v4620
      %v4683 = vadd.f32 %v4300, %v4625
      %v4684 = vadd.f32 %v4305, %v4630
      %v4685 = vadd.f32 %v4310, %v4635
      %v4686 = vadd.f32 %v4315, %v4640
      %v4687 = vadd.f32 %v4320, %v4645
      %v4688 = vadd.f32 %v4325, %v4650
      %v4689 = vadd.f32 %v4330, %v4655
      %v4690 = vld [vmem:[%s6] sm:$0x3]
      %v4692 = vsel %vm896, %v3650, 0
      %v4695 = vsel %vm896, %v3651, 0
      %v4698 = vsel %vm896, %v3652, 0
      %v4701 = vsel %vm896, %v3653, 0
      %v4704 = vsel %vm896, %v3654, 0
      %v4707 = vsel %vm896, %v3655, 0
      %v4710 = vsel %vm896, %v3656, 0
      %v4713 = vsel %vm896, %v3657, 0
      %v4716 = vsel %vm896, %v3658, 0
      %v4719 = vsel %vm896, %v3659, 0
      %v4722 = vsel %vm896, %v3660, 0
      %v4725 = vsel %vm896, %v3661, 0
      %v4728 = vsel %vm896, %v3662, 0
      %v4731 = vsel %vm896, %v3663, 0
      %v4734 = vsel %vm896, %v3664, 0
      %v4737 = vsel %vm896, %v3665, 0
      %v4740 = vsel %vm896, %v3666, 0
      %v4743 = vsel %vm896, %v3667, 0
      %v4746 = vsel %vm896, %v3668, 0
      %v4749 = vsel %vm896, %v3669, 0
      %v4752 = vsel %vm896, %v3670, 0
      %v4755 = vsel %vm896, %v3671, 0
      %v4758 = vsel %vm896, %v3672, 0
      %v4761 = vsel %vm896, %v3673, 0
      %v4764 = vsel %vm896, %v3674, 0
      %v4767 = vsel %vm896, %v3675, 0
      %v4770 = vsel %vm896, %v3676, 0
      %v4773 = vsel %vm896, %v3677, 0
      %v4776 = vsel %vm896, %v3678, 0
      %v4779 = vsel %vm896, %v3679, 0
      %v4782 = vsel %vm896, %v3680, 0
      %v4785 = vsel %vm896, %v3681, 0
      %v4788 = vsel %vm3780, %v4690, 0
      %4790 = vmatprep.subr.mxu0 0.0
      %4791 = vmatpush1.msra.mxu0 %v4788
      %4792 = vmatprep.subr.mxu0 0.0
      %4793 = vmatpush1.msra.mxu0 0.0
      %4794 = vmatprep.subr.mxu0 0.0
      %4795 = vmatpush1.msra.mxu0 0.0
      %4796 = vmatprep.subr.mxu0 0.0
      %4797 = vmatpush1.msra.mxu0 0.0
      %4798 = vmatprep.subr.mxu0 0.0
      %4799 = vmatpush1.msra.mxu0 0.0
      %4800 = vmatprep.subr.mxu0 0.0
      %4801 = vmatpush1.msra.mxu0 0.0
      %4802 = vmatprep.subr.mxu0 0.0
      %4803 = vmatpush1.msra.mxu0 0.0
      %4804 = vmatprep.subr.mxu0 0.0
      %4805 = vmatpush1.msra.mxu0 0.0
      %4806 = vmatprep.subr.mxu0 0.0
      %4807 = vmatpush1.msra.mxu0 0.0
      %4808 = vmatprep.subr.mxu0 0.0
      %4809 = vmatpush1.msra.mxu0 0.0
      %4810 = vmatprep.subr.mxu0 0.0
      %4811 = vmatpush1.msra.mxu0 0.0
      %4812 = vmatprep.subr.mxu0 0.0
      %4813 = vmatpush1.msra.mxu0 0.0
      %4814 = vmatprep.subr.mxu0 0.0
      %4815 = vmatpush1.msra.mxu0 0.0
      %4816 = vmatprep.subr.mxu0 0.0
      %4817 = vmatpush1.msra.mxu0 0.0
      %4818 = vmatprep.subr.mxu0 0.0
      %4819 = vmatpush1.msra.mxu0 0.0
      %4820 = vmatprep.subr.mxu0 0.0
      %4821 = vmatpush1.msra.mxu0 0.0
      %4822 = vmatprep.subr.mxu0 0.0
      %4823 = vmatpush1.msra.mxu0 0.0
      %4824 = vmatprep.subr.mxu0 0.0
      %4825 = vmatpush1.msra.mxu0 0.0
      %4826 = vmatprep.subr.mxu0 0.0
      %4827 = vmatpush1.msra.mxu0 0.0
      %4828 = vmatprep.subr.mxu0 0.0
      %4829 = vmatpush1.msra.mxu0 0.0
      %4830 = vmatprep.subr.mxu0 0.0
      %4831 = vmatpush1.msra.mxu0 0.0
      %4832 = vmatprep.subr.mxu0 0.0
      %4833 = vmatpush1.msra.mxu0 0.0
      %4834 = vmatprep.subr.mxu0 0.0
      %4835 = vmatpush1.msra.mxu0 0.0
      %4836 = vmatprep.subr.mxu0 0.0
      %4837 = vmatpush1.msra.mxu0 0.0
      %4838 = vmatprep.subr.mxu0 0.0
      %4839 = vmatpush1.msra.mxu0 0.0
      %4840 = vmatprep.subr.mxu0 0.0
      %4841 = vmatpush1.msra.mxu0 0.0
      %4842 = vmatprep.subr.mxu0 0.0
      %4843 = vmatpush1.msra.mxu0 0.0
      %4844 = vmatprep.subr.mxu0 0.0
      %4845 = vmatpush1.msra.mxu0 0.0
      %4846 = vmatprep.subr.mxu0 0.0
      %4847 = vmatpush1.msra.mxu0 0.0
      %4848 = vmatprep.subr.mxu0 0.0
      %4849 = vmatpush1.msra.mxu0 0.0
      %4850 = vmatprep.subr.mxu0 0.0
      %4851 = vmatpush1.msra.mxu0 0.0
      %4852 = vmatprep.subr.mxu0 0.0
      %4853 = vmatpush1.msra.mxu0 0.0
      %4854 = vmatprep.mubr.f32.mxu0 0.0
      %4855 = vmatmul.mubr.f32.gmra.mrb[0].mxu0 %v4692
      %v4856 = vpop.f32.mrb[0].mxu0
      %v4857 = vadd.f32 0.0, %v4856
      %v4858 = vpop.f32.mrb[0].mxu0
      %4859 = vmatprep.mubr.f32.mxu0 0.0
      %4860 = vmatmul.mubr.f32.gmra.mrb[0].mxu0 %v4695
      %v4861 = vpop.f32.mrb[0].mxu0
      %v4862 = vadd.f32 0.0, %v4861
      %v4863 = vpop.f32.mrb[0].mxu0
      %4864 = vmatprep.mubr.f32.mxu0 0.0
      %4865 = vmatmul.mubr.f32.gmra.mrb[0].mxu0 %v4698
      %v4866 = vpop.f32.mrb[0].mxu0
      %v4867 = vadd.f32 0.0, %v4866
      %v4868 = vpop.f32.mrb[0].mxu0
      %4869 = vmatprep.mubr.f32.mxu0 0.0
      %4870 = vmatmul.mubr.f32.gmra.mrb[0].mxu0 %v4701
      %v4871 = vpop.f32.mrb[0].mxu0
      %v4872 = vadd.f32 0.0, %v4871
      %v4873 = vpop.f32.mrb[0].mxu0
      %4874 = vmatprep.mubr.f32.mxu0 0.0
      %4875 = vmatmul.mubr.f32.gmra.mrb[0].mxu0 %v4704
      %v4876 = vpop.f32.mrb[0].mxu0
      %v4877 = vadd.f32 0.0, %v4876
      %v4878 = vpop.f32.mrb[0].mxu0
      %4879 = vmatprep.mubr.f32.mxu0 0.0
      %4880 = vmatmul.mubr.f32.gmra.mrb[0].mxu0 %v4707
      %v4881 = vpop.f32.mrb[0].mxu0
      %v4882 = vadd.f32 0.0, %v4881
      %v4883 = vpop.f32.mrb[0].mxu0
      %4884 = vmatprep.mubr.f32.mxu0 0.0
      %4885 = vmatmul.mubr.f32.gmra.mrb[0].mxu0 %v4710
      %v4886 = vpop.f32.mrb[0].mxu0
      %v4887 = vadd.f32 0.0, %v4886
      %v4888 = vpop.f32.mrb[0].mxu0
      %4889 = vmatprep.mubr.f32.mxu0 0.0
      %4890 = vmatmul.mubr.f32.gmra.mrb[0].mxu0 %v4713
      %v4891 = vpop.f32.mrb[0].mxu0
      %v4892 = vadd.f32 0.0, %v4891
      %v4893 = vpop.f32.mrb[0].mxu0
      %4894 = vmatprep.mubr.f32.mxu0 0.0
      %4895 = vmatmul.mubr.f32.gmra.mrb[0].mxu0 %v4716
      %v4896 = vpop.f32.mrb[0].mxu0
      %v4897 = vadd.f32 0.0, %v4896
      %v4898 = vpop.f32.mrb[0].mxu0
      %4899 = vmatprep.mubr.f32.mxu0 0.0
      %4900 = vmatmul.mubr.f32.gmra.mrb[0].mxu0 %v4719
      %v4901 = vpop.f32.mrb[0].mxu0
      %v4902 = vadd.f32 0.0, %v4901
      %v4903 = vpop.f32.mrb[0].mxu0
      %4904 = vmatprep.mubr.f32.mxu0 0.0
      %4905 = vmatmul.mubr.f32.gmra.mrb[0].mxu0 %v4722
      %v4906 = vpop.f32.mrb[0].mxu0
      %v4907 = vadd.f32 0.0, %v4906
      %v4908 = vpop.f32.mrb[0].mxu0
      %4909 = vmatprep.mubr.f32.mxu0 0.0
      %4910 = vmatmul.mubr.f32.gmra.mrb[0].mxu0 %v4725
      %v4911 = vpop.f32.mrb[0].mxu0
      %v4912 = vadd.f32 0.0, %v4911
      %v4913 = vpop.f32.mrb[0].mxu0
      %4914 = vmatprep.mubr.f32.mxu0 0.0
      %4915 = vmatmul.mubr.f32.gmra.mrb[0].mxu0 %v4728
      %v4916 = vpop.f32.mrb[0].mxu0
      %v4917 = vadd.f32 0.0, %v4916
      %v4918 = vpop.f32.mrb[0].mxu0
      %4919 = vmatprep.mubr.f32.mxu0 0.0
      %4920 = vmatmul.mubr.f32.gmra.mrb[0].mxu0 %v4731
      %v4921 = vpop.f32.mrb[0].mxu0
      %v4922 = vadd.f32 0.0, %v4921
      %v4923 = vpop.f32.mrb[0].mxu0
      %4924 = vmatprep.mubr.f32.mxu0 0.0
      %4925 = vmatmul.mubr.f32.gmra.mrb[0].mxu0 %v4734
      %v4926 = vpop.f32.mrb[0].mxu0
      %v4927 = vadd.f32 0.0, %v4926
      %v4928 = vpop.f32.mrb[0].mxu0
      %4929 = vmatprep.mubr.f32.mxu0 0.0
      %4930 = vmatmul.mubr.f32.gmra.mrb[0].mxu0 %v4737
      %v4931 = vpop.f32.mrb[0].mxu0
      %v4932 = vadd.f32 0.0, %v4931
      %v4933 = vpop.f32.mrb[0].mxu0
      %4934 = vmatprep.mubr.f32.mxu0 0.0
      %4935 = vmatmul.mubr.f32.gmra.mrb[0].mxu0 %v4740
      %v4936 = vpop.f32.mrb[0].mxu0
      %v4937 = vadd.f32 0.0, %v4936
      %v4938 = vpop.f32.mrb[0].mxu0
      %4939 = vmatprep.mubr.f32.mxu0 0.0
      %4940 = vmatmul.mubr.f32.gmra.mrb[0].mxu0 %v4743
      %v4941 = vpop.f32.mrb[0].mxu0
      %v4942 = vadd.f32 0.0, %v4941
      %v4943 = vpop.f32.mrb[0].mxu0
      %4944 = vmatprep.mubr.f32.mxu0 0.0
      %4945 = vmatmul.mubr.f32.gmra.mrb[0].mxu0 %v4746
      %v4946 = vpop.f32.mrb[0].mxu0
      %v4947 = vadd.f32 0.0, %v4946
      %v4948 = vpop.f32.mrb[0].mxu0
      %4949 = vmatprep.mubr.f32.mxu0 0.0
      %4950 = vmatmul.mubr.f32.gmra.mrb[0].mxu0 %v4749
      %v4951 = vpop.f32.mrb[0].mxu0
      %v4952 = vadd.f32 0.0, %v4951
      %v4953 = vpop.f32.mrb[0].mxu0
      %4954 = vmatprep.mubr.f32.mxu0 0.0
      %4955 = vmatmul.mubr.f32.gmra.mrb[0].mxu0 %v4752
      %v4956 = vpop.f32.mrb[0].mxu0
      %v4957 = vadd.f32 0.0, %v4956
      %v4958 = vpop.f32.mrb[0].mxu0
      %4959 = vmatprep.mubr.f32.mxu0 0.0
      %4960 = vmatmul.mubr.f32.gmra.mrb[0].mxu0 %v4755
      %v4961 = vpop.f32.mrb[0].mxu0
      %v4962 = vadd.f32 0.0, %v4961
      %v4963 = vpop.f32.mrb[0].mxu0
      %4964 = vmatprep.mubr.f32.mxu0 0.0
      %4965 = vmatmul.mubr.f32.gmra.mrb[0].mxu0 %v4758
      %v4966 = vpop.f32.mrb[0].mxu0
      %v4967 = vadd.f32 0.0, %v4966
      %v4968 = vpop.f32.mrb[0].mxu0
      %4969 = vmatprep.mubr.f32.mxu0 0.0
      %4970 = vmatmul.mubr.f32.gmra.mrb[0].mxu0 %v4761
      %v4971 = vpop.f32.mrb[0].mxu0
      %v4972 = vadd.f32 0.0, %v4971
      %v4973 = vpop.f32.mrb[0].mxu0
      %4974 = vmatprep.mubr.f32.mxu0 0.0
      %4975 = vmatmul.mubr.f32.gmra.mrb[0].mxu0 %v4764
      %v4976 = vpop.f32.mrb[0].mxu0
      %v4977 = vadd.f32 0.0, %v4976
      %v4978 = vpop.f32.mrb[0].mxu0
      %4979 = vmatprep.mubr.f32.mxu0 0.0
      %4980 = vmatmul.mubr.f32.gmra.mrb[0].mxu0 %v4767
      %v4981 = vpop.f32.mrb[0].mxu0
      %v4982 = vadd.f32 0.0, %v4981
      %v4983 = vpop.f32.mrb[0].mxu0
      %4984 = vmatprep.mubr.f32.mxu0 0.0
      %4985 = vmatmul.mubr.f32.gmra.mrb[0].mxu0 %v4770
      %v4986 = vpop.f32.mrb[0].mxu0
      %v4987 = vadd.f32 0.0, %v4986
      %v4988 = vpop.f32.mrb[0].mxu0
      %4989 = vmatprep.mubr.f32.mxu0 0.0
      %4990 = vmatmul.mubr.f32.gmra.mrb[0].mxu0 %v4773
      %v4991 = vpop.f32.mrb[0].mxu0
      %v4992 = vadd.f32 0.0, %v4991
      %v4993 = vpop.f32.mrb[0].mxu0
      %4994 = vmatprep.mubr.f32.mxu0 0.0
      %4995 = vmatmul.mubr.f32.gmra.mrb[0].mxu0 %v4776
      %v4996 = vpop.f32.mrb[0].mxu0
      %v4997 = vadd.f32 0.0, %v4996
      %v4998 = vpop.f32.mrb[0].mxu0
      %4999 = vmatprep.mubr.f32.mxu0 0.0
      %5000 = vmatmul.mubr.f32.gmra.mrb[0].mxu0 %v4779
      %v5001 = vpop.f32.mrb[0].mxu0
      %v5002 = vadd.f32 0.0, %v5001
      %v5003 = vpop.f32.mrb[0].mxu0
      %5004 = vmatprep.mubr.f32.mxu0 0.0
      %5005 = vmatmul.mubr.f32.gmra.mrb[0].mxu0 %v4782
      %v5006 = vpop.f32.mrb[0].mxu0
      %v5007 = vadd.f32 0.0, %v5006
      %v5008 = vpop.f32.mrb[0].mxu0
      %5009 = vmatprep.mubr.f32.mxu0 0.0
      %5010 = vmatmul.mubr.f32.gmra.mrb[0].mxu0 %v4785
      %v5011 = vpop.f32.mrb[0].mxu0
      %v5012 = vadd.f32 0.0, %v5011
      %v5013 = vpop.f32.mrb[0].mxu0
      %5014 = vdwg.mxu0
      %v5015 = vadd.f32 %v4658, %v4857
      %v5016 = vadd.f32 %v4659, %v4862
      %v5017 = vadd.f32 %v4660, %v4867
      %v5018 = vadd.f32 %v4661, %v4872
      %v5019 = vadd.f32 %v4662, %v4877
      %v5020 = vadd.f32 %v4663, %v4882
      %v5021 = vadd.f32 %v4664, %v4887
      %v5022 = vadd.f32 %v4665, %v4892
      %v5023 = vadd.f32 %v4666, %v4897
      %v5024 = vadd.f32 %v4667, %v4902
      %v5025 = vadd.f32 %v4668, %v4907
      %v5026 = vadd.f32 %v4669, %v4912
      %v5027 = vadd.f32 %v4670, %v4917
      %v5028 = vadd.f32 %v4671, %v4922
      %v5029 = vadd.f32 %v4672, %v4927
      %v5030 = vadd.f32 %v4673, %v4932
      %v5031 = vadd.f32 %v4674, %v4937
      %v5032 = vadd.f32 %v4675, %v4942
      %v5033 = vadd.f32 %v4676, %v4947
      %v5034 = vadd.f32 %v4677, %v4952
      %v5035 = vadd.f32 %v4678, %v4957
      %v5036 = vadd.f32 %v4679, %v4962
      %v5037 = vadd.f32 %v4680, %v4967
      %v5038 = vadd.f32 %v4681, %v4972
      %v5039 = vadd.f32 %v4682, %v4977
      %v5040 = vadd.f32 %v4683, %v4982
      %v5041 = vadd.f32 %v4684, %v4987
      %v5042 = vadd.f32 %v4685, %v4992
      %v5043 = vadd.f32 %v4686, %v4997
      %v5044 = vadd.f32 %v4687, %v5002
      %v5045 = vadd.f32 %v4688, %v5007
      %v5046 = vadd.f32 %v4689, %v5012
      %v5047 = vld [vmem:[%s7] sm:$0x1]
      %v5049 = vlaneseq
      %v5050 = vshrl.u32 %v5049, 7
      %v5051 = vsub.s32 0, %v5050
      %v5052 = vrot.slane %v5047, %v5051
      %v5054 = vadd.f32 %v5015, %v5052
      %v5055 = vadd.f32 %v5016, %v5052
      %v5056 = vadd.f32 %v5017, %v5052
      %v5057 = vadd.f32 %v5018, %v5052
      %v5058 = vadd.f32 %v5019, %v5052
      %v5059 = vadd.f32 %v5020, %v5052
      %v5060 = vadd.f32 %v5021, %v5052
      %v5061 = vadd.f32 %v5022, %v5052
      %v5062 = vadd.f32 %v5023, %v5052
      %v5063 = vadd.f32 %v5024, %v5052
      %v5064 = vadd.f32 %v5025, %v5052
      %v5065 = vadd.f32 %v5026, %v5052
      %v5066 = vadd.f32 %v5027, %v5052
      %v5067 = vadd.f32 %v5028, %v5052
      %v5068 = vadd.f32 %v5029, %v5052
      %v5069 = vadd.f32 %v5030, %v5052
      %v5070 = vadd.f32 %v5031, %v5052
      %v5071 = vadd.f32 %v5032, %v5052
      %v5072 = vadd.f32 %v5033, %v5052
      %v5073 = vadd.f32 %v5034, %v5052
      %v5074 = vadd.f32 %v5035, %v5052
      %v5075 = vadd.f32 %v5036, %v5052
      %v5076 = vadd.f32 %v5037, %v5052
      %v5077 = vadd.f32 %v5038, %v5052
      %v5078 = vadd.f32 %v5039, %v5052
      %v5079 = vadd.f32 %v5040, %v5052
      %v5080 = vadd.f32 %v5041, %v5052
      %v5081 = vadd.f32 %v5042, %v5052
      %v5082 = vadd.f32 %v5043, %v5052
      %v5083 = vadd.f32 %v5044, %v5052
      %v5084 = vadd.f32 %v5045, %v5052
      %v5085 = vadd.f32 %v5046, %v5052
      %v5086 = vxor.u32 %v5054, 2147483648
      %v5087 = vxor.u32 %v5055, 2147483648
      %v5088 = vxor.u32 %v5056, 2147483648
      %v5089 = vxor.u32 %v5057, 2147483648
      %v5090 = vxor.u32 %v5058, 2147483648
      %v5091 = vxor.u32 %v5059, 2147483648
      %v5092 = vxor.u32 %v5060, 2147483648
      %v5093 = vxor.u32 %v5061, 2147483648
      %v5094 = vxor.u32 %v5062, 2147483648
      %v5095 = vxor.u32 %v5063, 2147483648
      %v5096 = vxor.u32 %v5064, 2147483648
      %v5097 = vxor.u32 %v5065, 2147483648
      %v5098 = vxor.u32 %v5066, 2147483648
      %v5099 = vxor.u32 %v5067, 2147483648
      %v5100 = vxor.u32 %v5068, 2147483648
      %v5101 = vxor.u32 %v5069, 2147483648
      %v5102 = vxor.u32 %v5070, 2147483648
      %v5103 = vxor.u32 %v5071, 2147483648
      %v5104 = vxor.u32 %v5072, 2147483648
      %v5105 = vxor.u32 %v5073, 2147483648
      %v5106 = vxor.u32 %v5074, 2147483648
      %v5107 = vxor.u32 %v5075, 2147483648
      %v5108 = vxor.u32 %v5076, 2147483648
      %v5109 = vxor.u32 %v5077, 2147483648
      %v5110 = vxor.u32 %v5078, 2147483648
      %v5111 = vxor.u32 %v5079, 2147483648
      %v5112 = vxor.u32 %v5080, 2147483648
      %v5113 = vxor.u32 %v5081, 2147483648
      %v5114 = vxor.u32 %v5082, 2147483648
      %v5115 = vxor.u32 %v5083, 2147483648
      %v5116 = vxor.u32 %v5084, 2147483648
      %v5117 = vxor.u32 %v5085, 2147483648
      %v5118 = vmul.f32 %v5086, 1.442695
      %v5119 = vpow.pop %v5118
      %v5120 = vmul.f32 %v5087, 1.442695
      %v5121 = vpow.pop %v5120
      %v5122 = vmul.f32 %v5088, 1.442695
      %v5123 = vpow.pop %v5122
      %v5124 = vmul.f32 %v5089, 1.442695
      %v5125 = vpow.pop %v5124
      %v5126 = vmul.f32 %v5090, 1.442695
      %v5127 = vpow.pop %v5126
      %v5128 = vmul.f32 %v5091, 1.442695
      %v5129 = vpow.pop %v5128
      %v5130 = vmul.f32 %v5092, 1.442695
      %v5131 = vpow.pop %v5130
      %v5132 = vmul.f32 %v5093, 1.442695
      %v5133 = vpow.pop %v5132
      %v5134 = vmul.f32 %v5094, 1.442695
      %v5135 = vpow.pop %v5134
      %v5136 = vmul.f32 %v5095, 1.442695
      %v5137 = vpow.pop %v5136
      %v5138 = vmul.f32 %v5096, 1.442695
      %v5139 = vpow.pop %v5138
      %v5140 = vmul.f32 %v5097, 1.442695
      %v5141 = vpow.pop %v5140
      %v5142 = vmul.f32 %v5098, 1.442695
      %v5143 = vpow.pop %v5142
      %v5144 = vmul.f32 %v5099, 1.442695
      %v5145 = vpow.pop %v5144
      %v5146 = vmul.f32 %v5100, 1.442695
      %v5147 = vpow.pop %v5146
      %v5148 = vmul.f32 %v5101, 1.442695
      %v5149 = vpow.pop %v5148
      %v5150 = vmul.f32 %v5102, 1.442695
      %v5151 = vpow.pop %v5150
      %v5152 = vmul.f32 %v5103, 1.442695
      %v5153 = vpow.pop %v5152
      %v5154 = vmul.f32 %v5104, 1.442695
      %v5155 = vpow.pop %v5154
      %v5156 = vmul.f32 %v5105, 1.442695
      %v5157 = vpow.pop %v5156
      %v5158 = vmul.f32 %v5106, 1.442695
      %v5159 = vpow.pop %v5158
      %v5160 = vmul.f32 %v5107, 1.442695
      %v5161 = vpow.pop %v5160
      %v5162 = vmul.f32 %v5108, 1.442695
      %v5163 = vpow.pop %v5162
      %v5164 = vmul.f32 %v5109, 1.442695
      %v5165 = vpow.pop %v5164
      %v5166 = vmul.f32 %v5110, 1.442695
      %v5167 = vpow.pop %v5166
      %v5168 = vmul.f32 %v5111, 1.442695
      %v5169 = vpow.pop %v5168
      %v5170 = vmul.f32 %v5112, 1.442695
      %v5171 = vpow.pop %v5170
      %v5172 = vmul.f32 %v5113, 1.442695
      %v5173 = vpow.pop %v5172
      %v5174 = vmul.f32 %v5114, 1.442695
      %v5175 = vpow.pop %v5174
      %v5176 = vmul.f32 %v5115, 1.442695
      %v5177 = vpow.pop %v5176
      %v5178 = vmul.f32 %v5116, 1.442695
      %v5179 = vpow.pop %v5178
      %v5180 = vmul.f32 %v5117, 1.442695
      %v5181 = vpow.pop %v5180
      %v5182 = vadd.f32 %v5119, 1.0
      %v5183 = vadd.f32 %v5121, 1.0
      %v5184 = vadd.f32 %v5123, 1.0
      %v5185 = vadd.f32 %v5125, 1.0
      %v5186 = vadd.f32 %v5127, 1.0
      %v5187 = vadd.f32 %v5129, 1.0
      %v5188 = vadd.f32 %v5131, 1.0
      %v5189 = vadd.f32 %v5133, 1.0
      %v5190 = vadd.f32 %v5135, 1.0
      %v5191 = vadd.f32 %v5137, 1.0
      %v5192 = vadd.f32 %v5139, 1.0
      %v5193 = vadd.f32 %v5141, 1.0
      %v5194 = vadd.f32 %v5143, 1.0
      %v5195 = vadd.f32 %v5145, 1.0
      %v5196 = vadd.f32 %v5147, 1.0
      %v5197 = vadd.f32 %v5149, 1.0
      %v5198 = vadd.f32 %v5151, 1.0
      %v5199 = vadd.f32 %v5153, 1.0
      %v5200 = vadd.f32 %v5155, 1.0
      %v5201 = vadd.f32 %v5157, 1.0
      %v5202 = vadd.f32 %v5159, 1.0
      %v5203 = vadd.f32 %v5161, 1.0
      %v5204 = vadd.f32 %v5163, 1.0
      %v5205 = vadd.f32 %v5165, 1.0
      %v5206 = vadd.f32 %v5167, 1.0
      %v5207 = vadd.f32 %v5169, 1.0
      %v5208 = vadd.f32 %v5171, 1.0
      %v5209 = vadd.f32 %v5173, 1.0
      %v5210 = vadd.f32 %v5175, 1.0
      %v5211 = vadd.f32 %v5177, 1.0
      %v5212 = vadd.f32 %v5179, 1.0
      %v5213 = vadd.f32 %v5181, 1.0
      %v5214 = vrcp.pop %v5182
      %v5215 = vmul.f32 1.0, %v5214
      %v5216 = vrcp.pop %v5183
      %v5217 = vmul.f32 1.0, %v5216
      %v5218 = vrcp.pop %v5184
      %v5219 = vmul.f32 1.0, %v5218
      %v5220 = vrcp.pop %v5185
      %v5221 = vmul.f32 1.0, %v5220
      %v5222 = vrcp.pop %v5186
      %v5223 = vmul.f32 1.0, %v5222
      %v5224 = vrcp.pop %v5187
      %v5225 = vmul.f32 1.0, %v5224
      %v5226 = vrcp.pop %v5188
      %v5227 = vmul.f32 1.0, %v5226
      %v5228 = vrcp.pop %v5189
      %v5229 = vmul.f32 1.0, %v5228
      %v5230 = vrcp.pop %v5190
      %v5231 = vmul.f32 1.0, %v5230
      %v5232 = vrcp.pop %v5191
      %v5233 = vmul.f32 1.0, %v5232
      %v5234 = vrcp.pop %v5192
      %v5235 = vmul.f32 1.0, %v5234
      %v5236 = vrcp.pop %v5193
      %v5237 = vmul.f32 1.0, %v5236
      %v5238 = vrcp.pop %v5194
      %v5239 = vmul.f32 1.0, %v5238
      %v5240 = vrcp.pop %v5195
      %v5241 = vmul.f32 1.0, %v5240
      %v5242 = vrcp.pop %v5196
      %v5243 = vmul.f32 1.0, %v5242
      %v5244 = vrcp.pop %v5197
      %v5245 = vmul.f32 1.0, %v5244
      %v5246 = vrcp.pop %v5198
      %v5247 = vmul.f32 1.0, %v5246
      %v5248 = vrcp.pop %v5199
      %v5249 = vmul.f32 1.0, %v5248
      %v5250 = vrcp.pop %v5200
      %v5251 = vmul.f32 1.0, %v5250
      %v5252 = vrcp.pop %v5201
      %v5253 = vmul.f32 1.0, %v5252
      %v5254 = vrcp.pop %v5202
      %v5255 = vmul.f32 1.0, %v5254
      %v5256 = vrcp.pop %v5203
      %v5257 = vmul.f32 1.0, %v5256
      %v5258 = vrcp.pop %v5204
      %v5259 = vmul.f32 1.0, %v5258
      %v5260 = vrcp.pop %v5205
      %v5261 = vmul.f32 1.0, %v5260
      %v5262 = vrcp.pop %v5206
      %v5263 = vmul.f32 1.0, %v5262
      %v5264 = vrcp.pop %v5207
      %v5265 = vmul.f32 1.0, %v5264
      %v5266 = vrcp.pop %v5208
      %v5267 = vmul.f32 1.0, %v5266
      %v5268 = vrcp.pop %v5209
      %v5269 = vmul.f32 1.0, %v5268
      %v5270 = vrcp.pop %v5210
      %v5271 = vmul.f32 1.0, %v5270
      %v5272 = vrcp.pop %v5211
      %v5273 = vmul.f32 1.0, %v5272
      %v5274 = vrcp.pop %v5212
      %v5275 = vmul.f32 1.0, %v5274
      %v5276 = vrcp.pop %v5213
      %v5277 = vmul.f32 1.0, %v5276
      %v5278 = vmul.f32 %v5054, %v5215
      %v5279 = vmul.f32 %v5055, %v5217
      %v5280 = vmul.f32 %v5056, %v5219
      %v5281 = vmul.f32 %v5057, %v5221
      %v5282 = vmul.f32 %v5058, %v5223
      %v5283 = vmul.f32 %v5059, %v5225
      %v5284 = vmul.f32 %v5060, %v5227
      %v5285 = vmul.f32 %v5061, %v5229
      %v5286 = vmul.f32 %v5062, %v5231
      %v5287 = vmul.f32 %v5063, %v5233
      %v5288 = vmul.f32 %v5064, %v5235
      %v5289 = vmul.f32 %v5065, %v5237
      %v5290 = vmul.f32 %v5066, %v5239
      %v5291 = vmul.f32 %v5067, %v5241
      %v5292 = vmul.f32 %v5068, %v5243
      %v5293 = vmul.f32 %v5069, %v5245
      %v5294 = vmul.f32 %v5070, %v5247
      %v5295 = vmul.f32 %v5071, %v5249
      %v5296 = vmul.f32 %v5072, %v5251
      %v5297 = vmul.f32 %v5073, %v5253
      %v5298 = vmul.f32 %v5074, %v5255
      %v5299 = vmul.f32 %v5075, %v5257
      %v5300 = vmul.f32 %v5076, %v5259
      %v5301 = vmul.f32 %v5077, %v5261
      %v5302 = vmul.f32 %v5078, %v5263
      %v5303 = vmul.f32 %v5079, %v5265
      %v5304 = vmul.f32 %v5080, %v5267
      %v5305 = vmul.f32 %v5081, %v5269
      %v5306 = vmul.f32 %v5082, %v5271
      %v5307 = vmul.f32 %v5083, %v5273
      %v5308 = vmul.f32 %v5084, %v5275
      %v5309 = vmul.f32 %v5085, %v5277
      %vm5310 = vcmask 64512
      %5311 = vst.msk [vmem:[%s305] sm:$0xff] %vm5310, %v5278
      %5312 = vst.msk [vmem:[%s305 + $0x8] sm:$0xff] %vm5310, %v5279
      %5313 = vst.msk [vmem:[%s305 + $0x10] sm:$0xff] %vm5310, %v5280
      %5314 = vst.msk [vmem:[%s305 + $0x18] sm:$0xff] %vm5310, %v5281
      %5315 = vst.msk [vmem:[%s305 + $0x20] sm:$0xff] %vm5310, %v5282
      %5316 = vst.msk [vmem:[%s305 + $0x28] sm:$0xff] %vm5310, %v5283
      %5317 = vst.msk [vmem:[%s305 + $0x30] sm:$0xff] %vm5310, %v5284
      %5318 = vst.msk [vmem:[%s305 + $0x38] sm:$0xff] %vm5310, %v5285
      %5319 = vst.msk [vmem:[%s305 + $0x40] sm:$0xff] %vm5310, %v5286
      %5320 = vst.msk [vmem:[%s305 + $0x48] sm:$0xff] %vm5310, %v5287
      %5321 = vst.msk [vmem:[%s305 + $0x50] sm:$0xff] %vm5310, %v5288
      %5322 = vst.msk [vmem:[%s305 + $0x58] sm:$0xff] %vm5310, %v5289
      %5323 = vst.msk [vmem:[%s305 + $0x60] sm:$0xff] %vm5310, %v5290
      %5324 = vst.msk [vmem:[%s305 + $0x68] sm:$0xff] %vm5310, %v5291
      %5325 = vst.msk [vmem:[%s305 + $0x70] sm:$0xff] %vm5310, %v5292
      %5326 = vst.msk [vmem:[%s305 + $0x78] sm:$0xff] %vm5310, %v5293
      %5327 = vst.msk [vmem:[%s305 + $0x80] sm:$0xff] %vm5310, %v5294
      %5328 = vst.msk [vmem:[%s305 + $0x88] sm:$0xff] %vm5310, %v5295
      %5329 = vst.msk [vmem:[%s305 + $0x90] sm:$0xff] %vm5310, %v5296
      %5330 = vst.msk [vmem:[%s305 + $0x98] sm:$0xff] %vm5310, %v5297
      %5331 = vst.msk [vmem:[%s305 + $0xa0] sm:$0xff] %vm5310, %v5298
      %5332 = vst.msk [vmem:[%s305 + $0xa8] sm:$0xff] %vm5310, %v5299
      %5333 = vst.msk [vmem:[%s305 + $0xb0] sm:$0xff] %vm5310, %v5300
      %5334 = vst.msk [vmem:[%s305 + $0xb8] sm:$0xff] %vm5310, %v5301
      %5335 = vst.msk [vmem:[%s305 + $0xc0] sm:$0xff] %vm5310, %v5302
      %5336 = vst.msk [vmem:[%s305 + $0xc8] sm:$0xff] %vm5310, %v5303
      %5337 = vst.msk [vmem:[%s305 + $0xd0] sm:$0xff] %vm5310, %v5304
      %5338 = vst.msk [vmem:[%s305 + $0xd8] sm:$0xff] %vm5310, %v5305
      %5339 = vst.msk [vmem:[%s305 + $0xe0] sm:$0xff] %vm5310, %v5306
      %5340 = vst.msk [vmem:[%s305 + $0xe8] sm:$0xff] %vm5310, %v5307
      %5341 = vst.msk [vmem:[%s305 + $0xf0] sm:$0xff] %vm5310, %v5308
      %5342 = vst.msk [vmem:[%s305 + $0xf8] sm:$0xff] %vm5310, %v5309
      %p5343 = scmp.lt.s32.totalorder %s19, 1
      %s5344 = scalar_select %p5343, %s19, 1
      %s5345 = smul.addr %s5344, 32
      %s5346 = smul.addr %s5345, 8
      %s5347 = scalar_lea.vmem %s8, %s5346
      // Predicated region
      $region53: #{sppf_forward.1} parent=51 // pred_check
        %p5348 = pneg %p210
      $region54: #{sppf_forward.1} parent=51 // pred_check_branch
        %5350 = sbr.rel (%p5348) target = $region56
      $region55: #{sppf_forward.1} parent=51 // pred_region
        _
      $region56: #{sppf_forward.1} parent=51 // pred_fallthru
        _
    $region52: #{sppf_forward.1} parent=5 // pred_fallthru
      _
    %p5351 = scmp.le.s32.totalorder 2, %s14
    // Predicated region
    $region57: #{sppf_forward.1} parent=5 // pred_check
      %p5352 = pneg %p5351
    $region58: #{sppf_forward.1} parent=5 // pred_check_branch
      %5354 = sbr.rel (%p5352) target = $region60
    $region59: #{sppf_forward.1} parent=5 // pred_region
      %s5355 = ssub.s32 %s14, 2
      // Predicated region
      $region61: #{sppf_forward.1} parent=59 // pred_check
        %p5356 = pneg %p216
      $region62: #{sppf_forward.1} parent=59 // pred_check_branch
        %5358 = sbr.rel (%p5356) target = $region64
      $region63: #{sppf_forward.1} parent=59 // pred_region
        %p5359 = scmp.lt.s32.totalorder %s20, 1
        %s5360 = scalar_select %p5359, %s20, 1
        %s5361 = smul.addr %s5360, 32
        %s5362 = smul.addr %s5361, 8
        %s5363 = scalar_lea.vmem %s8, %s5362
      $region64: #{sppf_forward.1} parent=59 // pred_fallthru
        _
    $region60: #{sppf_forward.1} parent=5 // pred_fallthru
      _
  $region6: #{sppf_forward.1} parent=0 // loop_footer
    %s18 = sadd.s32 1, %s14
  $region7: #{sppf_forward.1} parent=0 // loop_footer_branch
    %13 = sbr.rel target = $region3
  $region8: #{sppf_forward.1} parent=0 // loop_exit
    _

</llo_original>
